<compile_context>
chip_gen: v7x
topology: tpu7x:2x2x1
jax: 0.10.0
libtpu: 0.0.40
codegen_flags: <defaults>
</compile_context>

<pallas_src>
import functools

import jax
import jax.numpy as jnp
from jax.experimental import pallas as pl
from jax.experimental.pallas import tpu as pltpu

EPS = 1e-5  # nn.InstanceNorm2d default eps (affine=False, biased variance)


def _instance_norm(a):
    """InstanceNorm over the lane (spatial) axis of a (C, H*W) f32 tensor."""
    mean = jnp.mean(a, axis=-1, keepdims=True)
    centered = a - mean
    var = jnp.mean(centered * centered, axis=-1, keepdims=True)  # no E[x^2]-m^2
    return centered * jax.lax.rsqrt(var + EPS)


def _conv3x3_reflect(t, w_ref, first_row, last_row, first_col, last_col, H, W):
    """3x3 conv with reflect padding.

    t:     (C_in, H*W) f32, spatial flattened row-major into lanes.
    w_ref: (9, C_out, C_in) VMEM ref, tap index = kh*3 + kw.
    Shifted taps are built with pltpu.roll (XLU) + jnp.where boundary fixups;
    the contraction is 9 accumulating MXU matmuls (no im2col slab).
    """
    HW = H * W
    # Row (h) shifts; reflect: row -1 -> 1, row H -> H-2.
    tm = pltpu.roll(t, shift=W, axis=1)        # tm[k] = t[k - W]  (row h-1)
    tp = pltpu.roll(t, shift=HW - W, axis=1)   # tp[k] = t[k + W]  (row h+1)
    up = jnp.where(first_row, tp, tm)          # kh = 0
    down = jnp.where(last_row, tm, tp)         # kh = 2
    rows = (up, t, down)

    acc = jnp.zeros(t.shape, jnp.float32)
    for kh in range(3):
        y = rows[kh]
        # Column (w) shifts; reflect: col -1 -> 1, col W -> W-2.
        ym = pltpu.roll(y, shift=1, axis=1)        # ym[k] = y[k - 1] (col w-1)
        yp = pltpu.roll(y, shift=HW - 1, axis=1)   # yp[k] = y[k + 1] (col w+1)
        left = jnp.where(first_col, yp, ym)        # kw = 0
        right = jnp.where(last_col, ym, yp)        # kw = 2
        cols = (left, y, right)
        for kw in range(3):
            # (C_out, C_in) @ (C_in, H*W) with f32 accumulation on the MXU.
            # (bf16 operands would ~2x MXU throughput on v6e/v7x if the
            #  accuracy budget allowed; kept f32 to hold the 1e-4 check.)
            acc = acc + jnp.dot(w_ref[kh * 3 + kw], cols[kw],
                                preferred_element_type=jnp.float32)
    return acc


def fused_residual_kernel(rc_ref, x_ref, w1_ref, w2_ref, o_ref, *, H, W):
    x = x_ref[0].astype(jnp.float32)                     # (C, H*W), resident
    rc = rc_ref[...]                                     # (2, H*W) int32
    row, col = rc[0:1, :], rc[1:2, :]
    first_row, last_row = row == 0, row == H - 1
    first_col, last_col = col == 0, col == W - 1

    # Stage 1: conv1 -> InstanceNorm -> ReLU (intermediate never leaves chip).
    y = _instance_norm(_conv3x3_reflect(x, w1_ref, first_row, last_row,
                                        first_col, last_col, H, W))
    y = jnp.maximum(y, 0.0)
    # Stage 2: conv2 -> InstanceNorm, then residual add; lane-dense store.
    z = _instance_norm(_conv3x3_reflect(y, w2_ref, first_row, last_row,
                                        first_col, last_col, H, W))
    o_ref[0] = (x + z).astype(o_ref.dtype)


def residual_block(x_nchw, w1, b1, w2, b2):
    """Pallas implementation of ResidualBlock.forward. x_nchw: (N, C, H, W) f32.

    b1/b2 are accepted for interface parity but unused: a per-channel bias
    before InstanceNorm(affine=False) is exactly removed by the normalization.
    """
    del b1, b2
    N, C, H, W = x_nchw.shape
    assert H >= 2 and W >= 2, "reflect padding requires H, W >= 2"
    HW = H * W

    # NCHW with spatial flattened into lanes (free reshape, no transposes).
    x = x_nchw.reshape(N, C, HW)

    # PyTorch Conv2d weight (O, I, kh, kw) -> (9, O, I), tap index = kh*3 + kw.
    w1t = jnp.transpose(w1, (2, 3, 0, 1)).reshape(9, C, C)
    w2t = jnp.transpose(w2, (2, 3, 0, 1)).reshape(9, C, C)

    # Row/col index table built once outside the kernel, so the kernel needs
    # no vector integer div/mod for the reflect boundary masks.
    hw = jnp.arange(HW, dtype=jnp.int32)
    rc = jnp.stack([hw // W, hw % W], axis=0)            # (2, HW)

    # Explicit VMEM budget: x/out blocks double-buffered, constant blocks
    # single-buffered, plus headroom for shifted taps / acc / y / z.
    blk = C * HW * 4
    est = (2 * blk + 2 * blk            # input + output blocks (2 bufs each)
           + 2 * 9 * C * C * 4          # both tap-weight tables
           + 2 * HW * 4                 # row/col index table
           + 24 * blk)                  # rolled taps / acc / y / z temporaries
    try:
        cap = int(pltpu.get_tpu_info().vmem_capacity_bytes)
    except Exception:
        cap = 64 << 20                  # conservative fallback (v7x per-TC)
    vmem_limit = int(min(max(est, 16 << 20), int(0.8 * cap)))

    def call(const_spec):
        return pl.pallas_call(
            functools.partial(fused_residual_kernel, H=H, W=W),
            out_shape=jax.ShapeDtypeStruct((N, C, HW), jnp.float32),
            grid=(N,),
            in_specs=[
                const_spec((2, HW), lambda n: (0, 0)),         # row/col ids
                pl.BlockSpec((1, C, HW), lambda n: (n, 0, 0)),  # x (+ residual)
                const_spec((9, C, C), lambda n: (0, 0, 0)),    # conv1 taps
                const_spec((9, C, C), lambda n: (0, 0, 0)),    # conv2 taps
            ],
            out_specs=pl.BlockSpec((1, C, HW), lambda n: (n, 0, 0)),
            compiler_params=pltpu.CompilerParams(
                dimension_semantics=("parallel",),
                vmem_limit_bytes=vmem_limit),
        )(rc, x, w1t, w2t)

    def single_buffered(shape, index_map):
        # Constant-across-grid blocks: a second pipeline buffer is pure waste.
        return pl.BlockSpec(shape, index_map, pipeline_mode=pl.Buffered(1))

    try:
        out = call(single_buffered)
    except Exception:
        out = call(pl.BlockSpec)   # Pallas without pipeline_mode support

    return out.reshape(N, C, H, W)


def _reference_block(x, w1, b1, w2, b2):
    """Pure-JAX reference matching PyTorch semantics (NCHW, biases included)."""
    def conv(z, w, b):
        zp = jnp.pad(z, ((0, 0), (0, 0), (1, 1), (1, 1)), mode="reflect")
        o = jax.lax.conv_general_dilated(
            zp, w, window_strides=(1, 1), padding="VALID",
            dimension_numbers=("NCHW", "OIHW", "NCHW"))
        return o + b[None, :, None, None]

    def inorm(z):
        m = jnp.mean(z, axis=(2, 3), keepdims=True)
        v = jnp.mean((z - m) ** 2, axis=(2, 3), keepdims=True)
        return (z - m) * jax.lax.rsqrt(v + EPS)

    h = jnp.maximum(inorm(conv(x, w1, b1)), 0.0)
    h = inorm(conv(h, w2, b2))
    return x + h


if __name__ == "__main__":
    N, C, H, W = 2, 4, 16, 16

    key = jax.random.PRNGKey(0)
    kx, kw1, kb1, kw2, kb2 = jax.random.split(key, 5)
    x = jax.random.normal(kx, (N, C, H, W), jnp.float32)
    # PyTorch Conv2d layout: (out, in, kh, kw).
    w1 = 0.1 * jax.random.normal(kw1, (C, C, 3, 3), jnp.float32)
    b1 = 0.1 * jax.random.normal(kb1, (C,), jnp.float32)
    w2 = 0.1 * jax.random.normal(kw2, (C, C, 3, 3), jnp.float32)
    b2 = 0.1 * jax.random.normal(kb2, (C,), jnp.float32)

    out = jax.block_until_ready(residual_block(x, w1, b1, w2, b2))
    ref = jax.block_until_ready(_reference_block(x, w1, b1, w2, b2))

    assert out.shape == (N, C, H, W)
    err = float(jnp.max(jnp.abs(out - ref)))
    assert err < 1e-4, f"mismatch vs JAX reference: {err}"
    print("KERNEL_OK")
</pallas_src>

<mosaic_0001>
module attributes {stable_mosaic.version = 11 : i64} {
  func.func @fused_residual_kernel(%arg0: i32, %arg1: memref<2x256xi32, #tpu.memory_space<vmem>>, %arg2: memref<1x4x256xf32, #tpu.memory_space<vmem>>, %arg3: memref<9x4x4xf32, #tpu.memory_space<vmem>>, %arg4: memref<9x4x4xf32, #tpu.memory_space<vmem>>, %arg5: memref<1x4x256xf32, #tpu.memory_space<vmem>>) attributes {dimension_semantics = [#tpu.dimension_semantics<parallel>], iteration_bounds = array<i64: 2>, scalar_prefetch = 0 : i64, scratch_operands = 0 : i64, tpu.core_type = #tpu.core_type<tc>, window_params = [{pipeline_mode = #tpu.pipeline_mode<synchronous>, transform_indices = @transform_0, window_bounds = array<i64: 2, 256>}, {transform_indices = @transform_1, window_bounds = array<i64: 1, 4, 256>}, {pipeline_mode = #tpu.pipeline_mode<synchronous>, transform_indices = @transform_2, window_bounds = array<i64: 9, 4, 4>}, {pipeline_mode = #tpu.pipeline_mode<synchronous>, transform_indices = @transform_3, window_bounds = array<i64: 9, 4, 4>}, {transform_indices = @transform_4, window_bounds = array<i64: 1, 4, 256>}]} {
    %c0 = arith.constant 0 : index
    %c0_0 = arith.constant 0 : index
    %c0_1 = arith.constant 0 : index
    %0 = vector.load %arg2[%c0, %c0_0, %c0_1] : memref<1x4x256xf32, #tpu.memory_space<vmem>>, vector<1x4x256xf32>
    %1 = vector.shape_cast %0 : vector<1x4x256xf32> to vector<4x256xf32>
    %c0_2 = arith.constant 0 : index
    %c0_3 = arith.constant 0 : index
    %2 = vector.load %arg1[%c0_2, %c0_3] : memref<2x256xi32, #tpu.memory_space<vmem>>, vector<2x256xi32>
    %3 = vector.extract_strided_slice %2 {offsets = [0, 0], sizes = [1, 256], strides = [1, 1]} : vector<2x256xi32> to vector<1x256xi32>
    %4 = vector.extract_strided_slice %2 {offsets = [1, 0], sizes = [1, 256], strides = [1, 1]} : vector<2x256xi32> to vector<1x256xi32>
    %c0_i32 = arith.constant 0 : i32
    %5 = vector.broadcast %c0_i32 : i32 to vector<1x256xi32>
    %6 = arith.cmpi eq, %3, %5 : vector<1x256xi32>
    %c15_i32 = arith.constant 15 : i32
    %7 = vector.broadcast %c15_i32 : i32 to vector<1x256xi32>
    %8 = arith.cmpi eq, %3, %7 : vector<1x256xi32>
    %c0_i32_4 = arith.constant 0 : i32
    %9 = vector.broadcast %c0_i32_4 : i32 to vector<1x256xi32>
    %10 = arith.cmpi eq, %4, %9 : vector<1x256xi32>
    %c15_i32_5 = arith.constant 15 : i32
    %11 = vector.broadcast %c15_i32_5 : i32 to vector<1x256xi32>
    %12 = arith.cmpi eq, %4, %11 : vector<1x256xi32>
    %c16_i32 = arith.constant 16 : i32
    %13 = tpu.dynamic_rotate %1 by %c16_i32 dim 1 : vector<4x256xf32>, i32 -> vector<4x256xf32>
    %c240_i32 = arith.constant 240 : i32
    %14 = tpu.dynamic_rotate %1 by %c240_i32 dim 1 : vector<4x256xf32>, i32 -> vector<4x256xf32>
    %15 = vector.shape_cast %6 : vector<1x256xi1> to vector<1x256xi1>
    %16 = vector.broadcast %15 : vector<1x256xi1> to vector<4x256xi1>
    %17 = arith.select %16, %14, %13 : vector<4x256xi1>, vector<4x256xf32>
    %18 = vector.shape_cast %8 : vector<1x256xi1> to vector<1x256xi1>
    %19 = vector.broadcast %18 : vector<1x256xi1> to vector<4x256xi1>
    %20 = arith.select %19, %13, %14 : vector<4x256xi1>, vector<4x256xf32>
    %cst = arith.constant 0.000000e+00 : f32
    %21 = vector.broadcast %cst : f32 to vector<4x256xf32>
    %c1_i32 = arith.constant 1 : i32
    %22 = tpu.dynamic_rotate %17 by %c1_i32 dim 1 : vector<4x256xf32>, i32 -> vector<4x256xf32>
    %c255_i32 = arith.constant 255 : i32
    %23 = tpu.dynamic_rotate %17 by %c255_i32 dim 1 : vector<4x256xf32>, i32 -> vector<4x256xf32>
    %24 = vector.shape_cast %10 : vector<1x256xi1> to vector<1x256xi1>
    %25 = vector.broadcast %24 : vector<1x256xi1> to vector<4x256xi1>
    %26 = arith.select %25, %23, %22 : vector<4x256xi1>, vector<4x256xf32>
    %27 = vector.shape_cast %12 : vector<1x256xi1> to vector<1x256xi1>
    %28 = vector.broadcast %27 : vector<1x256xi1> to vector<4x256xi1>
    %29 = arith.select %28, %22, %23 : vector<4x256xi1>, vector<4x256xf32>
    %c0_6 = arith.constant 0 : index
    %c0_7 = arith.constant 0 : index
    %c0_8 = arith.constant 0 : index
    %30 = vector.load %arg3[%c0_6, %c0_7, %c0_8] : memref<9x4x4xf32, #tpu.memory_space<vmem>>, vector<1x4x4xf32>
    %31 = vector.shape_cast %30 : vector<1x4x4xf32> to vector<4x4xf32>
    %cst_9 = arith.constant dense<0.000000e+00> : vector<4x256xf32>
    %32 = tpu.matmul %31, %26, %cst_9 {dimension_numbers = #tpu.dot_dimension_numbers<[1], [0], [0], [1], [0, 0, 1, 1], [], []>} : vector<4x4xf32>, vector<4x256xf32>, vector<4x256xf32> -> vector<4x256xf32>
    %33 = arith.addf %21, %32 : vector<4x256xf32>
    %c1 = arith.constant 1 : index
    %c0_10 = arith.constant 0 : index
    %c0_11 = arith.constant 0 : index
    %34 = vector.load %arg3[%c1, %c0_10, %c0_11] : memref<9x4x4xf32, #tpu.memory_space<vmem>>, vector<1x4x4xf32>
    %35 = vector.shape_cast %34 : vector<1x4x4xf32> to vector<4x4xf32>
    %cst_12 = arith.constant dense<0.000000e+00> : vector<4x256xf32>
    %36 = tpu.matmul %35, %17, %cst_12 {dimension_numbers = #tpu.dot_dimension_numbers<[1], [0], [0], [1], [0, 0, 1, 1], [], []>} : vector<4x4xf32>, vector<4x256xf32>, vector<4x256xf32> -> vector<4x256xf32>
    %37 = arith.addf %33, %36 : vector<4x256xf32>
    %c2 = arith.constant 2 : index
    %c0_13 = arith.constant 0 : index
    %c0_14 = arith.constant 0 : index
    %38 = vector.load %arg3[%c2, %c0_13, %c0_14] : memref<9x4x4xf32, #tpu.memory_space<vmem>>, vector<1x4x4xf32>
    %39 = vector.shape_cast %38 : vector<1x4x4xf32> to vector<4x4xf32>
    %cst_15 = arith.constant dense<0.000000e+00> : vector<4x256xf32>
    %40 = tpu.matmul %39, %29, %cst_15 {dimension_numbers = #tpu.dot_dimension_numbers<[1], [0], [0], [1], [0, 0, 1, 1], [], []>} : vector<4x4xf32>, vector<4x256xf32>, vector<4x256xf32> -> vector<4x256xf32>
    %41 = arith.addf %37, %40 : vector<4x256xf32>
    %c1_i32_16 = arith.constant 1 : i32
    %42 = tpu.dynamic_rotate %1 by %c1_i32_16 dim 1 : vector<4x256xf32>, i32 -> vector<4x256xf32>
    %c255_i32_17 = arith.constant 255 : i32
    %43 = tpu.dynamic_rotate %1 by %c255_i32_17 dim 1 : vector<4x256xf32>, i32 -> vector<4x256xf32>
    %44 = vector.shape_cast %10 : vector<1x256xi1> to vector<1x256xi1>
    %45 = vector.broadcast %44 : vector<1x256xi1> to vector<4x256xi1>
    %46 = arith.select %45, %43, %42 : vector<4x256xi1>, vector<4x256xf32>
    %47 = vector.shape_cast %12 : vector<1x256xi1> to vector<1x256xi1>
    %48 = vector.broadcast %47 : vector<1x256xi1> to vector<4x256xi1>
    %49 = arith.select %48, %42, %43 : vector<4x256xi1>, vector<4x256xf32>
    %c3 = arith.constant 3 : index
    %c0_18 = arith.constant 0 : index
    %c0_19 = arith.constant 0 : index
    %50 = vector.load %arg3[%c3, %c0_18, %c0_19] : memref<9x4x4xf32, #tpu.memory_space<vmem>>, vector<1x4x4xf32>
    %51 = vector.shape_cast %50 : vector<1x4x4xf32> to vector<4x4xf32>
    %cst_20 = arith.constant dense<0.000000e+00> : vector<4x256xf32>
    %52 = tpu.matmul %51, %46, %cst_20 {dimension_numbers = #tpu.dot_dimension_numbers<[1], [0], [0], [1], [0, 0, 1, 1], [], []>} : vector<4x4xf32>, vector<4x256xf32>, vector<4x256xf32> -> vector<4x256xf32>
    %53 = arith.addf %41, %52 : vector<4x256xf32>
    %c4 = arith.constant 4 : index
    %c0_21 = arith.constant 0 : index
    %c0_22 = arith.constant 0 : index
    %54 = vector.load %arg3[%c4, %c0_21, %c0_22] : memref<9x4x4xf32, #tpu.memory_space<vmem>>, vector<1x4x4xf32>
    %55 = vector.shape_cast %54 : vector<1x4x4xf32> to vector<4x4xf32>
    %cst_23 = arith.constant dense<0.000000e+00> : vector<4x256xf32>
    %56 = tpu.matmul %55, %1, %cst_23 {dimension_numbers = #tpu.dot_dimension_numbers<[1], [0], [0], [1], [0, 0, 1, 1], [], []>} : vector<4x4xf32>, vector<4x256xf32>, vector<4x256xf32> -> vector<4x256xf32>
    %57 = arith.addf %53, %56 : vector<4x256xf32>
    %c5 = arith.constant 5 : index
    %c0_24 = arith.constant 0 : index
    %c0_25 = arith.constant 0 : index
    %58 = vector.load %arg3[%c5, %c0_24, %c0_25] : memref<9x4x4xf32, #tpu.memory_space<vmem>>, vector<1x4x4xf32>
    %59 = vector.shape_cast %58 : vector<1x4x4xf32> to vector<4x4xf32>
    %cst_26 = arith.constant dense<0.000000e+00> : vector<4x256xf32>
    %60 = tpu.matmul %59, %49, %cst_26 {dimension_numbers = #tpu.dot_dimension_numbers<[1], [0], [0], [1], [0, 0, 1, 1], [], []>} : vector<4x4xf32>, vector<4x256xf32>, vector<4x256xf32> -> vector<4x256xf32>
    %61 = arith.addf %57, %60 : vector<4x256xf32>
    %c1_i32_27 = arith.constant 1 : i32
    %62 = tpu.dynamic_rotate %20 by %c1_i32_27 dim 1 : vector<4x256xf32>, i32 -> vector<4x256xf32>
    %c255_i32_28 = arith.constant 255 : i32
    %63 = tpu.dynamic_rotate %20 by %c255_i32_28 dim 1 : vector<4x256xf32>, i32 -> vector<4x256xf32>
    %64 = vector.shape_cast %10 : vector<1x256xi1> to vector<1x256xi1>
    %65 = vector.broadcast %64 : vector<1x256xi1> to vector<4x256xi1>
    %66 = arith.select %65, %63, %62 : vector<4x256xi1>, vector<4x256xf32>
    %67 = vector.shape_cast %12 : vector<1x256xi1> to vector<1x256xi1>
    %68 = vector.broadcast %67 : vector<1x256xi1> to vector<4x256xi1>
    %69 = arith.select %68, %62, %63 : vector<4x256xi1>, vector<4x256xf32>
    %c6 = arith.constant 6 : index
    %c0_29 = arith.constant 0 : index
    %c0_30 = arith.constant 0 : index
    %70 = vector.load %arg3[%c6, %c0_29, %c0_30] : memref<9x4x4xf32, #tpu.memory_space<vmem>>, vector<1x4x4xf32>
    %71 = vector.shape_cast %70 : vector<1x4x4xf32> to vector<4x4xf32>
    %cst_31 = arith.constant dense<0.000000e+00> : vector<4x256xf32>
    %72 = tpu.matmul %71, %66, %cst_31 {dimension_numbers = #tpu.dot_dimension_numbers<[1], [0], [0], [1], [0, 0, 1, 1], [], []>} : vector<4x4xf32>, vector<4x256xf32>, vector<4x256xf32> -> vector<4x256xf32>
    %73 = arith.addf %61, %72 : vector<4x256xf32>
    %c7 = arith.constant 7 : index
    %c0_32 = arith.constant 0 : index
    %c0_33 = arith.constant 0 : index
    %74 = vector.load %arg3[%c7, %c0_32, %c0_33] : memref<9x4x4xf32, #tpu.memory_space<vmem>>, vector<1x4x4xf32>
    %75 = vector.shape_cast %74 : vector<1x4x4xf32> to vector<4x4xf32>
    %cst_34 = arith.constant dense<0.000000e+00> : vector<4x256xf32>
    %76 = tpu.matmul %75, %20, %cst_34 {dimension_numbers = #tpu.dot_dimension_numbers<[1], [0], [0], [1], [0, 0, 1, 1], [], []>} : vector<4x4xf32>, vector<4x256xf32>, vector<4x256xf32> -> vector<4x256xf32>
    %77 = arith.addf %73, %76 : vector<4x256xf32>
    %c8 = arith.constant 8 : index
    %c0_35 = arith.constant 0 : index
    %c0_36 = arith.constant 0 : index
    %78 = vector.load %arg3[%c8, %c0_35, %c0_36] : memref<9x4x4xf32, #tpu.memory_space<vmem>>, vector<1x4x4xf32>
    %79 = vector.shape_cast %78 : vector<1x4x4xf32> to vector<4x4xf32>
    %cst_37 = arith.constant dense<0.000000e+00> : vector<4x256xf32>
    %80 = tpu.matmul %79, %69, %cst_37 {dimension_numbers = #tpu.dot_dimension_numbers<[1], [0], [0], [1], [0, 0, 1, 1], [], []>} : vector<4x4xf32>, vector<4x256xf32>, vector<4x256xf32> -> vector<4x256xf32>
    %81 = arith.addf %77, %80 : vector<4x256xf32>
    %cst_38 = arith.constant dense<0.000000e+00> : vector<4xf32>
    %82 = vector.multi_reduction <add>, %81, %cst_38 [1] : vector<4x256xf32> to vector<4xf32>
    %83 = vector.shape_cast %82 : vector<4xf32> to vector<4x1xf32>
    %cst_39 = arith.constant 2.560000e+02 : f32
    %84 = vector.broadcast %cst_39 : f32 to vector<4x1xf32>
    %85 = arith.divf %83, %84 : vector<4x1xf32>
    %86 = vector.broadcast %85 : vector<4x1xf32> to vector<4x256xf32>
    %87 = arith.subf %81, %86 : vector<4x256xf32>
    %88 = arith.mulf %87, %87 : vector<4x256xf32>
    %cst_40 = arith.constant dense<0.000000e+00> : vector<4xf32>
    %89 = vector.multi_reduction <add>, %88, %cst_40 [1] : vector<4x256xf32> to vector<4xf32>
    %90 = vector.shape_cast %89 : vector<4xf32> to vector<4x1xf32>
    %cst_41 = arith.constant 2.560000e+02 : f32
    %91 = vector.broadcast %cst_41 : f32 to vector<4x1xf32>
    %92 = arith.divf %90, %91 : vector<4x1xf32>
    %cst_42 = arith.constant 9.99999974E-6 : f32
    %93 = vector.broadcast %cst_42 : f32 to vector<4x1xf32>
    %94 = arith.addf %92, %93 : vector<4x1xf32>
    %95 = math.rsqrt %94 : vector<4x1xf32>
    %96 = vector.broadcast %95 : vector<4x1xf32> to vector<4x256xf32>
    %97 = arith.mulf %87, %96 : vector<4x256xf32>
    %cst_43 = arith.constant 0.000000e+00 : f32
    %98 = vector.broadcast %cst_43 : f32 to vector<4x256xf32>
    %99 = arith.maximumf %97, %98 : vector<4x256xf32>
    %c16_i32_44 = arith.constant 16 : i32
    %100 = tpu.dynamic_rotate %99 by %c16_i32_44 dim 1 : vector<4x256xf32>, i32 -> vector<4x256xf32>
    %c240_i32_45 = arith.constant 240 : i32
    %101 = tpu.dynamic_rotate %99 by %c240_i32_45 dim 1 : vector<4x256xf32>, i32 -> vector<4x256xf32>
    %102 = vector.shape_cast %6 : vector<1x256xi1> to vector<1x256xi1>
    %103 = vector.broadcast %102 : vector<1x256xi1> to vector<4x256xi1>
    %104 = arith.select %103, %101, %100 : vector<4x256xi1>, vector<4x256xf32>
    %105 = vector.shape_cast %8 : vector<1x256xi1> to vector<1x256xi1>
    %106 = vector.broadcast %105 : vector<1x256xi1> to vector<4x256xi1>
    %107 = arith.select %106, %100, %101 : vector<4x256xi1>, vector<4x256xf32>
    %cst_46 = arith.constant 0.000000e+00 : f32
    %108 = vector.broadcast %cst_46 : f32 to vector<4x256xf32>
    %c1_i32_47 = arith.constant 1 : i32
    %109 = tpu.dynamic_rotate %104 by %c1_i32_47 dim 1 : vector<4x256xf32>, i32 -> vector<4x256xf32>
    %c255_i32_48 = arith.constant 255 : i32
    %110 = tpu.dynamic_rotate %104 by %c255_i32_48 dim 1 : vector<4x256xf32>, i32 -> vector<4x256xf32>
    %111 = vector.shape_cast %10 : vector<1x256xi1> to vector<1x256xi1>
    %112 = vector.broadcast %111 : vector<1x256xi1> to vector<4x256xi1>
    %113 = arith.select %112, %110, %109 : vector<4x256xi1>, vector<4x256xf32>
    %114 = vector.shape_cast %12 : vector<1x256xi1> to vector<1x256xi1>
    %115 = vector.broadcast %114 : vector<1x256xi1> to vector<4x256xi1>
    %116 = arith.select %115, %109, %110 : vector<4x256xi1>, vector<4x256xf32>
    %c0_49 = arith.constant 0 : index
    %c0_50 = arith.constant 0 : index
    %c0_51 = arith.constant 0 : index
    %117 = vector.load %arg4[%c0_49, %c0_50, %c0_51] : memref<9x4x4xf32, #tpu.memory_space<vmem>>, vector<1x4x4xf32>
    %118 = vector.shape_cast %117 : vector<1x4x4xf32> to vector<4x4xf32>
    %cst_52 = arith.constant dense<0.000000e+00> : vector<4x256xf32>
    %119 = tpu.matmul %118, %113, %cst_52 {dimension_numbers = #tpu.dot_dimension_numbers<[1], [0], [0], [1], [0, 0, 1, 1], [], []>} : vector<4x4xf32>, vector<4x256xf32>, vector<4x256xf32> -> vector<4x256xf32>
    %120 = arith.addf %108, %119 : vector<4x256xf32>
    %c1_53 = arith.constant 1 : index
    %c0_54 = arith.constant 0 : index
    %c0_55 = arith.constant 0 : index
    %121 = vector.load %arg4[%c1_53, %c0_54, %c0_55] : memref<9x4x4xf32, #tpu.memory_space<vmem>>, vector<1x4x4xf32>
    %122 = vector.shape_cast %121 : vector<1x4x4xf32> to vector<4x4xf32>
    %cst_56 = arith.constant dense<0.000000e+00> : vector<4x256xf32>
    %123 = tpu.matmul %122, %104, %cst_56 {dimension_numbers = #tpu.dot_dimension_numbers<[1], [0], [0], [1], [0, 0, 1, 1], [], []>} : vector<4x4xf32>, vector<4x256xf32>, vector<4x256xf32> -> vector<4x256xf32>
    %124 = arith.addf %120, %123 : vector<4x256xf32>
    %c2_57 = arith.constant 2 : index
    %c0_58 = arith.constant 0 : index
    %c0_59 = arith.constant 0 : index
    %125 = vector.load %arg4[%c2_57, %c0_58, %c0_59] : memref<9x4x4xf32, #tpu.memory_space<vmem>>, vector<1x4x4xf32>
    %126 = vector.shape_cast %125 : vector<1x4x4xf32> to vector<4x4xf32>
    %cst_60 = arith.constant dense<0.000000e+00> : vector<4x256xf32>
    %127 = tpu.matmul %126, %116, %cst_60 {dimension_numbers = #tpu.dot_dimension_numbers<[1], [0], [0], [1], [0, 0, 1, 1], [], []>} : vector<4x4xf32>, vector<4x256xf32>, vector<4x256xf32> -> vector<4x256xf32>
    %128 = arith.addf %124, %127 : vector<4x256xf32>
    %c1_i32_61 = arith.constant 1 : i32
    %129 = tpu.dynamic_rotate %99 by %c1_i32_61 dim 1 : vector<4x256xf32>, i32 -> vector<4x256xf32>
    %c255_i32_62 = arith.constant 255 : i32
    %130 = tpu.dynamic_rotate %99 by %c255_i32_62 dim 1 : vector<4x256xf32>, i32 -> vector<4x256xf32>
    %131 = vector.shape_cast %10 : vector<1x256xi1> to vector<1x256xi1>
    %132 = vector.broadcast %131 : vector<1x256xi1> to vector<4x256xi1>
    %133 = arith.select %132, %130, %129 : vector<4x256xi1>, vector<4x256xf32>
    %134 = vector.shape_cast %12 : vector<1x256xi1> to vector<1x256xi1>
    %135 = vector.broadcast %134 : vector<1x256xi1> to vector<4x256xi1>
    %136 = arith.select %135, %129, %130 : vector<4x256xi1>, vector<4x256xf32>
    %c3_63 = arith.constant 3 : index
    %c0_64 = arith.constant 0 : index
    %c0_65 = arith.constant 0 : index
    %137 = vector.load %arg4[%c3_63, %c0_64, %c0_65] : memref<9x4x4xf32, #tpu.memory_space<vmem>>, vector<1x4x4xf32>
    %138 = vector.shape_cast %137 : vector<1x4x4xf32> to vector<4x4xf32>
    %cst_66 = arith.constant dense<0.000000e+00> : vector<4x256xf32>
    %139 = tpu.matmul %138, %133, %cst_66 {dimension_numbers = #tpu.dot_dimension_numbers<[1], [0], [0], [1], [0, 0, 1, 1], [], []>} : vector<4x4xf32>, vector<4x256xf32>, vector<4x256xf32> -> vector<4x256xf32>
    %140 = arith.addf %128, %139 : vector<4x256xf32>
    %c4_67 = arith.constant 4 : index
    %c0_68 = arith.constant 0 : index
    %c0_69 = arith.constant 0 : index
    %141 = vector.load %arg4[%c4_67, %c0_68, %c0_69] : memref<9x4x4xf32, #tpu.memory_space<vmem>>, vector<1x4x4xf32>
    %142 = vector.shape_cast %141 : vector<1x4x4xf32> to vector<4x4xf32>
    %cst_70 = arith.constant dense<0.000000e+00> : vector<4x256xf32>
    %143 = tpu.matmul %142, %99, %cst_70 {dimension_numbers = #tpu.dot_dimension_numbers<[1], [0], [0], [1], [0, 0, 1, 1], [], []>} : vector<4x4xf32>, vector<4x256xf32>, vector<4x256xf32> -> vector<4x256xf32>
    %144 = arith.addf %140, %143 : vector<4x256xf32>
    %c5_71 = arith.constant 5 : index
    %c0_72 = arith.constant 0 : index
    %c0_73 = arith.constant 0 : index
    %145 = vector.load %arg4[%c5_71, %c0_72, %c0_73] : memref<9x4x4xf32, #tpu.memory_space<vmem>>, vector<1x4x4xf32>
    %146 = vector.shape_cast %145 : vector<1x4x4xf32> to vector<4x4xf32>
    %cst_74 = arith.constant dense<0.000000e+00> : vector<4x256xf32>
    %147 = tpu.matmul %146, %136, %cst_74 {dimension_numbers = #tpu.dot_dimension_numbers<[1], [0], [0], [1], [0, 0, 1, 1], [], []>} : vector<4x4xf32>, vector<4x256xf32>, vector<4x256xf32> -> vector<4x256xf32>
    %148 = arith.addf %144, %147 : vector<4x256xf32>
    %c1_i32_75 = arith.constant 1 : i32
    %149 = tpu.dynamic_rotate %107 by %c1_i32_75 dim 1 : vector<4x256xf32>, i32 -> vector<4x256xf32>
    %c255_i32_76 = arith.constant 255 : i32
    %150 = tpu.dynamic_rotate %107 by %c255_i32_76 dim 1 : vector<4x256xf32>, i32 -> vector<4x256xf32>
    %151 = vector.shape_cast %10 : vector<1x256xi1> to vector<1x256xi1>
    %152 = vector.broadcast %151 : vector<1x256xi1> to vector<4x256xi1>
    %153 = arith.select %152, %150, %149 : vector<4x256xi1>, vector<4x256xf32>
    %154 = vector.shape_cast %12 : vector<1x256xi1> to vector<1x256xi1>
    %155 = vector.broadcast %154 : vector<1x256xi1> to vector<4x256xi1>
    %156 = arith.select %155, %149, %150 : vector<4x256xi1>, vector<4x256xf32>
    %c6_77 = arith.constant 6 : index
    %c0_78 = arith.constant 0 : index
    %c0_79 = arith.constant 0 : index
    %157 = vector.load %arg4[%c6_77, %c0_78, %c0_79] : memref<9x4x4xf32, #tpu.memory_space<vmem>>, vector<1x4x4xf32>
    %158 = vector.shape_cast %157 : vector<1x4x4xf32> to vector<4x4xf32>
    %cst_80 = arith.constant dense<0.000000e+00> : vector<4x256xf32>
    %159 = tpu.matmul %158, %153, %cst_80 {dimension_numbers = #tpu.dot_dimension_numbers<[1], [0], [0], [1], [0, 0, 1, 1], [], []>} : vector<4x4xf32>, vector<4x256xf32>, vector<4x256xf32> -> vector<4x256xf32>
    %160 = arith.addf %148, %159 : vector<4x256xf32>
    %c7_81 = arith.constant 7 : index
    %c0_82 = arith.constant 0 : index
    %c0_83 = arith.constant 0 : index
    %161 = vector.load %arg4[%c7_81, %c0_82, %c0_83] : memref<9x4x4xf32, #tpu.memory_space<vmem>>, vector<1x4x4xf32>
    %162 = vector.shape_cast %161 : vector<1x4x4xf32> to vector<4x4xf32>
    %cst_84 = arith.constant dense<0.000000e+00> : vector<4x256xf32>
    %163 = tpu.matmul %162, %107, %cst_84 {dimension_numbers = #tpu.dot_dimension_numbers<[1], [0], [0], [1], [0, 0, 1, 1], [], []>} : vector<4x4xf32>, vector<4x256xf32>, vector<4x256xf32> -> vector<4x256xf32>
    %164 = arith.addf %160, %163 : vector<4x256xf32>
    %c8_85 = arith.constant 8 : index
    %c0_86 = arith.constant 0 : index
    %c0_87 = arith.constant 0 : index
    %165 = vector.load %arg4[%c8_85, %c0_86, %c0_87] : memref<9x4x4xf32, #tpu.memory_space<vmem>>, vector<1x4x4xf32>
    %166 = vector.shape_cast %165 : vector<1x4x4xf32> to vector<4x4xf32>
    %cst_88 = arith.constant dense<0.000000e+00> : vector<4x256xf32>
    %167 = tpu.matmul %166, %156, %cst_88 {dimension_numbers = #tpu.dot_dimension_numbers<[1], [0], [0], [1], [0, 0, 1, 1], [], []>} : vector<4x4xf32>, vector<4x256xf32>, vector<4x256xf32> -> vector<4x256xf32>
    %168 = arith.addf %164, %167 : vector<4x256xf32>
    %cst_89 = arith.constant dense<0.000000e+00> : vector<4xf32>
    %169 = vector.multi_reduction <add>, %168, %cst_89 [1] : vector<4x256xf32> to vector<4xf32>
    %170 = vector.shape_cast %169 : vector<4xf32> to vector<4x1xf32>
    %cst_90 = arith.constant 2.560000e+02 : f32
    %171 = vector.broadcast %cst_90 : f32 to vector<4x1xf32>
    %172 = arith.divf %170, %171 : vector<4x1xf32>
    %173 = vector.broadcast %172 : vector<4x1xf32> to vector<4x256xf32>
    %174 = arith.subf %168, %173 : vector<4x256xf32>
    %175 = arith.mulf %174, %174 : vector<4x256xf32>
    %cst_91 = arith.constant dense<0.000000e+00> : vector<4xf32>
    %176 = vector.multi_reduction <add>, %175, %cst_91 [1] : vector<4x256xf32> to vector<4xf32>
    %177 = vector.shape_cast %176 : vector<4xf32> to vector<4x1xf32>
    %cst_92 = arith.constant 2.560000e+02 : f32
    %178 = vector.broadcast %cst_92 : f32 to vector<4x1xf32>
    %179 = arith.divf %177, %178 : vector<4x1xf32>
    %cst_93 = arith.constant 9.99999974E-6 : f32
    %180 = vector.broadcast %cst_93 : f32 to vector<4x1xf32>
    %181 = arith.addf %179, %180 : vector<4x1xf32>
    %182 = math.rsqrt %181 : vector<4x1xf32>
    %183 = vector.broadcast %182 : vector<4x1xf32> to vector<4x256xf32>
    %184 = arith.mulf %174, %183 : vector<4x256xf32>
    %185 = arith.addf %1, %184 : vector<4x256xf32>
    %c0_94 = arith.constant 0 : index
    %c0_95 = arith.constant 0 : index
    %c0_96 = arith.constant 0 : index
    %186 = vector.load %arg5[%c0_94, %c0_95, %c0_96] : memref<1x4x256xf32, #tpu.memory_space<vmem>>, vector<1x4x256xf32>
    %187 = vector.shape_cast %186 : vector<1x4x256xf32> to vector<4x256xf32>
    %188 = vector.shape_cast %185 : vector<4x256xf32> to vector<1x4x256xf32>
    tpu.vector_store %arg5[%c0_94, %c0_95, %c0_96], %188 {strides = array<i32>} : memref<1x4x256xf32, #tpu.memory_space<vmem>>, vector<1x4x256xf32>,
    return
  }
  func.func @transform_0(%arg0: i32) -> (i32, i32) {
    %c0_i32 = arith.constant 0 : i32
    %c0_i32_0 = arith.constant 0 : i32
    %c0_i32_1 = arith.constant 0 : i32
    return %c0_i32, %c0_i32_0 : i32, i32
  }
  func.func @transform_1(%arg0: i32) -> (i32, i32, i32) {
    %c0_i32 = arith.constant 0 : i32
    %c0_i32_0 = arith.constant 0 : i32
    %c0_i32_1 = arith.constant 0 : i32
    return %arg0, %c0_i32, %c0_i32_0 : i32, i32, i32
  }
  func.func @transform_2(%arg0: i32) -> (i32, i32, i32) {
    %c0_i32 = arith.constant 0 : i32
    %c0_i32_0 = arith.constant 0 : i32
    %c0_i32_1 = arith.constant 0 : i32
    %c0_i32_2 = arith.constant 0 : i32
    return %c0_i32, %c0_i32_0, %c0_i32_1 : i32, i32, i32
  }
  func.func @transform_3(%arg0: i32) -> (i32, i32, i32) {
    %c0_i32 = arith.constant 0 : i32
    %c0_i32_0 = arith.constant 0 : i32
    %c0_i32_1 = arith.constant 0 : i32
    %c0_i32_2 = arith.constant 0 : i32
    return %c0_i32, %c0_i32_0, %c0_i32_1 : i32, i32, i32
  }
  func.func @transform_4(%arg0: i32) -> (i32, i32, i32) {
    %c0_i32 = arith.constant 0 : i32
    %c0_i32_0 = arith.constant 0 : i32
    %c0_i32_1 = arith.constant 0 : i32
    return %arg0, %c0_i32, %c0_i32_0 : i32, i32, i32
  }
}

module attributes {stable_mosaic.version = 11 : i64} {
  func.func @fused_residual_kernel(%arg0: i32, %arg1: memref<2x256xi32, #tpu.memory_space<vmem>>, %arg2: memref<1x4x256xf32, #tpu.memory_space<vmem>>, %arg3: memref<9x4x4xf32, #tpu.memory_space<vmem>>, %arg4: memref<9x4x4xf32, #tpu.memory_space<vmem>>, %arg5: memref<1x4x256xf32, #tpu.memory_space<vmem>>) attributes {dimension_semantics = [#tpu.dimension_semantics<parallel>], iteration_bounds = array<i64: 2>, scalar_prefetch = 0 : i64, scratch_operands = 0 : i64, tpu.core_type = #tpu.core_type<tc>, window_params = [{pipeline_mode = #tpu.pipeline_mode<synchronous>, transform_indices = @transform_0, window_bounds = array<i64: 2, 256>}, {transform_indices = @transform_1, window_bounds = array<i64: 1, 4, 256>}, {pipeline_mode = #tpu.pipeline_mode<synchronous>, transform_indices = @transform_2, window_bounds = array<i64: 9, 4, 4>}, {pipeline_mode = #tpu.pipeline_mode<synchronous>, transform_indices = @transform_3, window_bounds = array<i64: 9, 4, 4>}, {transform_indices = @transform_4, window_bounds = array<i64: 1, 4, 256>}]} {
    %c0 = arith.constant 0 : index
    %c0_0 = arith.constant 0 : index
    %c0_1 = arith.constant 0 : index
    %0 = vector.load %arg2[%c0, %c0_0, %c0_1] : memref<1x4x256xf32, #tpu.memory_space<vmem>>, vector<1x4x256xf32>
    %1 = vector.shape_cast %0 : vector<1x4x256xf32> to vector<4x256xf32>
    %c0_2 = arith.constant 0 : index
    %c0_3 = arith.constant 0 : index
    %2 = vector.load %arg1[%c0_2, %c0_3] : memref<2x256xi32, #tpu.memory_space<vmem>>, vector<2x256xi32>
    %3 = vector.extract_strided_slice %2 {offsets = [0, 0], sizes = [1, 256], strides = [1, 1]} : vector<2x256xi32> to vector<1x256xi32>
    %4 = vector.extract_strided_slice %2 {offsets = [1, 0], sizes = [1, 256], strides = [1, 1]} : vector<2x256xi32> to vector<1x256xi32>
    %c0_i32 = arith.constant 0 : i32
    %5 = vector.broadcast %c0_i32 : i32 to vector<1x256xi32>
    %6 = arith.cmpi eq, %3, %5 : vector<1x256xi32>
    %c15_i32 = arith.constant 15 : i32
    %7 = vector.broadcast %c15_i32 : i32 to vector<1x256xi32>
    %8 = arith.cmpi eq, %3, %7 : vector<1x256xi32>
    %c0_i32_4 = arith.constant 0 : i32
    %9 = vector.broadcast %c0_i32_4 : i32 to vector<1x256xi32>
    %10 = arith.cmpi eq, %4, %9 : vector<1x256xi32>
    %c15_i32_5 = arith.constant 15 : i32
    %11 = vector.broadcast %c15_i32_5 : i32 to vector<1x256xi32>
    %12 = arith.cmpi eq, %4, %11 : vector<1x256xi32>
    %c16_i32 = arith.constant 16 : i32
    %13 = tpu.dynamic_rotate %1 by %c16_i32 dim 1 : vector<4x256xf32>, i32 -> vector<4x256xf32>
    %c240_i32 = arith.constant 240 : i32
    %14 = tpu.dynamic_rotate %1 by %c240_i32 dim 1 : vector<4x256xf32>, i32 -> vector<4x256xf32>
    %15 = vector.shape_cast %6 : vector<1x256xi1> to vector<1x256xi1>
    %16 = vector.broadcast %15 : vector<1x256xi1> to vector<4x256xi1>
    %17 = arith.select %16, %14, %13 : vector<4x256xi1>, vector<4x256xf32>
    %18 = vector.shape_cast %8 : vector<1x256xi1> to vector<1x256xi1>
    %19 = vector.broadcast %18 : vector<1x256xi1> to vector<4x256xi1>
    %20 = arith.select %19, %13, %14 : vector<4x256xi1>, vector<4x256xf32>
    %cst = arith.constant 0.000000e+00 : f32
    %21 = vector.broadcast %cst : f32 to vector<4x256xf32>
    %c1_i32 = arith.constant 1 : i32
    %22 = tpu.dynamic_rotate %17 by %c1_i32 dim 1 : vector<4x256xf32>, i32 -> vector<4x256xf32>
    %c255_i32 = arith.constant 255 : i32
    %23 = tpu.dynamic_rotate %17 by %c255_i32 dim 1 : vector<4x256xf32>, i32 -> vector<4x256xf32>
    %24 = vector.shape_cast %10 : vector<1x256xi1> to vector<1x256xi1>
    %25 = vector.broadcast %24 : vector<1x256xi1> to vector<4x256xi1>
    %26 = arith.select %25, %23, %22 : vector<4x256xi1>, vector<4x256xf32>
    %27 = vector.shape_cast %12 : vector<1x256xi1> to vector<1x256xi1>
    %28 = vector.broadcast %27 : vector<1x256xi1> to vector<4x256xi1>
    %29 = arith.select %28, %22, %23 : vector<4x256xi1>, vector<4x256xf32>
    %c0_6 = arith.constant 0 : index
    %c0_7 = arith.constant 0 : index
    %c0_8 = arith.constant 0 : index
    %30 = vector.load %arg3[%c0_6, %c0_7, %c0_8] : memref<9x4x4xf32, #tpu.memory_space<vmem>>, vector<1x4x4xf32>
    %31 = vector.shape_cast %30 : vector<1x4x4xf32> to vector<4x4xf32>
    %cst_9 = arith.constant dense<0.000000e+00> : vector<4x256xf32>
    %32 = tpu.matmul %31, %26, %cst_9 {dimension_numbers = #tpu.dot_dimension_numbers<[1], [0], [0], [1], [0, 0, 1, 1], [], []>} : vector<4x4xf32>, vector<4x256xf32>, vector<4x256xf32> -> vector<4x256xf32>
    %33 = arith.addf %21, %32 : vector<4x256xf32>
    %c1 = arith.constant 1 : index
    %c0_10 = arith.constant 0 : index
    %c0_11 = arith.constant 0 : index
    %34 = vector.load %arg3[%c1, %c0_10, %c0_11] : memref<9x4x4xf32, #tpu.memory_space<vmem>>, vector<1x4x4xf32>
    %35 = vector.shape_cast %34 : vector<1x4x4xf32> to vector<4x4xf32>
    %cst_12 = arith.constant dense<0.000000e+00> : vector<4x256xf32>
    %36 = tpu.matmul %35, %17, %cst_12 {dimension_numbers = #tpu.dot_dimension_numbers<[1], [0], [0], [1], [0, 0, 1, 1], [], []>} : vector<4x4xf32>, vector<4x256xf32>, vector<4x256xf32> -> vector<4x256xf32>
    %37 = arith.addf %33, %36 : vector<4x256xf32>
    %c2 = arith.constant 2 : index
    %c0_13 = arith.constant 0 : index
    %c0_14 = arith.constant 0 : index
    %38 = vector.load %arg3[%c2, %c0_13, %c0_14] : memref<9x4x4xf32, #tpu.memory_space<vmem>>, vector<1x4x4xf32>
    %39 = vector.shape_cast %38 : vector<1x4x4xf32> to vector<4x4xf32>
    %cst_15 = arith.constant dense<0.000000e+00> : vector<4x256xf32>
    %40 = tpu.matmul %39, %29, %cst_15 {dimension_numbers = #tpu.dot_dimension_numbers<[1], [0], [0], [1], [0, 0, 1, 1], [], []>} : vector<4x4xf32>, vector<4x256xf32>, vector<4x256xf32> -> vector<4x256xf32>
    %41 = arith.addf %37, %40 : vector<4x256xf32>
    %c1_i32_16 = arith.constant 1 : i32
    %42 = tpu.dynamic_rotate %1 by %c1_i32_16 dim 1 : vector<4x256xf32>, i32 -> vector<4x256xf32>
    %c255_i32_17 = arith.constant 255 : i32
    %43 = tpu.dynamic_rotate %1 by %c255_i32_17 dim 1 : vector<4x256xf32>, i32 -> vector<4x256xf32>
    %44 = vector.shape_cast %10 : vector<1x256xi1> to vector<1x256xi1>
    %45 = vector.broadcast %44 : vector<1x256xi1> to vector<4x256xi1>
    %46 = arith.select %45, %43, %42 : vector<4x256xi1>, vector<4x256xf32>
    %47 = vector.shape_cast %12 : vector<1x256xi1> to vector<1x256xi1>
    %48 = vector.broadcast %47 : vector<1x256xi1> to vector<4x256xi1>
    %49 = arith.select %48, %42, %43 : vector<4x256xi1>, vector<4x256xf32>
    %c3 = arith.constant 3 : index
    %c0_18 = arith.constant 0 : index
    %c0_19 = arith.constant 0 : index
    %50 = vector.load %arg3[%c3, %c0_18, %c0_19] : memref<9x4x4xf32, #tpu.memory_space<vmem>>, vector<1x4x4xf32>
    %51 = vector.shape_cast %50 : vector<1x4x4xf32> to vector<4x4xf32>
    %cst_20 = arith.constant dense<0.000000e+00> : vector<4x256xf32>
    %52 = tpu.matmul %51, %46, %cst_20 {dimension_numbers = #tpu.dot_dimension_numbers<[1], [0], [0], [1], [0, 0, 1, 1], [], []>} : vector<4x4xf32>, vector<4x256xf32>, vector<4x256xf32> -> vector<4x256xf32>
    %53 = arith.addf %41, %52 : vector<4x256xf32>
    %c4 = arith.constant 4 : index
    %c0_21 = arith.constant 0 : index
    %c0_22 = arith.constant 0 : index
    %54 = vector.load %arg3[%c4, %c0_21, %c0_22] : memref<9x4x4xf32, #tpu.memory_space<vmem>>, vector<1x4x4xf32>
    %55 = vector.shape_cast %54 : vector<1x4x4xf32> to vector<4x4xf32>
    %cst_23 = arith.constant dense<0.000000e+00> : vector<4x256xf32>
    %56 = tpu.matmul %55, %1, %cst_23 {dimension_numbers = #tpu.dot_dimension_numbers<[1], [0], [0], [1], [0, 0, 1, 1], [], []>} : vector<4x4xf32>, vector<4x256xf32>, vector<4x256xf32> -> vector<4x256xf32>
    %57 = arith.addf %53, %56 : vector<4x256xf32>
    %c5 = arith.constant 5 : index
    %c0_24 = arith.constant 0 : index
    %c0_25 = arith.constant 0 : index
    %58 = vector.load %arg3[%c5, %c0_24, %c0_25] : memref<9x4x4xf32, #tpu.memory_space<vmem>>, vector<1x4x4xf32>
    %59 = vector.shape_cast %58 : vector<1x4x4xf32> to vector<4x4xf32>
    %cst_26 = arith.constant dense<0.000000e+00> : vector<4x256xf32>
    %60 = tpu.matmul %59, %49, %cst_26 {dimension_numbers = #tpu.dot_dimension_numbers<[1], [0], [0], [1], [0, 0, 1, 1], [], []>} : vector<4x4xf32>, vector<4x256xf32>, vector<4x256xf32> -> vector<4x256xf32>
    %61 = arith.addf %57, %60 : vector<4x256xf32>
    %c1_i32_27 = arith.constant 1 : i32
    %62 = tpu.dynamic_rotate %20 by %c1_i32_27 dim 1 : vector<4x256xf32>, i32 -> vector<4x256xf32>
    %c255_i32_28 = arith.constant 255 : i32
    %63 = tpu.dynamic_rotate %20 by %c255_i32_28 dim 1 : vector<4x256xf32>, i32 -> vector<4x256xf32>
    %64 = vector.shape_cast %10 : vector<1x256xi1> to vector<1x256xi1>
    %65 = vector.broadcast %64 : vector<1x256xi1> to vector<4x256xi1>
    %66 = arith.select %65, %63, %62 : vector<4x256xi1>, vector<4x256xf32>
    %67 = vector.shape_cast %12 : vector<1x256xi1> to vector<1x256xi1>
    %68 = vector.broadcast %67 : vector<1x256xi1> to vector<4x256xi1>
    %69 = arith.select %68, %62, %63 : vector<4x256xi1>, vector<4x256xf32>
    %c6 = arith.constant 6 : index
    %c0_29 = arith.constant 0 : index
    %c0_30 = arith.constant 0 : index
    %70 = vector.load %arg3[%c6, %c0_29, %c0_30] : memref<9x4x4xf32, #tpu.memory_space<vmem>>, vector<1x4x4xf32>
    %71 = vector.shape_cast %70 : vector<1x4x4xf32> to vector<4x4xf32>
    %cst_31 = arith.constant dense<0.000000e+00> : vector<4x256xf32>
    %72 = tpu.matmul %71, %66, %cst_31 {dimension_numbers = #tpu.dot_dimension_numbers<[1], [0], [0], [1], [0, 0, 1, 1], [], []>} : vector<4x4xf32>, vector<4x256xf32>, vector<4x256xf32> -> vector<4x256xf32>
    %73 = arith.addf %61, %72 : vector<4x256xf32>
    %c7 = arith.constant 7 : index
    %c0_32 = arith.constant 0 : index
    %c0_33 = arith.constant 0 : index
    %74 = vector.load %arg3[%c7, %c0_32, %c0_33] : memref<9x4x4xf32, #tpu.memory_space<vmem>>, vector<1x4x4xf32>
    %75 = vector.shape_cast %74 : vector<1x4x4xf32> to vector<4x4xf32>
    %cst_34 = arith.constant dense<0.000000e+00> : vector<4x256xf32>
    %76 = tpu.matmul %75, %20, %cst_34 {dimension_numbers = #tpu.dot_dimension_numbers<[1], [0], [0], [1], [0, 0, 1, 1], [], []>} : vector<4x4xf32>, vector<4x256xf32>, vector<4x256xf32> -> vector<4x256xf32>
    %77 = arith.addf %73, %76 : vector<4x256xf32>
    %c8 = arith.constant 8 : index
    %c0_35 = arith.constant 0 : index
    %c0_36 = arith.constant 0 : index
    %78 = vector.load %arg3[%c8, %c0_35, %c0_36] : memref<9x4x4xf32, #tpu.memory_space<vmem>>, vector<1x4x4xf32>
    %79 = vector.shape_cast %78 : vector<1x4x4xf32> to vector<4x4xf32>
    %cst_37 = arith.constant dense<0.000000e+00> : vector<4x256xf32>
    %80 = tpu.matmul %79, %69, %cst_37 {dimension_numbers = #tpu.dot_dimension_numbers<[1], [0], [0], [1], [0, 0, 1, 1], [], []>} : vector<4x4xf32>, vector<4x256xf32>, vector<4x256xf32> -> vector<4x256xf32>
    %81 = arith.addf %77, %80 : vector<4x256xf32>
    %cst_38 = arith.constant dense<0.000000e+00> : vector<4xf32>
    %82 = vector.multi_reduction <add>, %81, %cst_38 [1] : vector<4x256xf32> to vector<4xf32>
    %83 = vector.shape_cast %82 : vector<4xf32> to vector<4x1xf32>
    %cst_39 = arith.constant 2.560000e+02 : f32
    %84 = vector.broadcast %cst_39 : f32 to vector<4x1xf32>
    %85 = arith.divf %83, %84 : vector<4x1xf32>
    %86 = vector.broadcast %85 : vector<4x1xf32> to vector<4x256xf32>
    %87 = arith.subf %81, %86 : vector<4x256xf32>
    %88 = arith.mulf %87, %87 : vector<4x256xf32>
    %cst_40 = arith.constant dense<0.000000e+00> : vector<4xf32>
    %89 = vector.multi_reduction <add>, %88, %cst_40 [1] : vector<4x256xf32> to vector<4xf32>
    %90 = vector.shape_cast %89 : vector<4xf32> to vector<4x1xf32>
    %cst_41 = arith.constant 2.560000e+02 : f32
    %91 = vector.broadcast %cst_41 : f32 to vector<4x1xf32>
    %92 = arith.divf %90, %91 : vector<4x1xf32>
    %cst_42 = arith.constant 9.99999974E-6 : f32
    %93 = vector.broadcast %cst_42 : f32 to vector<4x1xf32>
    %94 = arith.addf %92, %93 : vector<4x1xf32>
    %95 = math.rsqrt %94 : vector<4x1xf32>
    %96 = vector.broadcast %95 : vector<4x1xf32> to vector<4x256xf32>
    %97 = arith.mulf %87, %96 : vector<4x256xf32>
    %cst_43 = arith.constant 0.000000e+00 : f32
    %98 = vector.broadcast %cst_43 : f32 to vector<4x256xf32>
    %99 = arith.maximumf %97, %98 : vector<4x256xf32>
    %c16_i32_44 = arith.constant 16 : i32
    %100 = tpu.dynamic_rotate %99 by %c16_i32_44 dim 1 : vector<4x256xf32>, i32 -> vector<4x256xf32>
    %c240_i32_45 = arith.constant 240 : i32
    %101 = tpu.dynamic_rotate %99 by %c240_i32_45 dim 1 : vector<4x256xf32>, i32 -> vector<4x256xf32>
    %102 = vector.shape_cast %6 : vector<1x256xi1> to vector<1x256xi1>
    %103 = vector.broadcast %102 : vector<1x256xi1> to vector<4x256xi1>
    %104 = arith.select %103, %101, %100 : vector<4x256xi1>, vector<4x256xf32>
    %105 = vector.shape_cast %8 : vector<1x256xi1> to vector<1x256xi1>
    %106 = vector.broadcast %105 : vector<1x256xi1> to vector<4x256xi1>
    %107 = arith.select %106, %100, %101 : vector<4x256xi1>, vector<4x256xf32>
    %cst_46 = arith.constant 0.000000e+00 : f32
    %108 = vector.broadcast %cst_46 : f32 to vector<4x256xf32>
    %c1_i32_47 = arith.constant 1 : i32
    %109 = tpu.dynamic_rotate %104 by %c1_i32_47 dim 1 : vector<4x256xf32>, i32 -> vector<4x256xf32>
    %c255_i32_48 = arith.constant 255 : i32
    %110 = tpu.dynamic_rotate %104 by %c255_i32_48 dim 1 : vector<4x256xf32>, i32 -> vector<4x256xf32>
    %111 = vector.shape_cast %10 : vector<1x256xi1> to vector<1x256xi1>
    %112 = vector.broadcast %111 : vector<1x256xi1> to vector<4x256xi1>
    %113 = arith.select %112, %110, %109 : vector<4x256xi1>, vector<4x256xf32>
    %114 = vector.shape_cast %12 : vector<1x256xi1> to vector<1x256xi1>
    %115 = vector.broadcast %114 : vector<1x256xi1> to vector<4x256xi1>
    %116 = arith.select %115, %109, %110 : vector<4x256xi1>, vector<4x256xf32>
    %c0_49 = arith.constant 0 : index
    %c0_50 = arith.constant 0 : index
    %c0_51 = arith.constant 0 : index
    %117 = vector.load %arg4[%c0_49, %c0_50, %c0_51] : memref<9x4x4xf32, #tpu.memory_space<vmem>>, vector<1x4x4xf32>
    %118 = vector.shape_cast %117 : vector<1x4x4xf32> to vector<4x4xf32>
    %cst_52 = arith.constant dense<0.000000e+00> : vector<4x256xf32>
    %119 = tpu.matmul %118, %113, %cst_52 {dimension_numbers = #tpu.dot_dimension_numbers<[1], [0], [0], [1], [0, 0, 1, 1], [], []>} : vector<4x4xf32>, vector<4x256xf32>, vector<4x256xf32> -> vector<4x256xf32>
    %120 = arith.addf %108, %119 : vector<4x256xf32>
    %c1_53 = arith.constant 1 : index
    %c0_54 = arith.constant 0 : index
    %c0_55 = arith.constant 0 : index
    %121 = vector.load %arg4[%c1_53, %c0_54, %c0_55] : memref<9x4x4xf32, #tpu.memory_space<vmem>>, vector<1x4x4xf32>
    %122 = vector.shape_cast %121 : vector<1x4x4xf32> to vector<4x4xf32>
    %cst_56 = arith.constant dense<0.000000e+00> : vector<4x256xf32>
    %123 = tpu.matmul %122, %104, %cst_56 {dimension_numbers = #tpu.dot_dimension_numbers<[1], [0], [0], [1], [0, 0, 1, 1], [], []>} : vector<4x4xf32>, vector<4x256xf32>, vector<4x256xf32> -> vector<4x256xf32>
    %124 = arith.addf %120, %123 : vector<4x256xf32>
    %c2_57 = arith.constant 2 : index
    %c0_58 = arith.constant 0 : index
    %c0_59 = arith.constant 0 : index
    %125 = vector.load %arg4[%c2_57, %c0_58, %c0_59] : memref<9x4x4xf32, #tpu.memory_space<vmem>>, vector<1x4x4xf32>
    %126 = vector.shape_cast %125 : vector<1x4x4xf32> to vector<4x4xf32>
    %cst_60 = arith.constant dense<0.000000e+00> : vector<4x256xf32>
    %127 = tpu.matmul %126, %116, %cst_60 {dimension_numbers = #tpu.dot_dimension_numbers<[1], [0], [0], [1], [0, 0, 1, 1], [], []>} : vector<4x4xf32>, vector<4x256xf32>, vector<4x256xf32> -> vector<4x256xf32>
    %128 = arith.addf %124, %127 : vector<4x256xf32>
    %c1_i32_61 = arith.constant 1 : i32
    %129 = tpu.dynamic_rotate %99 by %c1_i32_61 dim 1 : vector<4x256xf32>, i32 -> vector<4x256xf32>
    %c255_i32_62 = arith.constant 255 : i32
    %130 = tpu.dynamic_rotate %99 by %c255_i32_62 dim 1 : vector<4x256xf32>, i32 -> vector<4x256xf32>
    %131 = vector.shape_cast %10 : vector<1x256xi1> to vector<1x256xi1>
    %132 = vector.broadcast %131 : vector<1x256xi1> to vector<4x256xi1>
    %133 = arith.select %132, %130, %129 : vector<4x256xi1>, vector<4x256xf32>
    %134 = vector.shape_cast %12 : vector<1x256xi1> to vector<1x256xi1>
    %135 = vector.broadcast %134 : vector<1x256xi1> to vector<4x256xi1>
    %136 = arith.select %135, %129, %130 : vector<4x256xi1>, vector<4x256xf32>
    %c3_63 = arith.constant 3 : index
    %c0_64 = arith.constant 0 : index
    %c0_65 = arith.constant 0 : index
    %137 = vector.load %arg4[%c3_63, %c0_64, %c0_65] : memref<9x4x4xf32, #tpu.memory_space<vmem>>, vector<1x4x4xf32>
    %138 = vector.shape_cast %137 : vector<1x4x4xf32> to vector<4x4xf32>
    %cst_66 = arith.constant dense<0.000000e+00> : vector<4x256xf32>
    %139 = tpu.matmul %138, %133, %cst_66 {dimension_numbers = #tpu.dot_dimension_numbers<[1], [0], [0], [1], [0, 0, 1, 1], [], []>} : vector<4x4xf32>, vector<4x256xf32>, vector<4x256xf32> -> vector<4x256xf32>
    %140 = arith.addf %128, %139 : vector<4x256xf32>
    %c4_67 = arith.constant 4 : index
    %c0_68 = arith.constant 0 : index
    %c0_69 = arith.constant 0 : index
    %141 = vector.load %arg4[%c4_67, %c0_68, %c0_69] : memref<9x4x4xf32, #tpu.memory_space<vmem>>, vector<1x4x4xf32>
    %142 = vector.shape_cast %141 : vector<1x4x4xf32> to vector<4x4xf32>
    %cst_70 = arith.constant dense<0.000000e+00> : vector<4x256xf32>
    %143 = tpu.matmul %142, %99, %cst_70 {dimension_numbers = #tpu.dot_dimension_numbers<[1], [0], [0], [1], [0, 0, 1, 1], [], []>} : vector<4x4xf32>, vector<4x256xf32>, vector<4x256xf32> -> vector<4x256xf32>
    %144 = arith.addf %140, %143 : vector<4x256xf32>
    %c5_71 = arith.constant 5 : index
    %c0_72 = arith.constant 0 : index
    %c0_73 = arith.constant 0 : index
    %145 = vector.load %arg4[%c5_71, %c0_72, %c0_73] : memref<9x4x4xf32, #tpu.memory_space<vmem>>, vector<1x4x4xf32>
    %146 = vector.shape_cast %145 : vector<1x4x4xf32> to vector<4x4xf32>
    %cst_74 = arith.constant dense<0.000000e+00> : vector<4x256xf32>
    %147 = tpu.matmul %146, %136, %cst_74 {dimension_numbers = #tpu.dot_dimension_numbers<[1], [0], [0], [1], [0, 0, 1, 1], [], []>} : vector<4x4xf32>, vector<4x256xf32>, vector<4x256xf32> -> vector<4x256xf32>
    %148 = arith.addf %144, %147 : vector<4x256xf32>
    %c1_i32_75 = arith.constant 1 : i32
    %149 = tpu.dynamic_rotate %107 by %c1_i32_75 dim 1 : vector<4x256xf32>, i32 -> vector<4x256xf32>
    %c255_i32_76 = arith.constant 255 : i32
    %150 = tpu.dynamic_rotate %107 by %c255_i32_76 dim 1 : vector<4x256xf32>, i32 -> vector<4x256xf32>
    %151 = vector.shape_cast %10 : vector<1x256xi1> to vector<1x256xi1>
    %152 = vector.broadcast %151 : vector<1x256xi1> to vector<4x256xi1>
    %153 = arith.select %152, %150, %149 : vector<4x256xi1>, vector<4x256xf32>
    %154 = vector.shape_cast %12 : vector<1x256xi1> to vector<1x256xi1>
    %155 = vector.broadcast %154 : vector<1x256xi1> to vector<4x256xi1>
    %156 = arith.select %155, %149, %150 : vector<4x256xi1>, vector<4x256xf32>
    %c6_77 = arith.constant 6 : index
    %c0_78 = arith.constant 0 : index
    %c0_79 = arith.constant 0 : index
    %157 = vector.load %arg4[%c6_77, %c0_78, %c0_79] : memref<9x4x4xf32, #tpu.memory_space<vmem>>, vector<1x4x4xf32>
    %158 = vector.shape_cast %157 : vector<1x4x4xf32> to vector<4x4xf32>
    %cst_80 = arith.constant dense<0.000000e+00> : vector<4x256xf32>
    %159 = tpu.matmul %158, %153, %cst_80 {dimension_numbers = #tpu.dot_dimension_numbers<[1], [0], [0], [1], [0, 0, 1, 1], [], []>} : vector<4x4xf32>, vector<4x256xf32>, vector<4x256xf32> -> vector<4x256xf32>
    %160 = arith.addf %148, %159 : vector<4x256xf32>
    %c7_81 = arith.constant 7 : index
    %c0_82 = arith.constant 0 : index
    %c0_83 = arith.constant 0 : index
    %161 = vector.load %arg4[%c7_81, %c0_82, %c0_83] : memref<9x4x4xf32, #tpu.memory_space<vmem>>, vector<1x4x4xf32>
    %162 = vector.shape_cast %161 : vector<1x4x4xf32> to vector<4x4xf32>
    %cst_84 = arith.constant dense<0.000000e+00> : vector<4x256xf32>
    %163 = tpu.matmul %162, %107, %cst_84 {dimension_numbers = #tpu.dot_dimension_numbers<[1], [0], [0], [1], [0, 0, 1, 1], [], []>} : vector<4x4xf32>, vector<4x256xf32>, vector<4x256xf32> -> vector<4x256xf32>
    %164 = arith.addf %160, %163 : vector<4x256xf32>
    %c8_85 = arith.constant 8 : index
    %c0_86 = arith.constant 0 : index
    %c0_87 = arith.constant 0 : index
    %165 = vector.load %arg4[%c8_85, %c0_86, %c0_87] : memref<9x4x4xf32, #tpu.memory_space<vmem>>, vector<1x4x4xf32>
    %166 = vector.shape_cast %165 : vector<1x4x4xf32> to vector<4x4xf32>
    %cst_88 = arith.constant dense<0.000000e+00> : vector<4x256xf32>
    %167 = tpu.matmul %166, %156, %cst_88 {dimension_numbers = #tpu.dot_dimension_numbers<[1], [0], [0], [1], [0, 0, 1, 1], [], []>} : vector<4x4xf32>, vector<4x256xf32>, vector<4x256xf32> -> vector<4x256xf32>
    %168 = arith.addf %164, %167 : vector<4x256xf32>
    %cst_89 = arith.constant dense<0.000000e+00> : vector<4xf32>
    %169 = vector.multi_reduction <add>, %168, %cst_89 [1] : vector<4x256xf32> to vector<4xf32>
    %170 = vector.shape_cast %169 : vector<4xf32> to vector<4x1xf32>
    %cst_90 = arith.constant 2.560000e+02 : f32
    %171 = vector.broadcast %cst_90 : f32 to vector<4x1xf32>
    %172 = arith.divf %170, %171 : vector<4x1xf32>
    %173 = vector.broadcast %172 : vector<4x1xf32> to vector<4x256xf32>
    %174 = arith.subf %168, %173 : vector<4x256xf32>
    %175 = arith.mulf %174, %174 : vector<4x256xf32>
    %cst_91 = arith.constant dense<0.000000e+00> : vector<4xf32>
    %176 = vector.multi_reduction <add>, %175, %cst_91 [1] : vector<4x256xf32> to vector<4xf32>
    %177 = vector.shape_cast %176 : vector<4xf32> to vector<4x1xf32>
    %cst_92 = arith.constant 2.560000e+02 : f32
    %178 = vector.broadcast %cst_92 : f32 to vector<4x1xf32>
    %179 = arith.divf %177, %178 : vector<4x1xf32>
    %cst_93 = arith.constant 9.99999974E-6 : f32
    %180 = vector.broadcast %cst_93 : f32 to vector<4x1xf32>
    %181 = arith.addf %179, %180 : vector<4x1xf32>
    %182 = math.rsqrt %181 : vector<4x1xf32>
    %183 = vector.broadcast %182 : vector<4x1xf32> to vector<4x256xf32>
    %184 = arith.mulf %174, %183 : vector<4x256xf32>
    %185 = arith.addf %1, %184 : vector<4x256xf32>
    %c0_94 = arith.constant 0 : index
    %c0_95 = arith.constant 0 : index
    %c0_96 = arith.constant 0 : index
    %186 = vector.load %arg5[%c0_94, %c0_95, %c0_96] : memref<1x4x256xf32, #tpu.memory_space<vmem>>, vector<1x4x256xf32>
    %187 = vector.shape_cast %186 : vector<1x4x256xf32> to vector<4x256xf32>
    %188 = vector.shape_cast %185 : vector<4x256xf32> to vector<1x4x256xf32>
    tpu.vector_store %arg5[%c0_94, %c0_95, %c0_96], %188 {strides = array<i32>} : memref<1x4x256xf32, #tpu.memory_space<vmem>>, vector<1x4x256xf32>,
    return
  }
  func.func @transform_0(%arg0: i32) -> (i32, i32) {
    %c0_i32 = arith.constant 0 : i32
    %c0_i32_0 = arith.constant 0 : i32
    %c0_i32_1 = arith.constant 0 : i32
    return %c0_i32, %c0_i32_0 : i32, i32
  }
  func.func @transform_1(%arg0: i32) -> (i32, i32, i32) {
    %c0_i32 = arith.constant 0 : i32
    %c0_i32_0 = arith.constant 0 : i32
    %c0_i32_1 = arith.constant 0 : i32
    return %arg0, %c0_i32, %c0_i32_0 : i32, i32, i32
  }
  func.func @transform_2(%arg0: i32) -> (i32, i32, i32) {
    %c0_i32 = arith.constant 0 : i32
    %c0_i32_0 = arith.constant 0 : i32
    %c0_i32_1 = arith.constant 0 : i32
    %c0_i32_2 = arith.constant 0 : i32
    return %c0_i32, %c0_i32_0, %c0_i32_1 : i32, i32, i32
  }
  func.func @transform_3(%arg0: i32) -> (i32, i32, i32) {
    %c0_i32 = arith.constant 0 : i32
    %c0_i32_0 = arith.constant 0 : i32
    %c0_i32_1 = arith.constant 0 : i32
    %c0_i32_2 = arith.constant 0 : i32
    return %c0_i32, %c0_i32_0, %c0_i32_1 : i32, i32, i32
  }
  func.func @transform_4(%arg0: i32) -> (i32, i32, i32) {
    %c0_i32 = arith.constant 0 : i32
    %c0_i32_0 = arith.constant 0 : i32
    %c0_i32_1 = arith.constant 0 : i32
    return %arg0, %c0_i32, %c0_i32_0 : i32, i32, i32
  }
}

</mosaic_0001>

<llo_original>
// kernel: tpu_custom_call.1
$region0: #{tpu_custom_call.1}
  #allocation0 [shape = 'u32[]', space=smem, size = 0x4, offset = 0x4, fixed_abs, tag = 'smem constant byte address 0x4 - core index']
  #allocation1 [shape = 'u32[144,128]{1,0:T(1,128)}', space=vmem, size = 0x12000, scoped, tag = 'internal scratch']
  %s0 = inlined_call_operand.vmem [shape: s32[2,256], index: 0, kind: input, shape index: {}]
  %s1 = inlined_call_operand.vmem [shape: f32[2,4,256], index: 1, kind: input, shape index: {}]
  %s2 = inlined_call_operand.vmem [shape: f32[9,4,4], index: 2, kind: input, shape index: {}]
  %s3 = inlined_call_operand.vmem [shape: f32[9,4,4], index: 3, kind: input, shape index: {}]
  %s4 = inlined_call_operand.hbm [shape: f32[2,4,256], index: 4, kind: output, shape index: {}]
  %s5 = sld [smem:[#allocation0]]
  $region49: #{tpu_custom_call.1} parent=0
    _
  %s7 = ssub.s32 1, %s5
  %s8 = scalar_select 0, %s7, %s5
  $region1: #{tpu_custom_call.1} parent=0
    #allocation2 [shape = 'u8[8192]{0}', space=vmem, size = 0x2000, scoped, tag = 'output window, operand 0']
    #allocation3 [shape = 's32[2]{0}', space=sflag, size = 0x8, scoped, tag = 'scoped memory for tpu_custom_call.1']
    %9 = vsyncpa [#allocation3], 0
    %s10 = scalar_lea.sflag [#allocation3], 1
    %11 = vsyncpa %s10, 0
    loop: start=0, step=1, limit=4
    $region2: #{tpu_custom_call.1} parent=1 // loop_pre_header
      _
    $region3: #{tpu_custom_call.1} parent=1 // loop_header
      %s13 = sphi 0, %s17
      %p14 = scmp.ge.s32.totalorder %s13, 4
      %s21 = sphi 0, %s21
      %s23 = sphi 0, %s21
      %s24 = sphi 0, %s23
      %s38 = sphi 0, %s24
      %s44 = sphi 0, %s46
      %s47 = sphi 0, %s44
      %s48 = sphi 0, %s47
      %s64 = sphi 0, %s48
      %s68 = sphi 0, %s68
      %s70 = sphi 0, %s68
      %s71 = sphi 0, %s70
      %s85 = sphi 0, %s71
      %s89 = sphi 0, %s89
      %s91 = sphi 0, %s89
      %s92 = sphi 0, %s91
      %s106 = sphi 0, %s92
      %s112 = sphi 0, %s114
      %s115 = sphi 0, %s112
      %s116 = sphi 0, %s115
      %s132 = sphi 0, %s116
    $region4: #{tpu_custom_call.1} parent=1 // loop_header_branch
      %16 = sbr.rel (%p14) target = $region8
    $region5: #{tpu_custom_call.1} parent=1 // loop_body
      %s18 = ssub.s32 %s13, 1
      %s19 = ssub.s32 %s13, 2
      %s20 = sadd.s32 %s13, 1
      %s22 = sadd.s32 %s21, 1
      %p25 = scmp.eq.s32.totalorder %s13, 1
      %p26 = scmp.ne.s32.totalorder %s21, %s23
      %p27 = scmp.eq.s32.totalorder %s13, 0
      %p28 = por %p26, %p27
      %p29 = scmp.ne.s32.totalorder %s21, %s23
      %p30 = scmp.eq.s32.totalorder %s18, 1
      %p31 = por %p29, %p30
      %p32 = scmp.ne.s32.totalorder %s23, %s24
      %p33 = scmp.eq.s32.totalorder %s18, 0
      %p34 = por %p32, %p33
      %p35 = scmp.ne.s32.totalorder %s23, %s24
      %p36 = scmp.eq.s32.totalorder %s19, 1
      %p37 = por %p35, %p36
      %p39 = scmp.ne.s32.totalorder %s24, %s38
      %p40 = scmp.eq.s32.totalorder %s19, 0
      %p41 = por %p39, %p40
      %s42 = ssub.s32 %s13, %s20
      %p43 = scmp.eq.s32.totalorder %s42, 0
      %s45 = sadd.s32 %s44, 1
      %s46 = scalar_select %p43, %s44, %s45
      %p49 = pneg %p43
      %p50 = scmp.eq.s32.totalorder %s13, 1
      %p51 = por %p49, %p50
      %p52 = scmp.ne.s32.totalorder %s44, %s47
      %p53 = scmp.eq.s32.totalorder %s13, 0
      %p54 = por %p52, %p53
      %p55 = scmp.ne.s32.totalorder %s44, %s47
      %p56 = scmp.eq.s32.totalorder %s18, 1
      %p57 = por %p55, %p56
      %p58 = scmp.ne.s32.totalorder %s47, %s48
      %p59 = scmp.eq.s32.totalorder %s18, 0
      %p60 = por %p58, %p59
      %p61 = scmp.ne.s32.totalorder %s47, %s48
      %p62 = scmp.eq.s32.totalorder %s19, 1
      %p63 = por %p61, %p62
      %p65 = scmp.ne.s32.totalorder %s48, %s64
      %p66 = scmp.eq.s32.totalorder %s19, 0
      %p67 = por %p65, %p66
      %s69 = sadd.s32 %s68, 1
      %p72 = scmp.eq.s32.totalorder %s13, 1
      %p73 = scmp.ne.s32.totalorder %s68, %s70
      %p74 = scmp.eq.s32.totalorder %s13, 0
      %p75 = por %p73, %p74
      %p76 = scmp.ne.s32.totalorder %s68, %s70
      %p77 = scmp.eq.s32.totalorder %s18, 1
      %p78 = por %p76, %p77
      %p79 = scmp.ne.s32.totalorder %s70, %s71
      %p80 = scmp.eq.s32.totalorder %s18, 0
      %p81 = por %p79, %p80
      %p82 = scmp.ne.s32.totalorder %s70, %s71
      %p83 = scmp.eq.s32.totalorder %s19, 1
      %p84 = por %p82, %p83
      %p86 = scmp.ne.s32.totalorder %s71, %s85
      %p87 = scmp.eq.s32.totalorder %s19, 0
      %p88 = por %p86, %p87
      %s90 = sadd.s32 %s89, 1
      %p93 = scmp.eq.s32.totalorder %s13, 1
      %p94 = scmp.ne.s32.totalorder %s89, %s91
      %p95 = scmp.eq.s32.totalorder %s13, 0
      %p96 = por %p94, %p95
      %p97 = scmp.ne.s32.totalorder %s89, %s91
      %p98 = scmp.eq.s32.totalorder %s18, 1
      %p99 = por %p97, %p98
      %p100 = scmp.ne.s32.totalorder %s91, %s92
      %p101 = scmp.eq.s32.totalorder %s18, 0
      %p102 = por %p100, %p101
      %p103 = scmp.ne.s32.totalorder %s91, %s92
      %p104 = scmp.eq.s32.totalorder %s19, 1
      %p105 = por %p103, %p104
      %p107 = scmp.ne.s32.totalorder %s92, %s106
      %p108 = scmp.eq.s32.totalorder %s19, 0
      %p109 = por %p107, %p108
      %s110 = ssub.s32 %s13, %s20
      %p111 = scmp.eq.s32.totalorder %s110, 0
      %s113 = sadd.s32 %s112, 1
      %s114 = scalar_select %p111, %s112, %s113
      %p117 = pneg %p111
      %p118 = scmp.eq.s32.totalorder %s13, 1
      %p119 = por %p117, %p118
      %p120 = scmp.ne.s32.totalorder %s112, %s115
      %p121 = scmp.eq.s32.totalorder %s13, 0
      %p122 = por %p120, %p121
      %p123 = scmp.ne.s32.totalorder %s112, %s115
      %p124 = scmp.eq.s32.totalorder %s18, 1
      %p125 = por %p123, %p124
      %p126 = scmp.ne.s32.totalorder %s115, %s116
      %p127 = scmp.eq.s32.totalorder %s18, 0
      %p128 = por %p126, %p127
      %p129 = scmp.ne.s32.totalorder %s115, %s116
      %p130 = scmp.eq.s32.totalorder %s19, 1
      %p131 = por %p129, %p130
      %p133 = scmp.ne.s32.totalorder %s116, %s132
      %p134 = scmp.eq.s32.totalorder %s19, 0
      %p135 = por %p133, %p134
      %p136 = scmp.le.s32.totalorder 1, %s13
      %p137 = scmp.lt.s32.totalorder %s13, 3
      %p138 = pnand %p136, %p137
      %p139 = pneg %p138
      // Predicated region
      $region9: #{tpu_custom_call.1} parent=5 // pred_check
        _
      $region10: #{tpu_custom_call.1} parent=5 // pred_check_branch
        %141 = sbr.rel (%p138) target = $region12
      $region11: #{tpu_custom_call.1} parent=5 // pred_region
        %s142 = ssub.s32 %s13, 1
        // Predicated region
        $region13: #{tpu_custom_call.1} parent=11 // pred_check
          %p143 = pneg %p34
        $region14: #{tpu_custom_call.1} parent=11 // pred_check_branch
          %145 = sbr.rel (%p143) target = $region16
        $region15: #{tpu_custom_call.1} parent=11 // pred_region
          _
        $region16: #{tpu_custom_call.1} parent=11 // pred_fallthru
          _
        // Predicated region
        $region17: #{tpu_custom_call.1} parent=11 // pred_check
          %p146 = pneg %p81
        $region18: #{tpu_custom_call.1} parent=11 // pred_check_branch
          %148 = sbr.rel (%p146) target = $region20
        $region19: #{tpu_custom_call.1} parent=11 // pred_region
          _
        $region20: #{tpu_custom_call.1} parent=11 // pred_fallthru
          _
        // Predicated region
        $region21: #{tpu_custom_call.1} parent=11 // pred_check
          %p149 = pneg %p102
        $region22: #{tpu_custom_call.1} parent=11 // pred_check_branch
          %151 = sbr.rel (%p149) target = $region24
        $region23: #{tpu_custom_call.1} parent=11 // pred_region
          _
        $region24: #{tpu_custom_call.1} parent=11 // pred_fallthru
          _
      $region12: #{tpu_custom_call.1} parent=5 // pred_fallthru
        _
      %p152 = scmp.lt.s32.totalorder %s13, 2
      // Predicated region
      $region25: #{tpu_custom_call.1} parent=5 // pred_check
        %p153 = pneg %p152
      $region26: #{tpu_custom_call.1} parent=5 // pred_check_branch
        %155 = sbr.rel (%p153) target = $region28
      $region27: #{tpu_custom_call.1} parent=5 // pred_region
        // Predicated region
        $region29: #{tpu_custom_call.1} parent=27 // pred_check
          %p156 = pneg %p54
        $region30: #{tpu_custom_call.1} parent=27 // pred_check_branch
          %158 = sbr.rel (%p156) target = $region32
        $region31: #{tpu_custom_call.1} parent=27 // pred_region
          %p159 = scmp.lt.s32.totalorder %s13, 1
          %s160 = scalar_select %p159, %s13, 1
          %s161 = smul.addr %s160, 2
          %s162 = smul.addr %s161, 4
          %s163 = scalar_lea.vmem %s1, %s162
        $region32: #{tpu_custom_call.1} parent=27 // pred_fallthru
          _
      $region28: #{tpu_custom_call.1} parent=5 // pred_fallthru
        _
      %p164 = scmp.le.s32.totalorder 1, %s13
      %p165 = scmp.lt.s32.totalorder %s13, 3
      %p166 = pnand %p164, %p165
      %p167 = pneg %p166
      // Predicated region
      $region33: #{tpu_custom_call.1} parent=5 // pred_check
        _
      $region34: #{tpu_custom_call.1} parent=5 // pred_check_branch
        %169 = sbr.rel (%p166) target = $region36
      $region35: #{tpu_custom_call.1} parent=5 // pred_region
        %s170 = ssub.s32 %s13, 1
        %p171 = pneg %p34
        %p172 = pneg %p31
        %p173 = scmp.lt.s32.totalorder %s18, 1
        %s174 = scalar_select %p173, %s18, 1
        %s175 = smul.addr %s174, 2
        %s176 = smul.addr %s175, 4
        %s177 = scalar_lea.vmem %s1, %s176
        %p178 = pneg %p60
        %p179 = pneg %p57
        %p180 = pneg %p81
        %p181 = pneg %p78
        %p182 = pneg %p102
        %p183 = pneg %p99
        %p184 = pneg %p128
        %p185 = pneg %p125
        %s186 = sand.u32 %s115, 1
        %s187 = scalar_lea.sflag [#allocation3], %s186
        %s188 = sand.u32 %s115, 1
        %s189 = smul.addr %s188, 8
        %s190 = scalar_lea.vmem [#allocation2], %s189
        %p191 = scmp.lt.s32.totalorder %s18, 1
        %s192 = scalar_select %p191, %s18, 1
        %s193 = smul.addr %s192, 2
        %s194 = smul.addr %s193, 4
        %s195 = scalar_lea.vmem %s1, %s194
        %v196 = vld [vmem:[%s195] sm:$0xff]
        %v197 = vld [vmem:[%s0] sm:$0xf]
        %vm198 = vcmp.eq.s32.totalorder %v197, 0
        %vm199 = vcmp.eq.s32.totalorder %v197, 15
        %v201 = vcombine.high %v196, %v196
        %203 = vrot.lane.b32.xlu0 %v196, 16
        %v204 = vpop.permute.xlu0 %203
        %205 = vrot.lane.b32.xlu0 %v201, 16
        %v206 = vpop.permute.xlu0 %205
        %v207 = vlaneseq
        %v208 = vand.u32 %v207, 127
        %vm209 = vcmp.lt.s32.totalorder %v208, 16
        %v210 = vsel %vm209, %v204, %v206
        %v211 = vsel %vm209, %v206, %v204
        %212 = vrot.lane.b32.xlu0 %v196, 112
        %v213 = vpop.permute.xlu0 %212
        %214 = vrot.lane.b32.xlu0 %v201, 112
        %v215 = vpop.permute.xlu0 %214
        %vm216 = vcmp.lt.s32.totalorder %v208, 112
        %v217 = vsel %vm216, %v213, %v215
        %v218 = vsel %vm216, %v215, %v213
        %v219 = vsel %vm198, 1, 0
        %v220 = vlaneseq
        %v221 = vshrl.u32 %v220, 7
        %v222 = vsub.s32 0, %v221
        %v223 = vrot.slane %v219, %v222
        %v224 = vlaneseq
        %v225 = vshrl.u32 %v224, 7
        %v226 = vsub.s32 2, %v225
        %v227 = vrot.slane %v219, %v226
        %v228 = vlaneseq
        %v229 = vshrl.u32 %v228, 7
        %v230 = vsub.s32 0, %v229
        %v231 = vrot.slane %v223, %v230
        %v232 = vlaneseq
        %v233 = vshrl.u32 %v232, 7
        %v234 = vsub.s32 0, %v233
        %v235 = vrot.slane %v227, %v234
        %vm236 = vcmp.eq.s32.totalorder %v231, 1
        %vm237 = vcmp.eq.s32.totalorder %v235, 1
        %v238 = vsel %vm236, %v217, %v211
        %v239 = vsel %vm237, %v218, %v210
        %v240 = vsel %vm199, 1, 0
        %v241 = vlaneseq
        %v242 = vshrl.u32 %v241, 7
        %v243 = vsub.s32 0, %v242
        %v244 = vrot.slane %v240, %v243
        %v245 = vlaneseq
        %v246 = vshrl.u32 %v245, 7
        %v247 = vsub.s32 2, %v246
        %v248 = vrot.slane %v240, %v247
        %v249 = vlaneseq
        %v250 = vshrl.u32 %v249, 7
        %v251 = vsub.s32 0, %v250
        %v252 = vrot.slane %v244, %v251
        %v253 = vlaneseq
        %v254 = vshrl.u32 %v253, 7
        %v255 = vsub.s32 0, %v254
        %v256 = vrot.slane %v248, %v255
        %vm257 = vcmp.eq.s32.totalorder %v252, 1
        %vm258 = vcmp.eq.s32.totalorder %v256, 1
        %v259 = vsel %vm257, %v211, %v217
        %v260 = vsel %vm258, %v210, %v218
        %261 = vrot.lane.b32.xlu0 %v238, 1
        %v262 = vpop.permute.xlu0 %261
        %263 = vrot.lane.b32.xlu0 %v239, 1
        %v264 = vpop.permute.xlu0 %263
        %vm265 = vcmp.lt.s32.totalorder %v208, 1
        %v266 = vsel %vm265, %v262, %v264
        %v267 = vsel %vm265, %v264, %v262
        %268 = vrot.lane.b32.xlu0 %v238, 127
        %v269 = vpop.permute.xlu0 %268
        %270 = vrot.lane.b32.xlu0 %v239, 127
        %v271 = vpop.permute.xlu0 %270
        %vm272 = vcmp.lt.s32.totalorder %v208, 127
        %v273 = vsel %vm272, %v269, %v271
        %v274 = vsel %vm272, %v271, %v269
        %v275 = vlaneseq
        %v276 = vshrl.u32 %v275, 7
        %v277 = vsub.s32 1, %v276
        %v278 = vrot.slane %v219, %v277
        %v279 = vlaneseq
        %v280 = vshrl.u32 %v279, 7
        %v281 = vsub.s32 3, %v280
        %v282 = vrot.slane %v219, %v281
        %v283 = vlaneseq
        %v284 = vshrl.u32 %v283, 7
        %v285 = vsub.s32 1, %v284
        %v286 = vrot.slane %v278, %v285
        %v287 = vlaneseq
        %v288 = vshrl.u32 %v287, 7
        %v289 = vsub.s32 1, %v288
        %v290 = vrot.slane %v282, %v289
        %vm291 = vcmp.eq.s32.totalorder %v286, 1
        %vm292 = vcmp.eq.s32.totalorder %v290, 1
        %v293 = vsel %vm291, %v273, %v267
        %v294 = vsel %vm292, %v274, %v266
        %v295 = vlaneseq
        %v296 = vshrl.u32 %v295, 7
        %v297 = vsub.s32 1, %v296
        %v298 = vrot.slane %v240, %v297
        %v299 = vlaneseq
        %v300 = vshrl.u32 %v299, 7
        %v301 = vsub.s32 3, %v300
        %v302 = vrot.slane %v240, %v301
        %v303 = vlaneseq
        %v304 = vshrl.u32 %v303, 7
        %v305 = vsub.s32 1, %v304
        %v306 = vrot.slane %v298, %v305
        %v307 = vlaneseq
        %v308 = vshrl.u32 %v307, 7
        %v309 = vsub.s32 1, %v308
        %v310 = vrot.slane %v302, %v309
        %vm311 = vcmp.eq.s32.totalorder %v306, 1
        %vm312 = vcmp.eq.s32.totalorder %v310, 1
        %v313 = vsel %vm311, %v267, %v273
        %v314 = vsel %vm312, %v266, %v274
        %v315 = vld [vmem:[%s2] sm:$0xf]
        %s316 = scalar_lea.vmem %s2, 4
        %v317 = vld [vmem:[%s316] sm:$0xf]
        %vm318 = vcmask 31744
        %v320 = vsel %vm318, %v317, 0
        %vm322 = vcmask 1043456
        %v324 = vsel %vm322, %v238, 0
        %v327 = vsel %vm322, %v239, 0
        %329 = vmatprep.subr.mxu0 %v327
        %330 = vmatpush1.msra.mxu0 %v324
        %331 = vmatprep.subr.mxu0 0.0
        %332 = vmatpush1.msra.mxu0 0.0
        %333 = vmatprep.subr.mxu0 0.0
        %334 = vmatpush1.msra.mxu0 0.0
        %335 = vmatprep.subr.mxu0 0.0
        %336 = vmatpush1.msra.mxu0 0.0
        %337 = vmatprep.subr.mxu0 0.0
        %338 = vmatpush1.msra.mxu0 0.0
        %339 = vmatprep.subr.mxu0 0.0
        %340 = vmatpush1.msra.mxu0 0.0
        %341 = vmatprep.subr.mxu0 0.0
        %342 = vmatpush1.msra.mxu0 0.0
        %343 = vmatprep.subr.mxu0 0.0
        %344 = vmatpush1.msra.mxu0 0.0
        %345 = vmatprep.subr.mxu0 0.0
        %346 = vmatpush1.msra.mxu0 0.0
        %347 = vmatprep.subr.mxu0 0.0
        %348 = vmatpush1.msra.mxu0 0.0
        %349 = vmatprep.subr.mxu0 0.0
        %350 = vmatpush1.msra.mxu0 0.0
        %351 = vmatprep.subr.mxu0 0.0
        %352 = vmatpush1.msra.mxu0 0.0
        %353 = vmatprep.subr.mxu0 0.0
        %354 = vmatpush1.msra.mxu0 0.0
        %355 = vmatprep.subr.mxu0 0.0
        %356 = vmatpush1.msra.mxu0 0.0
        %357 = vmatprep.subr.mxu0 0.0
        %358 = vmatpush1.msra.mxu0 0.0
        %359 = vmatprep.subr.mxu0 0.0
        %360 = vmatpush1.msra.mxu0 0.0
        %361 = vmatprep.subr.mxu0 0.0
        %362 = vmatpush1.msra.mxu0 0.0
        %363 = vmatprep.subr.mxu0 0.0
        %364 = vmatpush1.msra.mxu0 0.0
        %365 = vmatprep.subr.mxu0 0.0
        %366 = vmatpush1.msra.mxu0 0.0
        %367 = vmatprep.subr.mxu0 0.0
        %368 = vmatpush1.msra.mxu0 0.0
        %369 = vmatprep.subr.mxu0 0.0
        %370 = vmatpush1.msra.mxu0 0.0
        %371 = vmatprep.subr.mxu0 0.0
        %372 = vmatpush1.msra.mxu0 0.0
        %373 = vmatprep.subr.mxu0 0.0
        %374 = vmatpush1.msra.mxu0 0.0
        %375 = vmatprep.subr.mxu0 0.0
        %376 = vmatpush1.msra.mxu0 0.0
        %377 = vmatprep.subr.mxu0 0.0
        %378 = vmatpush1.msra.mxu0 0.0
        %379 = vmatprep.subr.mxu0 0.0
        %380 = vmatpush1.msra.mxu0 0.0
        %381 = vmatprep.subr.mxu0 0.0
        %382 = vmatpush1.msra.mxu0 0.0
        %383 = vmatprep.subr.mxu0 0.0
        %384 = vmatpush1.msra.mxu0 0.0
        %385 = vmatprep.subr.mxu0 0.0
        %386 = vmatpush1.msra.mxu0 0.0
        %387 = vmatprep.subr.mxu0 0.0
        %388 = vmatpush1.msra.mxu0 0.0
        %389 = vmatprep.subr.mxu0 0.0
        %390 = vmatpush1.msra.mxu0 0.0
        %391 = vmatprep.subr.mxu0 0.0
        %392 = vmatpush1.msra.mxu0 0.0
        %393 = vmatprep.mubr.f32.mxu0 0.0
        %394 = vmatmul.mubr.f32.gmra.mrb[0].mxu0 %v320
        %v395 = vpop.f32.mrb[0].mxu0
        %v396 = vadd.f32 0.0, %v395
        %v397 = vpop.f32.mrb[0].mxu0
        %v398 = vadd.f32 0.0, %v397
        %399 = vdwg.mxu0
        %v401 = vsel %vm318, %v315, 0
        %v404 = vsel %vm322, %v293, 0
        %v407 = vsel %vm322, %v294, 0
        %409 = vmatprep.subr.mxu0 %v407
        %410 = vmatpush1.msra.mxu0 %v404
        %411 = vmatprep.subr.mxu0 0.0
        %412 = vmatpush1.msra.mxu0 0.0
        %413 = vmatprep.subr.mxu0 0.0
        %414 = vmatpush1.msra.mxu0 0.0
        %415 = vmatprep.subr.mxu0 0.0
        %416 = vmatpush1.msra.mxu0 0.0
        %417 = vmatprep.subr.mxu0 0.0
        %418 = vmatpush1.msra.mxu0 0.0
        %419 = vmatprep.subr.mxu0 0.0
        %420 = vmatpush1.msra.mxu0 0.0
        %421 = vmatprep.subr.mxu0 0.0
        %422 = vmatpush1.msra.mxu0 0.0
        %423 = vmatprep.subr.mxu0 0.0
        %424 = vmatpush1.msra.mxu0 0.0
        %425 = vmatprep.subr.mxu0 0.0
        %426 = vmatpush1.msra.mxu0 0.0
        %427 = vmatprep.subr.mxu0 0.0
        %428 = vmatpush1.msra.mxu0 0.0
        %429 = vmatprep.subr.mxu0 0.0
        %430 = vmatpush1.msra.mxu0 0.0
        %431 = vmatprep.subr.mxu0 0.0
        %432 = vmatpush1.msra.mxu0 0.0
        %433 = vmatprep.subr.mxu0 0.0
        %434 = vmatpush1.msra.mxu0 0.0
        %435 = vmatprep.subr.mxu0 0.0
        %436 = vmatpush1.msra.mxu0 0.0
        %437 = vmatprep.subr.mxu0 0.0
        %438 = vmatpush1.msra.mxu0 0.0
        %439 = vmatprep.subr.mxu0 0.0
        %440 = vmatpush1.msra.mxu0 0.0
        %441 = vmatprep.subr.mxu0 0.0
        %442 = vmatpush1.msra.mxu0 0.0
        %443 = vmatprep.subr.mxu0 0.0
        %444 = vmatpush1.msra.mxu0 0.0
        %445 = vmatprep.subr.mxu0 0.0
        %446 = vmatpush1.msra.mxu0 0.0
        %447 = vmatprep.subr.mxu0 0.0
        %448 = vmatpush1.msra.mxu0 0.0
        %449 = vmatprep.subr.mxu0 0.0
        %450 = vmatpush1.msra.mxu0 0.0
        %451 = vmatprep.subr.mxu0 0.0
        %452 = vmatpush1.msra.mxu0 0.0
        %453 = vmatprep.subr.mxu0 0.0
        %454 = vmatpush1.msra.mxu0 0.0
        %455 = vmatprep.subr.mxu0 0.0
        %456 = vmatpush1.msra.mxu0 0.0
        %457 = vmatprep.subr.mxu0 0.0
        %458 = vmatpush1.msra.mxu0 0.0
        %459 = vmatprep.subr.mxu0 0.0
        %460 = vmatpush1.msra.mxu0 0.0
        %461 = vmatprep.subr.mxu0 0.0
        %462 = vmatpush1.msra.mxu0 0.0
        %463 = vmatprep.subr.mxu0 0.0
        %464 = vmatpush1.msra.mxu0 0.0
        %465 = vmatprep.subr.mxu0 0.0
        %466 = vmatpush1.msra.mxu0 0.0
        %467 = vmatprep.subr.mxu0 0.0
        %468 = vmatpush1.msra.mxu0 0.0
        %469 = vmatprep.subr.mxu0 0.0
        %470 = vmatpush1.msra.mxu0 0.0
        %471 = vmatprep.subr.mxu0 0.0
        %472 = vmatpush1.msra.mxu0 0.0
        %473 = vmatprep.mubr.f32.mxu0 0.0
        %474 = vmatmul.mubr.f32.gmra.mrb[0].mxu0 %v401
        %v475 = vpop.f32.mrb[0].mxu0
        %v476 = vadd.f32 %v396, %v475
        %v477 = vpop.f32.mrb[0].mxu0
        %v478 = vadd.f32 %v398, %v477
        %479 = vdwg.mxu0
        %s480 = scalar_lea.vmem %s2, 8
        %v481 = vld [vmem:[%s480] sm:$0xf]
        %v483 = vsel %vm318, %v481, 0
        %v486 = vsel %vm322, %v313, 0
        %v489 = vsel %vm322, %v314, 0
        %491 = vmatprep.subr.mxu0 %v489
        %492 = vmatpush1.msra.mxu0 %v486
        %493 = vmatprep.subr.mxu0 0.0
        %494 = vmatpush1.msra.mxu0 0.0
        %495 = vmatprep.subr.mxu0 0.0
        %496 = vmatpush1.msra.mxu0 0.0
        %497 = vmatprep.subr.mxu0 0.0
        %498 = vmatpush1.msra.mxu0 0.0
        %499 = vmatprep.subr.mxu0 0.0
        %500 = vmatpush1.msra.mxu0 0.0
        %501 = vmatprep.subr.mxu0 0.0
        %502 = vmatpush1.msra.mxu0 0.0
        %503 = vmatprep.subr.mxu0 0.0
        %504 = vmatpush1.msra.mxu0 0.0
        %505 = vmatprep.subr.mxu0 0.0
        %506 = vmatpush1.msra.mxu0 0.0
        %507 = vmatprep.subr.mxu0 0.0
        %508 = vmatpush1.msra.mxu0 0.0
        %509 = vmatprep.subr.mxu0 0.0
        %510 = vmatpush1.msra.mxu0 0.0
        %511 = vmatprep.subr.mxu0 0.0
        %512 = vmatpush1.msra.mxu0 0.0
        %513 = vmatprep.subr.mxu0 0.0
        %514 = vmatpush1.msra.mxu0 0.0
        %515 = vmatprep.subr.mxu0 0.0
        %516 = vmatpush1.msra.mxu0 0.0
        %517 = vmatprep.subr.mxu0 0.0
        %518 = vmatpush1.msra.mxu0 0.0
        %519 = vmatprep.subr.mxu0 0.0
        %520 = vmatpush1.msra.mxu0 0.0
        %521 = vmatprep.subr.mxu0 0.0
        %522 = vmatpush1.msra.mxu0 0.0
        %523 = vmatprep.subr.mxu0 0.0
        %524 = vmatpush1.msra.mxu0 0.0
        %525 = vmatprep.subr.mxu0 0.0
        %526 = vmatpush1.msra.mxu0 0.0
        %527 = vmatprep.subr.mxu0 0.0
        %528 = vmatpush1.msra.mxu0 0.0
        %529 = vmatprep.subr.mxu0 0.0
        %530 = vmatpush1.msra.mxu0 0.0
        %531 = vmatprep.subr.mxu0 0.0
        %532 = vmatpush1.msra.mxu0 0.0
        %533 = vmatprep.subr.mxu0 0.0
        %534 = vmatpush1.msra.mxu0 0.0
        %535 = vmatprep.subr.mxu0 0.0
        %536 = vmatpush1.msra.mxu0 0.0
        %537 = vmatprep.subr.mxu0 0.0
        %538 = vmatpush1.msra.mxu0 0.0
        %539 = vmatprep.subr.mxu0 0.0
        %540 = vmatpush1.msra.mxu0 0.0
        %541 = vmatprep.subr.mxu0 0.0
        %542 = vmatpush1.msra.mxu0 0.0
        %543 = vmatprep.subr.mxu0 0.0
        %544 = vmatpush1.msra.mxu0 0.0
        %545 = vmatprep.subr.mxu0 0.0
        %546 = vmatpush1.msra.mxu0 0.0
        %547 = vmatprep.subr.mxu0 0.0
        %548 = vmatpush1.msra.mxu0 0.0
        %549 = vmatprep.subr.mxu0 0.0
        %550 = vmatpush1.msra.mxu0 0.0
        %551 = vmatprep.subr.mxu0 0.0
        %552 = vmatpush1.msra.mxu0 0.0
        %553 = vmatprep.subr.mxu0 0.0
        %554 = vmatpush1.msra.mxu0 0.0
        %555 = vmatprep.mubr.f32.mxu0 0.0
        %556 = vmatmul.mubr.f32.gmra.mrb[0].mxu0 %v483
        %v557 = vpop.f32.mrb[0].mxu0
        %v558 = vadd.f32 0.0, %v557
        %v559 = vpop.f32.mrb[0].mxu0
        %v560 = vadd.f32 0.0, %v559
        %561 = vdwg.mxu0
        %v562 = vadd.f32 %v476, %v558
        %v563 = vadd.f32 %v478, %v560
        %564 = vrot.lane.b32.xlu0 %v196, 1
        %v565 = vpop.permute.xlu0 %564
        %566 = vrot.lane.b32.xlu0 %v201, 1
        %v567 = vpop.permute.xlu0 %566
        %v568 = vsel %vm265, %v565, %v567
        %v569 = vsel %vm265, %v567, %v565
        %570 = vrot.lane.b32.xlu0 %v196, 127
        %v571 = vpop.permute.xlu0 %570
        %572 = vrot.lane.b32.xlu0 %v201, 127
        %v573 = vpop.permute.xlu0 %572
        %v574 = vsel %vm272, %v571, %v573
        %v575 = vsel %vm272, %v573, %v571
        %v576 = vsel %vm291, %v574, %v569
        %v577 = vsel %vm292, %v575, %v568
        %v578 = vsel %vm311, %v569, %v574
        %v579 = vsel %vm312, %v568, %v575
        %s580 = scalar_lea.vmem %s2, 12
        %v581 = vld [vmem:[%s580] sm:$0xf]
        %v583 = vsel %vm318, %v581, 0
        %v586 = vsel %vm322, %v576, 0
        %v589 = vsel %vm322, %v577, 0
        %591 = vmatprep.subr.mxu0 %v589
        %592 = vmatpush1.msra.mxu0 %v586
        %593 = vmatprep.subr.mxu0 0.0
        %594 = vmatpush1.msra.mxu0 0.0
        %595 = vmatprep.subr.mxu0 0.0
        %596 = vmatpush1.msra.mxu0 0.0
        %597 = vmatprep.subr.mxu0 0.0
        %598 = vmatpush1.msra.mxu0 0.0
        %599 = vmatprep.subr.mxu0 0.0
        %600 = vmatpush1.msra.mxu0 0.0
        %601 = vmatprep.subr.mxu0 0.0
        %602 = vmatpush1.msra.mxu0 0.0
        %603 = vmatprep.subr.mxu0 0.0
        %604 = vmatpush1.msra.mxu0 0.0
        %605 = vmatprep.subr.mxu0 0.0
        %606 = vmatpush1.msra.mxu0 0.0
        %607 = vmatprep.subr.mxu0 0.0
        %608 = vmatpush1.msra.mxu0 0.0
        %609 = vmatprep.subr.mxu0 0.0
        %610 = vmatpush1.msra.mxu0 0.0
        %611 = vmatprep.subr.mxu0 0.0
        %612 = vmatpush1.msra.mxu0 0.0
        %613 = vmatprep.subr.mxu0 0.0
        %614 = vmatpush1.msra.mxu0 0.0
        %615 = vmatprep.subr.mxu0 0.0
        %616 = vmatpush1.msra.mxu0 0.0
        %617 = vmatprep.subr.mxu0 0.0
        %618 = vmatpush1.msra.mxu0 0.0
        %619 = vmatprep.subr.mxu0 0.0
        %620 = vmatpush1.msra.mxu0 0.0
        %621 = vmatprep.subr.mxu0 0.0
        %622 = vmatpush1.msra.mxu0 0.0
        %623 = vmatprep.subr.mxu0 0.0
        %624 = vmatpush1.msra.mxu0 0.0
        %625 = vmatprep.subr.mxu0 0.0
        %626 = vmatpush1.msra.mxu0 0.0
        %627 = vmatprep.subr.mxu0 0.0
        %628 = vmatpush1.msra.mxu0 0.0
        %629 = vmatprep.subr.mxu0 0.0
        %630 = vmatpush1.msra.mxu0 0.0
        %631 = vmatprep.subr.mxu0 0.0
        %632 = vmatpush1.msra.mxu0 0.0
        %633 = vmatprep.subr.mxu0 0.0
        %634 = vmatpush1.msra.mxu0 0.0
        %635 = vmatprep.subr.mxu0 0.0
        %636 = vmatpush1.msra.mxu0 0.0
        %637 = vmatprep.subr.mxu0 0.0
        %638 = vmatpush1.msra.mxu0 0.0
        %639 = vmatprep.subr.mxu0 0.0
        %640 = vmatpush1.msra.mxu0 0.0
        %641 = vmatprep.subr.mxu0 0.0
        %642 = vmatpush1.msra.mxu0 0.0
        %643 = vmatprep.subr.mxu0 0.0
        %644 = vmatpush1.msra.mxu0 0.0
        %645 = vmatprep.subr.mxu0 0.0
        %646 = vmatpush1.msra.mxu0 0.0
        %647 = vmatprep.subr.mxu0 0.0
        %648 = vmatpush1.msra.mxu0 0.0
        %649 = vmatprep.subr.mxu0 0.0
        %650 = vmatpush1.msra.mxu0 0.0
        %651 = vmatprep.subr.mxu0 0.0
        %652 = vmatpush1.msra.mxu0 0.0
        %653 = vmatprep.subr.mxu0 0.0
        %654 = vmatpush1.msra.mxu0 0.0
        %655 = vmatprep.mubr.f32.mxu0 0.0
        %656 = vmatmul.mubr.f32.gmra.mrb[0].mxu0 %v583
        %v657 = vpop.f32.mrb[0].mxu0
        %v658 = vadd.f32 0.0, %v657
        %v659 = vpop.f32.mrb[0].mxu0
        %v660 = vadd.f32 0.0, %v659
        %661 = vdwg.mxu0
        %v662 = vadd.f32 %v562, %v658
        %v663 = vadd.f32 %v563, %v660
        %s664 = scalar_lea.vmem %s2, 16
        %v665 = vld [vmem:[%s664] sm:$0xf]
        %v667 = vsel %vm318, %v665, 0
        %v669 = vsel %vm322, %v196, 0
        %v671 = vsel %vm322, %v201, 0
        %673 = vmatprep.subr.mxu0 %v671
        %674 = vmatpush1.msra.mxu0 %v669
        %675 = vmatprep.subr.mxu0 0.0
        %676 = vmatpush1.msra.mxu0 0.0
        %677 = vmatprep.subr.mxu0 0.0
        %678 = vmatpush1.msra.mxu0 0.0
        %679 = vmatprep.subr.mxu0 0.0
        %680 = vmatpush1.msra.mxu0 0.0
        %681 = vmatprep.subr.mxu0 0.0
        %682 = vmatpush1.msra.mxu0 0.0
        %683 = vmatprep.subr.mxu0 0.0
        %684 = vmatpush1.msra.mxu0 0.0
        %685 = vmatprep.subr.mxu0 0.0
        %686 = vmatpush1.msra.mxu0 0.0
        %687 = vmatprep.subr.mxu0 0.0
        %688 = vmatpush1.msra.mxu0 0.0
        %689 = vmatprep.subr.mxu0 0.0
        %690 = vmatpush1.msra.mxu0 0.0
        %691 = vmatprep.subr.mxu0 0.0
        %692 = vmatpush1.msra.mxu0 0.0
        %693 = vmatprep.subr.mxu0 0.0
        %694 = vmatpush1.msra.mxu0 0.0
        %695 = vmatprep.subr.mxu0 0.0
        %696 = vmatpush1.msra.mxu0 0.0
        %697 = vmatprep.subr.mxu0 0.0
        %698 = vmatpush1.msra.mxu0 0.0
        %699 = vmatprep.subr.mxu0 0.0
        %700 = vmatpush1.msra.mxu0 0.0
        %701 = vmatprep.subr.mxu0 0.0
        %702 = vmatpush1.msra.mxu0 0.0
        %703 = vmatprep.subr.mxu0 0.0
        %704 = vmatpush1.msra.mxu0 0.0
        %705 = vmatprep.subr.mxu0 0.0
        %706 = vmatpush1.msra.mxu0 0.0
        %707 = vmatprep.subr.mxu0 0.0
        %708 = vmatpush1.msra.mxu0 0.0
        %709 = vmatprep.subr.mxu0 0.0
        %710 = vmatpush1.msra.mxu0 0.0
        %711 = vmatprep.subr.mxu0 0.0
        %712 = vmatpush1.msra.mxu0 0.0
        %713 = vmatprep.subr.mxu0 0.0
        %714 = vmatpush1.msra.mxu0 0.0
        %715 = vmatprep.subr.mxu0 0.0
        %716 = vmatpush1.msra.mxu0 0.0
        %717 = vmatprep.subr.mxu0 0.0
        %718 = vmatpush1.msra.mxu0 0.0
        %719 = vmatprep.subr.mxu0 0.0
        %720 = vmatpush1.msra.mxu0 0.0
        %721 = vmatprep.subr.mxu0 0.0
        %722 = vmatpush1.msra.mxu0 0.0
        %723 = vmatprep.subr.mxu0 0.0
        %724 = vmatpush1.msra.mxu0 0.0
        %725 = vmatprep.subr.mxu0 0.0
        %726 = vmatpush1.msra.mxu0 0.0
        %727 = vmatprep.subr.mxu0 0.0
        %728 = vmatpush1.msra.mxu0 0.0
        %729 = vmatprep.subr.mxu0 0.0
        %730 = vmatpush1.msra.mxu0 0.0
        %731 = vmatprep.subr.mxu0 0.0
        %732 = vmatpush1.msra.mxu0 0.0
        %733 = vmatprep.subr.mxu0 0.0
        %734 = vmatpush1.msra.mxu0 0.0
        %735 = vmatprep.subr.mxu0 0.0
        %736 = vmatpush1.msra.mxu0 0.0
        %737 = vmatprep.mubr.f32.mxu0 0.0
        %738 = vmatmul.mubr.f32.gmra.mrb[0].mxu0 %v667
        %v739 = vpop.f32.mrb[0].mxu0
        %v740 = vadd.f32 0.0, %v739
        %v741 = vpop.f32.mrb[0].mxu0
        %v742 = vadd.f32 0.0, %v741
        %743 = vdwg.mxu0
        %v744 = vadd.f32 %v662, %v740
        %v745 = vadd.f32 %v663, %v742
        %s746 = scalar_lea.vmem %s2, 20
        %v747 = vld [vmem:[%s746] sm:$0xf]
        %v749 = vsel %vm318, %v747, 0
        %v752 = vsel %vm322, %v578, 0
        %v755 = vsel %vm322, %v579, 0
        %757 = vmatprep.subr.mxu0 %v755
        %758 = vmatpush1.msra.mxu0 %v752
        %759 = vmatprep.subr.mxu0 0.0
        %760 = vmatpush1.msra.mxu0 0.0
        %761 = vmatprep.subr.mxu0 0.0
        %762 = vmatpush1.msra.mxu0 0.0
        %763 = vmatprep.subr.mxu0 0.0
        %764 = vmatpush1.msra.mxu0 0.0
        %765 = vmatprep.subr.mxu0 0.0
        %766 = vmatpush1.msra.mxu0 0.0
        %767 = vmatprep.subr.mxu0 0.0
        %768 = vmatpush1.msra.mxu0 0.0
        %769 = vmatprep.subr.mxu0 0.0
        %770 = vmatpush1.msra.mxu0 0.0
        %771 = vmatprep.subr.mxu0 0.0
        %772 = vmatpush1.msra.mxu0 0.0
        %773 = vmatprep.subr.mxu0 0.0
        %774 = vmatpush1.msra.mxu0 0.0
        %775 = vmatprep.subr.mxu0 0.0
        %776 = vmatpush1.msra.mxu0 0.0
        %777 = vmatprep.subr.mxu0 0.0
        %778 = vmatpush1.msra.mxu0 0.0
        %779 = vmatprep.subr.mxu0 0.0
        %780 = vmatpush1.msra.mxu0 0.0
        %781 = vmatprep.subr.mxu0 0.0
        %782 = vmatpush1.msra.mxu0 0.0
        %783 = vmatprep.subr.mxu0 0.0
        %784 = vmatpush1.msra.mxu0 0.0
        %785 = vmatprep.subr.mxu0 0.0
        %786 = vmatpush1.msra.mxu0 0.0
        %787 = vmatprep.subr.mxu0 0.0
        %788 = vmatpush1.msra.mxu0 0.0
        %789 = vmatprep.subr.mxu0 0.0
        %790 = vmatpush1.msra.mxu0 0.0
        %791 = vmatprep.subr.mxu0 0.0
        %792 = vmatpush1.msra.mxu0 0.0
        %793 = vmatprep.subr.mxu0 0.0
        %794 = vmatpush1.msra.mxu0 0.0
        %795 = vmatprep.subr.mxu0 0.0
        %796 = vmatpush1.msra.mxu0 0.0
        %797 = vmatprep.subr.mxu0 0.0
        %798 = vmatpush1.msra.mxu0 0.0
        %799 = vmatprep.subr.mxu0 0.0
        %800 = vmatpush1.msra.mxu0 0.0
        %801 = vmatprep.subr.mxu0 0.0
        %802 = vmatpush1.msra.mxu0 0.0
        %803 = vmatprep.subr.mxu0 0.0
        %804 = vmatpush1.msra.mxu0 0.0
        %805 = vmatprep.subr.mxu0 0.0
        %806 = vmatpush1.msra.mxu0 0.0
        %807 = vmatprep.subr.mxu0 0.0
        %808 = vmatpush1.msra.mxu0 0.0
        %809 = vmatprep.subr.mxu0 0.0
        %810 = vmatpush1.msra.mxu0 0.0
        %811 = vmatprep.subr.mxu0 0.0
        %812 = vmatpush1.msra.mxu0 0.0
        %813 = vmatprep.subr.mxu0 0.0
        %814 = vmatpush1.msra.mxu0 0.0
        %815 = vmatprep.subr.mxu0 0.0
        %816 = vmatpush1.msra.mxu0 0.0
        %817 = vmatprep.subr.mxu0 0.0
        %818 = vmatpush1.msra.mxu0 0.0
        %819 = vmatprep.subr.mxu0 0.0
        %820 = vmatpush1.msra.mxu0 0.0
        %821 = vmatprep.mubr.f32.mxu0 0.0
        %822 = vmatmul.mubr.f32.gmra.mrb[0].mxu0 %v749
        %v823 = vpop.f32.mrb[0].mxu0
        %v824 = vadd.f32 0.0, %v823
        %v825 = vpop.f32.mrb[0].mxu0
        %v826 = vadd.f32 0.0, %v825
        %827 = vdwg.mxu0
        %v828 = vadd.f32 %v744, %v824
        %v829 = vadd.f32 %v745, %v826
        %830 = vrot.lane.b32.xlu0 %v259, 1
        %v831 = vpop.permute.xlu0 %830
        %832 = vrot.lane.b32.xlu0 %v260, 1
        %v833 = vpop.permute.xlu0 %832
        %v834 = vsel %vm265, %v831, %v833
        %v835 = vsel %vm265, %v833, %v831
        %836 = vrot.lane.b32.xlu0 %v259, 127
        %v837 = vpop.permute.xlu0 %836
        %838 = vrot.lane.b32.xlu0 %v260, 127
        %v839 = vpop.permute.xlu0 %838
        %v840 = vsel %vm272, %v837, %v839
        %v841 = vsel %vm272, %v839, %v837
        %v842 = vsel %vm291, %v840, %v835
        %v843 = vsel %vm292, %v841, %v834
        %v844 = vsel %vm311, %v835, %v840
        %v845 = vsel %vm312, %v834, %v841
        %s846 = scalar_lea.vmem %s2, 24
        %v847 = vld [vmem:[%s846] sm:$0xf]
        %v849 = vsel %vm318, %v847, 0
        %v852 = vsel %vm322, %v842, 0
        %v855 = vsel %vm322, %v843, 0
        %857 = vmatprep.subr.mxu0 %v855
        %858 = vmatpush1.msra.mxu0 %v852
        %859 = vmatprep.subr.mxu0 0.0
        %860 = vmatpush1.msra.mxu0 0.0
        %861 = vmatprep.subr.mxu0 0.0
        %862 = vmatpush1.msra.mxu0 0.0
        %863 = vmatprep.subr.mxu0 0.0
        %864 = vmatpush1.msra.mxu0 0.0
        %865 = vmatprep.subr.mxu0 0.0
        %866 = vmatpush1.msra.mxu0 0.0
        %867 = vmatprep.subr.mxu0 0.0
        %868 = vmatpush1.msra.mxu0 0.0
        %869 = vmatprep.subr.mxu0 0.0
        %870 = vmatpush1.msra.mxu0 0.0
        %871 = vmatprep.subr.mxu0 0.0
        %872 = vmatpush1.msra.mxu0 0.0
        %873 = vmatprep.subr.mxu0 0.0
        %874 = vmatpush1.msra.mxu0 0.0
        %875 = vmatprep.subr.mxu0 0.0
        %876 = vmatpush1.msra.mxu0 0.0
        %877 = vmatprep.subr.mxu0 0.0
        %878 = vmatpush1.msra.mxu0 0.0
        %879 = vmatprep.subr.mxu0 0.0
        %880 = vmatpush1.msra.mxu0 0.0
        %881 = vmatprep.subr.mxu0 0.0
        %882 = vmatpush1.msra.mxu0 0.0
        %883 = vmatprep.subr.mxu0 0.0
        %884 = vmatpush1.msra.mxu0 0.0
        %885 = vmatprep.subr.mxu0 0.0
        %886 = vmatpush1.msra.mxu0 0.0
        %887 = vmatprep.subr.mxu0 0.0
        %888 = vmatpush1.msra.mxu0 0.0
        %889 = vmatprep.subr.mxu0 0.0
        %890 = vmatpush1.msra.mxu0 0.0
        %891 = vmatprep.subr.mxu0 0.0
        %892 = vmatpush1.msra.mxu0 0.0
        %893 = vmatprep.subr.mxu0 0.0
        %894 = vmatpush1.msra.mxu0 0.0
        %895 = vmatprep.subr.mxu0 0.0
        %896 = vmatpush1.msra.mxu0 0.0
        %897 = vmatprep.subr.mxu0 0.0
        %898 = vmatpush1.msra.mxu0 0.0
        %899 = vmatprep.subr.mxu0 0.0
        %900 = vmatpush1.msra.mxu0 0.0
        %901 = vmatprep.subr.mxu0 0.0
        %902 = vmatpush1.msra.mxu0 0.0
        %903 = vmatprep.subr.mxu0 0.0
        %904 = vmatpush1.msra.mxu0 0.0
        %905 = vmatprep.subr.mxu0 0.0
        %906 = vmatpush1.msra.mxu0 0.0
        %907 = vmatprep.subr.mxu0 0.0
        %908 = vmatpush1.msra.mxu0 0.0
        %909 = vmatprep.subr.mxu0 0.0
        %910 = vmatpush1.msra.mxu0 0.0
        %911 = vmatprep.subr.mxu0 0.0
        %912 = vmatpush1.msra.mxu0 0.0
        %913 = vmatprep.subr.mxu0 0.0
        %914 = vmatpush1.msra.mxu0 0.0
        %915 = vmatprep.subr.mxu0 0.0
        %916 = vmatpush1.msra.mxu0 0.0
        %917 = vmatprep.subr.mxu0 0.0
        %918 = vmatpush1.msra.mxu0 0.0
        %919 = vmatprep.subr.mxu0 0.0
        %920 = vmatpush1.msra.mxu0 0.0
        %921 = vmatprep.mubr.f32.mxu0 0.0
        %922 = vmatmul.mubr.f32.gmra.mrb[0].mxu0 %v849
        %v923 = vpop.f32.mrb[0].mxu0
        %v924 = vadd.f32 0.0, %v923
        %v925 = vpop.f32.mrb[0].mxu0
        %v926 = vadd.f32 0.0, %v925
        %927 = vdwg.mxu0
        %v928 = vadd.f32 %v828, %v924
        %v929 = vadd.f32 %v829, %v926
        %s930 = scalar_lea.vmem %s2, 28
        %v931 = vld [vmem:[%s930] sm:$0xf]
        %v933 = vsel %vm318, %v931, 0
        %v936 = vsel %vm322, %v259, 0
        %v939 = vsel %vm322, %v260, 0
        %941 = vmatprep.subr.mxu0 %v939
        %942 = vmatpush1.msra.mxu0 %v936
        %943 = vmatprep.subr.mxu0 0.0
        %944 = vmatpush1.msra.mxu0 0.0
        %945 = vmatprep.subr.mxu0 0.0
        %946 = vmatpush1.msra.mxu0 0.0
        %947 = vmatprep.subr.mxu0 0.0
        %948 = vmatpush1.msra.mxu0 0.0
        %949 = vmatprep.subr.mxu0 0.0
        %950 = vmatpush1.msra.mxu0 0.0
        %951 = vmatprep.subr.mxu0 0.0
        %952 = vmatpush1.msra.mxu0 0.0
        %953 = vmatprep.subr.mxu0 0.0
        %954 = vmatpush1.msra.mxu0 0.0
        %955 = vmatprep.subr.mxu0 0.0
        %956 = vmatpush1.msra.mxu0 0.0
        %957 = vmatprep.subr.mxu0 0.0
        %958 = vmatpush1.msra.mxu0 0.0
        %959 = vmatprep.subr.mxu0 0.0
        %960 = vmatpush1.msra.mxu0 0.0
        %961 = vmatprep.subr.mxu0 0.0
        %962 = vmatpush1.msra.mxu0 0.0
        %963 = vmatprep.subr.mxu0 0.0
        %964 = vmatpush1.msra.mxu0 0.0
        %965 = vmatprep.subr.mxu0 0.0
        %966 = vmatpush1.msra.mxu0 0.0
        %967 = vmatprep.subr.mxu0 0.0
        %968 = vmatpush1.msra.mxu0 0.0
        %969 = vmatprep.subr.mxu0 0.0
        %970 = vmatpush1.msra.mxu0 0.0
        %971 = vmatprep.subr.mxu0 0.0
        %972 = vmatpush1.msra.mxu0 0.0
        %973 = vmatprep.subr.mxu0 0.0
        %974 = vmatpush1.msra.mxu0 0.0
        %975 = vmatprep.subr.mxu0 0.0
        %976 = vmatpush1.msra.mxu0 0.0
        %977 = vmatprep.subr.mxu0 0.0
        %978 = vmatpush1.msra.mxu0 0.0
        %979 = vmatprep.subr.mxu0 0.0
        %980 = vmatpush1.msra.mxu0 0.0
        %981 = vmatprep.subr.mxu0 0.0
        %982 = vmatpush1.msra.mxu0 0.0
        %983 = vmatprep.subr.mxu0 0.0
        %984 = vmatpush1.msra.mxu0 0.0
        %985 = vmatprep.subr.mxu0 0.0
        %986 = vmatpush1.msra.mxu0 0.0
        %987 = vmatprep.subr.mxu0 0.0
        %988 = vmatpush1.msra.mxu0 0.0
        %989 = vmatprep.subr.mxu0 0.0
        %990 = vmatpush1.msra.mxu0 0.0
        %991 = vmatprep.subr.mxu0 0.0
        %992 = vmatpush1.msra.mxu0 0.0
        %993 = vmatprep.subr.mxu0 0.0
        %994 = vmatpush1.msra.mxu0 0.0
        %995 = vmatprep.subr.mxu0 0.0
        %996 = vmatpush1.msra.mxu0 0.0
        %997 = vmatprep.subr.mxu0 0.0
        %998 = vmatpush1.msra.mxu0 0.0
        %999 = vmatprep.subr.mxu0 0.0
        %1000 = vmatpush1.msra.mxu0 0.0
        %1001 = vmatprep.subr.mxu0 0.0
        %1002 = vmatpush1.msra.mxu0 0.0
        %1003 = vmatprep.subr.mxu0 0.0
        %1004 = vmatpush1.msra.mxu0 0.0
        %1005 = vmatprep.mubr.f32.mxu0 0.0
        %1006 = vmatmul.mubr.f32.gmra.mrb[0].mxu0 %v933
        %v1007 = vpop.f32.mrb[0].mxu0
        %v1008 = vadd.f32 0.0, %v1007
        %v1009 = vpop.f32.mrb[0].mxu0
        %v1010 = vadd.f32 0.0, %v1009
        %1011 = vdwg.mxu0
        %v1012 = vadd.f32 %v928, %v1008
        %v1013 = vadd.f32 %v929, %v1010
        %s1014 = scalar_lea.vmem %s2, 32
        %v1015 = vld [vmem:[%s1014] sm:$0xf]
        %v1017 = vsel %vm318, %v1015, 0
        %v1020 = vsel %vm322, %v844, 0
        %v1023 = vsel %vm322, %v845, 0
        %1025 = vmatprep.subr.mxu0 %v1023
        %1026 = vmatpush1.msra.mxu0 %v1020
        %1027 = vmatprep.subr.mxu0 0.0
        %1028 = vmatpush1.msra.mxu0 0.0
        %1029 = vmatprep.subr.mxu0 0.0
        %1030 = vmatpush1.msra.mxu0 0.0
        %1031 = vmatprep.subr.mxu0 0.0
        %1032 = vmatpush1.msra.mxu0 0.0
        %1033 = vmatprep.subr.mxu0 0.0
        %1034 = vmatpush1.msra.mxu0 0.0
        %1035 = vmatprep.subr.mxu0 0.0
        %1036 = vmatpush1.msra.mxu0 0.0
        %1037 = vmatprep.subr.mxu0 0.0
        %1038 = vmatpush1.msra.mxu0 0.0
        %1039 = vmatprep.subr.mxu0 0.0
        %1040 = vmatpush1.msra.mxu0 0.0
        %1041 = vmatprep.subr.mxu0 0.0
        %1042 = vmatpush1.msra.mxu0 0.0
        %1043 = vmatprep.subr.mxu0 0.0
        %1044 = vmatpush1.msra.mxu0 0.0
        %1045 = vmatprep.subr.mxu0 0.0
        %1046 = vmatpush1.msra.mxu0 0.0
        %1047 = vmatprep.subr.mxu0 0.0
        %1048 = vmatpush1.msra.mxu0 0.0
        %1049 = vmatprep.subr.mxu0 0.0
        %1050 = vmatpush1.msra.mxu0 0.0
        %1051 = vmatprep.subr.mxu0 0.0
        %1052 = vmatpush1.msra.mxu0 0.0
        %1053 = vmatprep.subr.mxu0 0.0
        %1054 = vmatpush1.msra.mxu0 0.0
        %1055 = vmatprep.subr.mxu0 0.0
        %1056 = vmatpush1.msra.mxu0 0.0
        %1057 = vmatprep.subr.mxu0 0.0
        %1058 = vmatpush1.msra.mxu0 0.0
        %1059 = vmatprep.subr.mxu0 0.0
        %1060 = vmatpush1.msra.mxu0 0.0
        %1061 = vmatprep.subr.mxu0 0.0
        %1062 = vmatpush1.msra.mxu0 0.0
        %1063 = vmatprep.subr.mxu0 0.0
        %1064 = vmatpush1.msra.mxu0 0.0
        %1065 = vmatprep.subr.mxu0 0.0
        %1066 = vmatpush1.msra.mxu0 0.0
        %1067 = vmatprep.subr.mxu0 0.0
        %1068 = vmatpush1.msra.mxu0 0.0
        %1069 = vmatprep.subr.mxu0 0.0
        %1070 = vmatpush1.msra.mxu0 0.0
        %1071 = vmatprep.subr.mxu0 0.0
        %1072 = vmatpush1.msra.mxu0 0.0
        %1073 = vmatprep.subr.mxu0 0.0
        %1074 = vmatpush1.msra.mxu0 0.0
        %1075 = vmatprep.subr.mxu0 0.0
        %1076 = vmatpush1.msra.mxu0 0.0
        %1077 = vmatprep.subr.mxu0 0.0
        %1078 = vmatpush1.msra.mxu0 0.0
        %1079 = vmatprep.subr.mxu0 0.0
        %1080 = vmatpush1.msra.mxu0 0.0
        %1081 = vmatprep.subr.mxu0 0.0
        %1082 = vmatpush1.msra.mxu0 0.0
        %1083 = vmatprep.subr.mxu0 0.0
        %1084 = vmatpush1.msra.mxu0 0.0
        %1085 = vmatprep.subr.mxu0 0.0
        %1086 = vmatpush1.msra.mxu0 0.0
        %1087 = vmatprep.subr.mxu0 0.0
        %1088 = vmatpush1.msra.mxu0 0.0
        %1089 = vmatprep.mubr.f32.mxu0 0.0
        %1090 = vmatmul.mubr.f32.gmra.mrb[0].mxu0 %v1017
        %v1091 = vpop.f32.mrb[0].mxu0
        %v1092 = vadd.f32 0.0, %v1091
        %v1093 = vpop.f32.mrb[0].mxu0
        %v1094 = vadd.f32 0.0, %v1093
        %1095 = vdwg.mxu0
        %v1096 = vadd.f32 %v1012, %v1092
        %v1097 = vadd.f32 %v1013, %v1094
        %v1098 = vsel %vm322, %v1096, 0.0
        %v1099 = vsel %vm322, %v1097, 0.0
        %v1100 = vadd.f32 %v1098, %v1099
        %1101 = vadd.xlane.f32.xlu0 %v1100
        %v1102 = vpop.xlane.xlu0 %1101
        %v1103 = vrcp.pop 256.0
        %v1104 = vmul.f32 %v1102, %v1103
        %v1105 = vsub.f32 %v1096, %v1104
        %v1106 = vsub.f32 %v1097, %v1104
        %v1107 = vmul.f32 %v1105, %v1105
        %v1108 = vmul.f32 %v1106, %v1106
        %v1109 = vsel %vm322, %v1107, 0.0
        %v1110 = vsel %vm322, %v1108, 0.0
        %v1111 = vadd.f32 %v1109, %v1110
        %1112 = vadd.xlane.f32.xlu0 %v1111
        %v1113 = vpop.xlane.xlu0 %1112
        %v1114 = vmul.f32 %v1113, %v1103
        %v1115 = vadd.f32 %v1114, 1e-05
        %v1116 = vrsqrt.pop %v1115
        %v1117 = vmul.f32 %v1105, %v1116
        %v1118 = vmul.f32 %v1106, %v1116
        %v1119 = vmax.f32 %v1117, 0.0
        %v1120 = vmax.f32 %v1118, 0.0
        %1121 = vrot.lane.b32.xlu0 %v1119, 16
        %v1122 = vpop.permute.xlu0 %1121
        %1123 = vrot.lane.b32.xlu0 %v1120, 16
        %v1124 = vpop.permute.xlu0 %1123
        %v1125 = vsel %vm209, %v1122, %v1124
        %v1126 = vsel %vm209, %v1124, %v1122
        %1127 = vrot.lane.b32.xlu0 %v1119, 112
        %v1128 = vpop.permute.xlu0 %1127
        %1129 = vrot.lane.b32.xlu0 %v1120, 112
        %v1130 = vpop.permute.xlu0 %1129
        %v1131 = vsel %vm216, %v1128, %v1130
        %v1132 = vsel %vm216, %v1130, %v1128
        %v1133 = vsel %vm236, %v1131, %v1126
        %v1134 = vsel %vm237, %v1132, %v1125
        %v1135 = vsel %vm257, %v1126, %v1131
        %v1136 = vsel %vm258, %v1125, %v1132
        %1137 = vrot.lane.b32.xlu0 %v1133, 1
        %v1138 = vpop.permute.xlu0 %1137
        %1139 = vrot.lane.b32.xlu0 %v1134, 1
        %v1140 = vpop.permute.xlu0 %1139
        %v1141 = vsel %vm265, %v1138, %v1140
        %v1142 = vsel %vm265, %v1140, %v1138
        %1143 = vrot.lane.b32.xlu0 %v1133, 127
        %v1144 = vpop.permute.xlu0 %1143
        %1145 = vrot.lane.b32.xlu0 %v1134, 127
        %v1146 = vpop.permute.xlu0 %1145
        %v1147 = vsel %vm272, %v1144, %v1146
        %v1148 = vsel %vm272, %v1146, %v1144
        %v1149 = vsel %vm291, %v1147, %v1142
        %v1150 = vsel %vm292, %v1148, %v1141
        %v1151 = vsel %vm311, %v1142, %v1147
        %v1152 = vsel %vm312, %v1141, %v1148
        %v1153 = vld [vmem:[%s3] sm:$0xf]
        %s1154 = scalar_lea.vmem %s3, 4
        %v1155 = vld [vmem:[%s1154] sm:$0xf]
        %v1157 = vsel %vm318, %v1155, 0
        %v1160 = vsel %vm322, %v1133, 0
        %v1163 = vsel %vm322, %v1134, 0
        %1165 = vmatprep.subr.mxu0 %v1163
        %1166 = vmatpush1.msra.mxu0 %v1160
        %1167 = vmatprep.subr.mxu0 0.0
        %1168 = vmatpush1.msra.mxu0 0.0
        %1169 = vmatprep.subr.mxu0 0.0
        %1170 = vmatpush1.msra.mxu0 0.0
        %1171 = vmatprep.subr.mxu0 0.0
        %1172 = vmatpush1.msra.mxu0 0.0
        %1173 = vmatprep.subr.mxu0 0.0
        %1174 = vmatpush1.msra.mxu0 0.0
        %1175 = vmatprep.subr.mxu0 0.0
        %1176 = vmatpush1.msra.mxu0 0.0
        %1177 = vmatprep.subr.mxu0 0.0
        %1178 = vmatpush1.msra.mxu0 0.0
        %1179 = vmatprep.subr.mxu0 0.0
        %1180 = vmatpush1.msra.mxu0 0.0
        %1181 = vmatprep.subr.mxu0 0.0
        %1182 = vmatpush1.msra.mxu0 0.0
        %1183 = vmatprep.subr.mxu0 0.0
        %1184 = vmatpush1.msra.mxu0 0.0
        %1185 = vmatprep.subr.mxu0 0.0
        %1186 = vmatpush1.msra.mxu0 0.0
        %1187 = vmatprep.subr.mxu0 0.0
        %1188 = vmatpush1.msra.mxu0 0.0
        %1189 = vmatprep.subr.mxu0 0.0
        %1190 = vmatpush1.msra.mxu0 0.0
        %1191 = vmatprep.subr.mxu0 0.0
        %1192 = vmatpush1.msra.mxu0 0.0
        %1193 = vmatprep.subr.mxu0 0.0
        %1194 = vmatpush1.msra.mxu0 0.0
        %1195 = vmatprep.subr.mxu0 0.0
        %1196 = vmatpush1.msra.mxu0 0.0
        %1197 = vmatprep.subr.mxu0 0.0
        %1198 = vmatpush1.msra.mxu0 0.0
        %1199 = vmatprep.subr.mxu0 0.0
        %1200 = vmatpush1.msra.mxu0 0.0
        %1201 = vmatprep.subr.mxu0 0.0
        %1202 = vmatpush1.msra.mxu0 0.0
        %1203 = vmatprep.subr.mxu0 0.0
        %1204 = vmatpush1.msra.mxu0 0.0
        %1205 = vmatprep.subr.mxu0 0.0
        %1206 = vmatpush1.msra.mxu0 0.0
        %1207 = vmatprep.subr.mxu0 0.0
        %1208 = vmatpush1.msra.mxu0 0.0
        %1209 = vmatprep.subr.mxu0 0.0
        %1210 = vmatpush1.msra.mxu0 0.0
        %1211 = vmatprep.subr.mxu0 0.0
        %1212 = vmatpush1.msra.mxu0 0.0
        %1213 = vmatprep.subr.mxu0 0.0
        %1214 = vmatpush1.msra.mxu0 0.0
        %1215 = vmatprep.subr.mxu0 0.0
        %1216 = vmatpush1.msra.mxu0 0.0
        %1217 = vmatprep.subr.mxu0 0.0
        %1218 = vmatpush1.msra.mxu0 0.0
        %1219 = vmatprep.subr.mxu0 0.0
        %1220 = vmatpush1.msra.mxu0 0.0
        %1221 = vmatprep.subr.mxu0 0.0
        %1222 = vmatpush1.msra.mxu0 0.0
        %1223 = vmatprep.subr.mxu0 0.0
        %1224 = vmatpush1.msra.mxu0 0.0
        %1225 = vmatprep.subr.mxu0 0.0
        %1226 = vmatpush1.msra.mxu0 0.0
        %1227 = vmatprep.subr.mxu0 0.0
        %1228 = vmatpush1.msra.mxu0 0.0
        %1229 = vmatprep.mubr.f32.mxu0 0.0
        %1230 = vmatmul.mubr.f32.gmra.mrb[0].mxu0 %v1157
        %v1231 = vpop.f32.mrb[0].mxu0
        %v1232 = vadd.f32 0.0, %v1231
        %v1233 = vpop.f32.mrb[0].mxu0
        %v1234 = vadd.f32 0.0, %v1233
        %1235 = vdwg.mxu0
        %v1237 = vsel %vm318, %v1153, 0
        %v1240 = vsel %vm322, %v1149, 0
        %v1243 = vsel %vm322, %v1150, 0
        %1245 = vmatprep.subr.mxu0 %v1243
        %1246 = vmatpush1.msra.mxu0 %v1240
        %1247 = vmatprep.subr.mxu0 0.0
        %1248 = vmatpush1.msra.mxu0 0.0
        %1249 = vmatprep.subr.mxu0 0.0
        %1250 = vmatpush1.msra.mxu0 0.0
        %1251 = vmatprep.subr.mxu0 0.0
        %1252 = vmatpush1.msra.mxu0 0.0
        %1253 = vmatprep.subr.mxu0 0.0
        %1254 = vmatpush1.msra.mxu0 0.0
        %1255 = vmatprep.subr.mxu0 0.0
        %1256 = vmatpush1.msra.mxu0 0.0
        %1257 = vmatprep.subr.mxu0 0.0
        %1258 = vmatpush1.msra.mxu0 0.0
        %1259 = vmatprep.subr.mxu0 0.0
        %1260 = vmatpush1.msra.mxu0 0.0
        %1261 = vmatprep.subr.mxu0 0.0
        %1262 = vmatpush1.msra.mxu0 0.0
        %1263 = vmatprep.subr.mxu0 0.0
        %1264 = vmatpush1.msra.mxu0 0.0
        %1265 = vmatprep.subr.mxu0 0.0
        %1266 = vmatpush1.msra.mxu0 0.0
        %1267 = vmatprep.subr.mxu0 0.0
        %1268 = vmatpush1.msra.mxu0 0.0
        %1269 = vmatprep.subr.mxu0 0.0
        %1270 = vmatpush1.msra.mxu0 0.0
        %1271 = vmatprep.subr.mxu0 0.0
        %1272 = vmatpush1.msra.mxu0 0.0
        %1273 = vmatprep.subr.mxu0 0.0
        %1274 = vmatpush1.msra.mxu0 0.0
        %1275 = vmatprep.subr.mxu0 0.0
        %1276 = vmatpush1.msra.mxu0 0.0
        %1277 = vmatprep.subr.mxu0 0.0
        %1278 = vmatpush1.msra.mxu0 0.0
        %1279 = vmatprep.subr.mxu0 0.0
        %1280 = vmatpush1.msra.mxu0 0.0
        %1281 = vmatprep.subr.mxu0 0.0
        %1282 = vmatpush1.msra.mxu0 0.0
        %1283 = vmatprep.subr.mxu0 0.0
        %1284 = vmatpush1.msra.mxu0 0.0
        %1285 = vmatprep.subr.mxu0 0.0
        %1286 = vmatpush1.msra.mxu0 0.0
        %1287 = vmatprep.subr.mxu0 0.0
        %1288 = vmatpush1.msra.mxu0 0.0
        %1289 = vmatprep.subr.mxu0 0.0
        %1290 = vmatpush1.msra.mxu0 0.0
        %1291 = vmatprep.subr.mxu0 0.0
        %1292 = vmatpush1.msra.mxu0 0.0
        %1293 = vmatprep.subr.mxu0 0.0
        %1294 = vmatpush1.msra.mxu0 0.0
        %1295 = vmatprep.subr.mxu0 0.0
        %1296 = vmatpush1.msra.mxu0 0.0
        %1297 = vmatprep.subr.mxu0 0.0
        %1298 = vmatpush1.msra.mxu0 0.0
        %1299 = vmatprep.subr.mxu0 0.0
        %1300 = vmatpush1.msra.mxu0 0.0
        %1301 = vmatprep.subr.mxu0 0.0
        %1302 = vmatpush1.msra.mxu0 0.0
        %1303 = vmatprep.subr.mxu0 0.0
        %1304 = vmatpush1.msra.mxu0 0.0
        %1305 = vmatprep.subr.mxu0 0.0
        %1306 = vmatpush1.msra.mxu0 0.0
        %1307 = vmatprep.subr.mxu0 0.0
        %1308 = vmatpush1.msra.mxu0 0.0
        %1309 = vmatprep.mubr.f32.mxu0 0.0
        %1310 = vmatmul.mubr.f32.gmra.mrb[0].mxu0 %v1237
        %v1311 = vpop.f32.mrb[0].mxu0
        %v1312 = vadd.f32 %v1232, %v1311
        %v1313 = vpop.f32.mrb[0].mxu0
        %v1314 = vadd.f32 %v1234, %v1313
        %1315 = vdwg.mxu0
        %s1316 = scalar_lea.vmem %s3, 8
        %v1317 = vld [vmem:[%s1316] sm:$0xf]
        %v1319 = vsel %vm318, %v1317, 0
        %v1322 = vsel %vm322, %v1151, 0
        %v1325 = vsel %vm322, %v1152, 0
        %1327 = vmatprep.subr.mxu0 %v1325
        %1328 = vmatpush1.msra.mxu0 %v1322
        %1329 = vmatprep.subr.mxu0 0.0
        %1330 = vmatpush1.msra.mxu0 0.0
        %1331 = vmatprep.subr.mxu0 0.0
        %1332 = vmatpush1.msra.mxu0 0.0
        %1333 = vmatprep.subr.mxu0 0.0
        %1334 = vmatpush1.msra.mxu0 0.0
        %1335 = vmatprep.subr.mxu0 0.0
        %1336 = vmatpush1.msra.mxu0 0.0
        %1337 = vmatprep.subr.mxu0 0.0
        %1338 = vmatpush1.msra.mxu0 0.0
        %1339 = vmatprep.subr.mxu0 0.0
        %1340 = vmatpush1.msra.mxu0 0.0
        %1341 = vmatprep.subr.mxu0 0.0
        %1342 = vmatpush1.msra.mxu0 0.0
        %1343 = vmatprep.subr.mxu0 0.0
        %1344 = vmatpush1.msra.mxu0 0.0
        %1345 = vmatprep.subr.mxu0 0.0
        %1346 = vmatpush1.msra.mxu0 0.0
        %1347 = vmatprep.subr.mxu0 0.0
        %1348 = vmatpush1.msra.mxu0 0.0
        %1349 = vmatprep.subr.mxu0 0.0
        %1350 = vmatpush1.msra.mxu0 0.0
        %1351 = vmatprep.subr.mxu0 0.0
        %1352 = vmatpush1.msra.mxu0 0.0
        %1353 = vmatprep.subr.mxu0 0.0
        %1354 = vmatpush1.msra.mxu0 0.0
        %1355 = vmatprep.subr.mxu0 0.0
        %1356 = vmatpush1.msra.mxu0 0.0
        %1357 = vmatprep.subr.mxu0 0.0
        %1358 = vmatpush1.msra.mxu0 0.0
        %1359 = vmatprep.subr.mxu0 0.0
        %1360 = vmatpush1.msra.mxu0 0.0
        %1361 = vmatprep.subr.mxu0 0.0
        %1362 = vmatpush1.msra.mxu0 0.0
        %1363 = vmatprep.subr.mxu0 0.0
        %1364 = vmatpush1.msra.mxu0 0.0
        %1365 = vmatprep.subr.mxu0 0.0
        %1366 = vmatpush1.msra.mxu0 0.0
        %1367 = vmatprep.subr.mxu0 0.0
        %1368 = vmatpush1.msra.mxu0 0.0
        %1369 = vmatprep.subr.mxu0 0.0
        %1370 = vmatpush1.msra.mxu0 0.0
        %1371 = vmatprep.subr.mxu0 0.0
        %1372 = vmatpush1.msra.mxu0 0.0
        %1373 = vmatprep.subr.mxu0 0.0
        %1374 = vmatpush1.msra.mxu0 0.0
        %1375 = vmatprep.subr.mxu0 0.0
        %1376 = vmatpush1.msra.mxu0 0.0
        %1377 = vmatprep.subr.mxu0 0.0
        %1378 = vmatpush1.msra.mxu0 0.0
        %1379 = vmatprep.subr.mxu0 0.0
        %1380 = vmatpush1.msra.mxu0 0.0
        %1381 = vmatprep.subr.mxu0 0.0
        %1382 = vmatpush1.msra.mxu0 0.0
        %1383 = vmatprep.subr.mxu0 0.0
        %1384 = vmatpush1.msra.mxu0 0.0
        %1385 = vmatprep.subr.mxu0 0.0
        %1386 = vmatpush1.msra.mxu0 0.0
        %1387 = vmatprep.subr.mxu0 0.0
        %1388 = vmatpush1.msra.mxu0 0.0
        %1389 = vmatprep.subr.mxu0 0.0
        %1390 = vmatpush1.msra.mxu0 0.0
        %1391 = vmatprep.mubr.f32.mxu0 0.0
        %1392 = vmatmul.mubr.f32.gmra.mrb[0].mxu0 %v1319
        %v1393 = vpop.f32.mrb[0].mxu0
        %v1394 = vadd.f32 0.0, %v1393
        %v1395 = vpop.f32.mrb[0].mxu0
        %v1396 = vadd.f32 0.0, %v1395
        %1397 = vdwg.mxu0
        %v1398 = vadd.f32 %v1312, %v1394
        %v1399 = vadd.f32 %v1314, %v1396
        %1400 = vrot.lane.b32.xlu0 %v1119, 1
        %v1401 = vpop.permute.xlu0 %1400
        %1402 = vrot.lane.b32.xlu0 %v1120, 1
        %v1403 = vpop.permute.xlu0 %1402
        %v1404 = vsel %vm265, %v1401, %v1403
        %v1405 = vsel %vm265, %v1403, %v1401
        %1406 = vrot.lane.b32.xlu0 %v1119, 127
        %v1407 = vpop.permute.xlu0 %1406
        %1408 = vrot.lane.b32.xlu0 %v1120, 127
        %v1409 = vpop.permute.xlu0 %1408
        %v1410 = vsel %vm272, %v1407, %v1409
        %v1411 = vsel %vm272, %v1409, %v1407
        %v1412 = vsel %vm291, %v1410, %v1405
        %v1413 = vsel %vm292, %v1411, %v1404
        %v1414 = vsel %vm311, %v1405, %v1410
        %v1415 = vsel %vm312, %v1404, %v1411
        %s1416 = scalar_lea.vmem %s3, 12
        %v1417 = vld [vmem:[%s1416] sm:$0xf]
        %v1419 = vsel %vm318, %v1417, 0
        %v1422 = vsel %vm322, %v1412, 0
        %v1425 = vsel %vm322, %v1413, 0
        %1427 = vmatprep.subr.mxu0 %v1425
        %1428 = vmatpush1.msra.mxu0 %v1422
        %1429 = vmatprep.subr.mxu0 0.0
        %1430 = vmatpush1.msra.mxu0 0.0
        %1431 = vmatprep.subr.mxu0 0.0
        %1432 = vmatpush1.msra.mxu0 0.0
        %1433 = vmatprep.subr.mxu0 0.0
        %1434 = vmatpush1.msra.mxu0 0.0
        %1435 = vmatprep.subr.mxu0 0.0
        %1436 = vmatpush1.msra.mxu0 0.0
        %1437 = vmatprep.subr.mxu0 0.0
        %1438 = vmatpush1.msra.mxu0 0.0
        %1439 = vmatprep.subr.mxu0 0.0
        %1440 = vmatpush1.msra.mxu0 0.0
        %1441 = vmatprep.subr.mxu0 0.0
        %1442 = vmatpush1.msra.mxu0 0.0
        %1443 = vmatprep.subr.mxu0 0.0
        %1444 = vmatpush1.msra.mxu0 0.0
        %1445 = vmatprep.subr.mxu0 0.0
        %1446 = vmatpush1.msra.mxu0 0.0
        %1447 = vmatprep.subr.mxu0 0.0
        %1448 = vmatpush1.msra.mxu0 0.0
        %1449 = vmatprep.subr.mxu0 0.0
        %1450 = vmatpush1.msra.mxu0 0.0
        %1451 = vmatprep.subr.mxu0 0.0
        %1452 = vmatpush1.msra.mxu0 0.0
        %1453 = vmatprep.subr.mxu0 0.0
        %1454 = vmatpush1.msra.mxu0 0.0
        %1455 = vmatprep.subr.mxu0 0.0
        %1456 = vmatpush1.msra.mxu0 0.0
        %1457 = vmatprep.subr.mxu0 0.0
        %1458 = vmatpush1.msra.mxu0 0.0
        %1459 = vmatprep.subr.mxu0 0.0
        %1460 = vmatpush1.msra.mxu0 0.0
        %1461 = vmatprep.subr.mxu0 0.0
        %1462 = vmatpush1.msra.mxu0 0.0
        %1463 = vmatprep.subr.mxu0 0.0
        %1464 = vmatpush1.msra.mxu0 0.0
        %1465 = vmatprep.subr.mxu0 0.0
        %1466 = vmatpush1.msra.mxu0 0.0
        %1467 = vmatprep.subr.mxu0 0.0
        %1468 = vmatpush1.msra.mxu0 0.0
        %1469 = vmatprep.subr.mxu0 0.0
        %1470 = vmatpush1.msra.mxu0 0.0
        %1471 = vmatprep.subr.mxu0 0.0
        %1472 = vmatpush1.msra.mxu0 0.0
        %1473 = vmatprep.subr.mxu0 0.0
        %1474 = vmatpush1.msra.mxu0 0.0
        %1475 = vmatprep.subr.mxu0 0.0
        %1476 = vmatpush1.msra.mxu0 0.0
        %1477 = vmatprep.subr.mxu0 0.0
        %1478 = vmatpush1.msra.mxu0 0.0
        %1479 = vmatprep.subr.mxu0 0.0
        %1480 = vmatpush1.msra.mxu0 0.0
        %1481 = vmatprep.subr.mxu0 0.0
        %1482 = vmatpush1.msra.mxu0 0.0
        %1483 = vmatprep.subr.mxu0 0.0
        %1484 = vmatpush1.msra.mxu0 0.0
        %1485 = vmatprep.subr.mxu0 0.0
        %1486 = vmatpush1.msra.mxu0 0.0
        %1487 = vmatprep.subr.mxu0 0.0
        %1488 = vmatpush1.msra.mxu0 0.0
        %1489 = vmatprep.subr.mxu0 0.0
        %1490 = vmatpush1.msra.mxu0 0.0
        %1491 = vmatprep.mubr.f32.mxu0 0.0
        %1492 = vmatmul.mubr.f32.gmra.mrb[0].mxu0 %v1419
        %v1493 = vpop.f32.mrb[0].mxu0
        %v1494 = vadd.f32 0.0, %v1493
        %v1495 = vpop.f32.mrb[0].mxu0
        %v1496 = vadd.f32 0.0, %v1495
        %1497 = vdwg.mxu0
        %v1498 = vadd.f32 %v1398, %v1494
        %v1499 = vadd.f32 %v1399, %v1496
        %s1500 = scalar_lea.vmem %s3, 16
        %v1501 = vld [vmem:[%s1500] sm:$0xf]
        %v1503 = vsel %vm318, %v1501, 0
        %v1506 = vsel %vm322, %v1119, 0
        %v1509 = vsel %vm322, %v1120, 0
        %1511 = vmatprep.subr.mxu0 %v1509
        %1512 = vmatpush1.msra.mxu0 %v1506
        %1513 = vmatprep.subr.mxu0 0.0
        %1514 = vmatpush1.msra.mxu0 0.0
        %1515 = vmatprep.subr.mxu0 0.0
        %1516 = vmatpush1.msra.mxu0 0.0
        %1517 = vmatprep.subr.mxu0 0.0
        %1518 = vmatpush1.msra.mxu0 0.0
        %1519 = vmatprep.subr.mxu0 0.0
        %1520 = vmatpush1.msra.mxu0 0.0
        %1521 = vmatprep.subr.mxu0 0.0
        %1522 = vmatpush1.msra.mxu0 0.0
        %1523 = vmatprep.subr.mxu0 0.0
        %1524 = vmatpush1.msra.mxu0 0.0
        %1525 = vmatprep.subr.mxu0 0.0
        %1526 = vmatpush1.msra.mxu0 0.0
        %1527 = vmatprep.subr.mxu0 0.0
        %1528 = vmatpush1.msra.mxu0 0.0
        %1529 = vmatprep.subr.mxu0 0.0
        %1530 = vmatpush1.msra.mxu0 0.0
        %1531 = vmatprep.subr.mxu0 0.0
        %1532 = vmatpush1.msra.mxu0 0.0
        %1533 = vmatprep.subr.mxu0 0.0
        %1534 = vmatpush1.msra.mxu0 0.0
        %1535 = vmatprep.subr.mxu0 0.0
        %1536 = vmatpush1.msra.mxu0 0.0
        %1537 = vmatprep.subr.mxu0 0.0
        %1538 = vmatpush1.msra.mxu0 0.0
        %1539 = vmatprep.subr.mxu0 0.0
        %1540 = vmatpush1.msra.mxu0 0.0
        %1541 = vmatprep.subr.mxu0 0.0
        %1542 = vmatpush1.msra.mxu0 0.0
        %1543 = vmatprep.subr.mxu0 0.0
        %1544 = vmatpush1.msra.mxu0 0.0
        %1545 = vmatprep.subr.mxu0 0.0
        %1546 = vmatpush1.msra.mxu0 0.0
        %1547 = vmatprep.subr.mxu0 0.0
        %1548 = vmatpush1.msra.mxu0 0.0
        %1549 = vmatprep.subr.mxu0 0.0
        %1550 = vmatpush1.msra.mxu0 0.0
        %1551 = vmatprep.subr.mxu0 0.0
        %1552 = vmatpush1.msra.mxu0 0.0
        %1553 = vmatprep.subr.mxu0 0.0
        %1554 = vmatpush1.msra.mxu0 0.0
        %1555 = vmatprep.subr.mxu0 0.0
        %1556 = vmatpush1.msra.mxu0 0.0
        %1557 = vmatprep.subr.mxu0 0.0
        %1558 = vmatpush1.msra.mxu0 0.0
        %1559 = vmatprep.subr.mxu0 0.0
        %1560 = vmatpush1.msra.mxu0 0.0
        %1561 = vmatprep.subr.mxu0 0.0
        %1562 = vmatpush1.msra.mxu0 0.0
        %1563 = vmatprep.subr.mxu0 0.0
        %1564 = vmatpush1.msra.mxu0 0.0
        %1565 = vmatprep.subr.mxu0 0.0
        %1566 = vmatpush1.msra.mxu0 0.0
        %1567 = vmatprep.subr.mxu0 0.0
        %1568 = vmatpush1.msra.mxu0 0.0
        %1569 = vmatprep.subr.mxu0 0.0
        %1570 = vmatpush1.msra.mxu0 0.0
        %1571 = vmatprep.subr.mxu0 0.0
        %1572 = vmatpush1.msra.mxu0 0.0
        %1573 = vmatprep.subr.mxu0 0.0
        %1574 = vmatpush1.msra.mxu0 0.0
        %1575 = vmatprep.mubr.f32.mxu0 0.0
        %1576 = vmatmul.mubr.f32.gmra.mrb[0].mxu0 %v1503
        %v1577 = vpop.f32.mrb[0].mxu0
        %v1578 = vadd.f32 0.0, %v1577
        %v1579 = vpop.f32.mrb[0].mxu0
        %v1580 = vadd.f32 0.0, %v1579
        %1581 = vdwg.mxu0
        %v1582 = vadd.f32 %v1498, %v1578
        %v1583 = vadd.f32 %v1499, %v1580
        %s1584 = scalar_lea.vmem %s3, 20
        %v1585 = vld [vmem:[%s1584] sm:$0xf]
        %v1587 = vsel %vm318, %v1585, 0
        %v1590 = vsel %vm322, %v1414, 0
        %v1593 = vsel %vm322, %v1415, 0
        %1595 = vmatprep.subr.mxu0 %v1593
        %1596 = vmatpush1.msra.mxu0 %v1590
        %1597 = vmatprep.subr.mxu0 0.0
        %1598 = vmatpush1.msra.mxu0 0.0
        %1599 = vmatprep.subr.mxu0 0.0
        %1600 = vmatpush1.msra.mxu0 0.0
        %1601 = vmatprep.subr.mxu0 0.0
        %1602 = vmatpush1.msra.mxu0 0.0
        %1603 = vmatprep.subr.mxu0 0.0
        %1604 = vmatpush1.msra.mxu0 0.0
        %1605 = vmatprep.subr.mxu0 0.0
        %1606 = vmatpush1.msra.mxu0 0.0
        %1607 = vmatprep.subr.mxu0 0.0
        %1608 = vmatpush1.msra.mxu0 0.0
        %1609 = vmatprep.subr.mxu0 0.0
        %1610 = vmatpush1.msra.mxu0 0.0
        %1611 = vmatprep.subr.mxu0 0.0
        %1612 = vmatpush1.msra.mxu0 0.0
        %1613 = vmatprep.subr.mxu0 0.0
        %1614 = vmatpush1.msra.mxu0 0.0
        %1615 = vmatprep.subr.mxu0 0.0
        %1616 = vmatpush1.msra.mxu0 0.0
        %1617 = vmatprep.subr.mxu0 0.0
        %1618 = vmatpush1.msra.mxu0 0.0
        %1619 = vmatprep.subr.mxu0 0.0
        %1620 = vmatpush1.msra.mxu0 0.0
        %1621 = vmatprep.subr.mxu0 0.0
        %1622 = vmatpush1.msra.mxu0 0.0
        %1623 = vmatprep.subr.mxu0 0.0
        %1624 = vmatpush1.msra.mxu0 0.0
        %1625 = vmatprep.subr.mxu0 0.0
        %1626 = vmatpush1.msra.mxu0 0.0
        %1627 = vmatprep.subr.mxu0 0.0
        %1628 = vmatpush1.msra.mxu0 0.0
        %1629 = vmatprep.subr.mxu0 0.0
        %1630 = vmatpush1.msra.mxu0 0.0
        %1631 = vmatprep.subr.mxu0 0.0
        %1632 = vmatpush1.msra.mxu0 0.0
        %1633 = vmatprep.subr.mxu0 0.0
        %1634 = vmatpush1.msra.mxu0 0.0
        %1635 = vmatprep.subr.mxu0 0.0
        %1636 = vmatpush1.msra.mxu0 0.0
        %1637 = vmatprep.subr.mxu0 0.0
        %1638 = vmatpush1.msra.mxu0 0.0
        %1639 = vmatprep.subr.mxu0 0.0
        %1640 = vmatpush1.msra.mxu0 0.0
        %1641 = vmatprep.subr.mxu0 0.0
        %1642 = vmatpush1.msra.mxu0 0.0
        %1643 = vmatprep.subr.mxu0 0.0
        %1644 = vmatpush1.msra.mxu0 0.0
        %1645 = vmatprep.subr.mxu0 0.0
        %1646 = vmatpush1.msra.mxu0 0.0
        %1647 = vmatprep.subr.mxu0 0.0
        %1648 = vmatpush1.msra.mxu0 0.0
        %1649 = vmatprep.subr.mxu0 0.0
        %1650 = vmatpush1.msra.mxu0 0.0
        %1651 = vmatprep.subr.mxu0 0.0
        %1652 = vmatpush1.msra.mxu0 0.0
        %1653 = vmatprep.subr.mxu0 0.0
        %1654 = vmatpush1.msra.mxu0 0.0
        %1655 = vmatprep.subr.mxu0 0.0
        %1656 = vmatpush1.msra.mxu0 0.0
        %1657 = vmatprep.subr.mxu0 0.0
        %1658 = vmatpush1.msra.mxu0 0.0
        %1659 = vmatprep.mubr.f32.mxu0 0.0
        %1660 = vmatmul.mubr.f32.gmra.mrb[0].mxu0 %v1587
        %v1661 = vpop.f32.mrb[0].mxu0
        %v1662 = vadd.f32 0.0, %v1661
        %v1663 = vpop.f32.mrb[0].mxu0
        %v1664 = vadd.f32 0.0, %v1663
        %1665 = vdwg.mxu0
        %v1666 = vadd.f32 %v1582, %v1662
        %v1667 = vadd.f32 %v1583, %v1664
        %1668 = vrot.lane.b32.xlu0 %v1135, 1
        %v1669 = vpop.permute.xlu0 %1668
        %1670 = vrot.lane.b32.xlu0 %v1136, 1
        %v1671 = vpop.permute.xlu0 %1670
        %v1672 = vsel %vm265, %v1669, %v1671
        %v1673 = vsel %vm265, %v1671, %v1669
        %1674 = vrot.lane.b32.xlu0 %v1135, 127
        %v1675 = vpop.permute.xlu0 %1674
        %1676 = vrot.lane.b32.xlu0 %v1136, 127
        %v1677 = vpop.permute.xlu0 %1676
        %v1678 = vsel %vm272, %v1675, %v1677
        %v1679 = vsel %vm272, %v1677, %v1675
        %v1680 = vsel %vm291, %v1678, %v1673
        %v1681 = vsel %vm292, %v1679, %v1672
        %v1682 = vsel %vm311, %v1673, %v1678
        %v1683 = vsel %vm312, %v1672, %v1679
        %s1684 = scalar_lea.vmem %s3, 24
        %v1685 = vld [vmem:[%s1684] sm:$0xf]
        %v1687 = vsel %vm318, %v1685, 0
        %v1690 = vsel %vm322, %v1680, 0
        %v1693 = vsel %vm322, %v1681, 0
        %1695 = vmatprep.subr.mxu0 %v1693
        %1696 = vmatpush1.msra.mxu0 %v1690
        %1697 = vmatprep.subr.mxu0 0.0
        %1698 = vmatpush1.msra.mxu0 0.0
        %1699 = vmatprep.subr.mxu0 0.0
        %1700 = vmatpush1.msra.mxu0 0.0
        %1701 = vmatprep.subr.mxu0 0.0
        %1702 = vmatpush1.msra.mxu0 0.0
        %1703 = vmatprep.subr.mxu0 0.0
        %1704 = vmatpush1.msra.mxu0 0.0
        %1705 = vmatprep.subr.mxu0 0.0
        %1706 = vmatpush1.msra.mxu0 0.0
        %1707 = vmatprep.subr.mxu0 0.0
        %1708 = vmatpush1.msra.mxu0 0.0
        %1709 = vmatprep.subr.mxu0 0.0
        %1710 = vmatpush1.msra.mxu0 0.0
        %1711 = vmatprep.subr.mxu0 0.0
        %1712 = vmatpush1.msra.mxu0 0.0
        %1713 = vmatprep.subr.mxu0 0.0
        %1714 = vmatpush1.msra.mxu0 0.0
        %1715 = vmatprep.subr.mxu0 0.0
        %1716 = vmatpush1.msra.mxu0 0.0
        %1717 = vmatprep.subr.mxu0 0.0
        %1718 = vmatpush1.msra.mxu0 0.0
        %1719 = vmatprep.subr.mxu0 0.0
        %1720 = vmatpush1.msra.mxu0 0.0
        %1721 = vmatprep.subr.mxu0 0.0
        %1722 = vmatpush1.msra.mxu0 0.0
        %1723 = vmatprep.subr.mxu0 0.0
        %1724 = vmatpush1.msra.mxu0 0.0
        %1725 = vmatprep.subr.mxu0 0.0
        %1726 = vmatpush1.msra.mxu0 0.0
        %1727 = vmatprep.subr.mxu0 0.0
        %1728 = vmatpush1.msra.mxu0 0.0
        %1729 = vmatprep.subr.mxu0 0.0
        %1730 = vmatpush1.msra.mxu0 0.0
        %1731 = vmatprep.subr.mxu0 0.0
        %1732 = vmatpush1.msra.mxu0 0.0
        %1733 = vmatprep.subr.mxu0 0.0
        %1734 = vmatpush1.msra.mxu0 0.0
        %1735 = vmatprep.subr.mxu0 0.0
        %1736 = vmatpush1.msra.mxu0 0.0
        %1737 = vmatprep.subr.mxu0 0.0
        %1738 = vmatpush1.msra.mxu0 0.0
        %1739 = vmatprep.subr.mxu0 0.0
        %1740 = vmatpush1.msra.mxu0 0.0
        %1741 = vmatprep.subr.mxu0 0.0
        %1742 = vmatpush1.msra.mxu0 0.0
        %1743 = vmatprep.subr.mxu0 0.0
        %1744 = vmatpush1.msra.mxu0 0.0
        %1745 = vmatprep.subr.mxu0 0.0
        %1746 = vmatpush1.msra.mxu0 0.0
        %1747 = vmatprep.subr.mxu0 0.0
        %1748 = vmatpush1.msra.mxu0 0.0
        %1749 = vmatprep.subr.mxu0 0.0
        %1750 = vmatpush1.msra.mxu0 0.0
        %1751 = vmatprep.subr.mxu0 0.0
        %1752 = vmatpush1.msra.mxu0 0.0
        %1753 = vmatprep.subr.mxu0 0.0
        %1754 = vmatpush1.msra.mxu0 0.0
        %1755 = vmatprep.subr.mxu0 0.0
        %1756 = vmatpush1.msra.mxu0 0.0
        %1757 = vmatprep.subr.mxu0 0.0
        %1758 = vmatpush1.msra.mxu0 0.0
        %1759 = vmatprep.mubr.f32.mxu0 0.0
        %1760 = vmatmul.mubr.f32.gmra.mrb[0].mxu0 %v1687
        %v1761 = vpop.f32.mrb[0].mxu0
        %v1762 = vadd.f32 0.0, %v1761
        %v1763 = vpop.f32.mrb[0].mxu0
        %v1764 = vadd.f32 0.0, %v1763
        %1765 = vdwg.mxu0
        %v1766 = vadd.f32 %v1666, %v1762
        %v1767 = vadd.f32 %v1667, %v1764
        %s1768 = scalar_lea.vmem %s3, 28
        %v1769 = vld [vmem:[%s1768] sm:$0xf]
        %v1771 = vsel %vm318, %v1769, 0
        %v1774 = vsel %vm322, %v1135, 0
        %v1777 = vsel %vm322, %v1136, 0
        %1779 = vmatprep.subr.mxu0 %v1777
        %1780 = vmatpush1.msra.mxu0 %v1774
        %1781 = vmatprep.subr.mxu0 0.0
        %1782 = vmatpush1.msra.mxu0 0.0
        %1783 = vmatprep.subr.mxu0 0.0
        %1784 = vmatpush1.msra.mxu0 0.0
        %1785 = vmatprep.subr.mxu0 0.0
        %1786 = vmatpush1.msra.mxu0 0.0
        %1787 = vmatprep.subr.mxu0 0.0
        %1788 = vmatpush1.msra.mxu0 0.0
        %1789 = vmatprep.subr.mxu0 0.0
        %1790 = vmatpush1.msra.mxu0 0.0
        %1791 = vmatprep.subr.mxu0 0.0
        %1792 = vmatpush1.msra.mxu0 0.0
        %1793 = vmatprep.subr.mxu0 0.0
        %1794 = vmatpush1.msra.mxu0 0.0
        %1795 = vmatprep.subr.mxu0 0.0
        %1796 = vmatpush1.msra.mxu0 0.0
        %1797 = vmatprep.subr.mxu0 0.0
        %1798 = vmatpush1.msra.mxu0 0.0
        %1799 = vmatprep.subr.mxu0 0.0
        %1800 = vmatpush1.msra.mxu0 0.0
        %1801 = vmatprep.subr.mxu0 0.0
        %1802 = vmatpush1.msra.mxu0 0.0
        %1803 = vmatprep.subr.mxu0 0.0
        %1804 = vmatpush1.msra.mxu0 0.0
        %1805 = vmatprep.subr.mxu0 0.0
        %1806 = vmatpush1.msra.mxu0 0.0
        %1807 = vmatprep.subr.mxu0 0.0
        %1808 = vmatpush1.msra.mxu0 0.0
        %1809 = vmatprep.subr.mxu0 0.0
        %1810 = vmatpush1.msra.mxu0 0.0
        %1811 = vmatprep.subr.mxu0 0.0
        %1812 = vmatpush1.msra.mxu0 0.0
        %1813 = vmatprep.subr.mxu0 0.0
        %1814 = vmatpush1.msra.mxu0 0.0
        %1815 = vmatprep.subr.mxu0 0.0
        %1816 = vmatpush1.msra.mxu0 0.0
        %1817 = vmatprep.subr.mxu0 0.0
        %1818 = vmatpush1.msra.mxu0 0.0
        %1819 = vmatprep.subr.mxu0 0.0
        %1820 = vmatpush1.msra.mxu0 0.0
        %1821 = vmatprep.subr.mxu0 0.0
        %1822 = vmatpush1.msra.mxu0 0.0
        %1823 = vmatprep.subr.mxu0 0.0
        %1824 = vmatpush1.msra.mxu0 0.0
        %1825 = vmatprep.subr.mxu0 0.0
        %1826 = vmatpush1.msra.mxu0 0.0
        %1827 = vmatprep.subr.mxu0 0.0
        %1828 = vmatpush1.msra.mxu0 0.0
        %1829 = vmatprep.subr.mxu0 0.0
        %1830 = vmatpush1.msra.mxu0 0.0
        %1831 = vmatprep.subr.mxu0 0.0
        %1832 = vmatpush1.msra.mxu0 0.0
        %1833 = vmatprep.subr.mxu0 0.0
        %1834 = vmatpush1.msra.mxu0 0.0
        %1835 = vmatprep.subr.mxu0 0.0
        %1836 = vmatpush1.msra.mxu0 0.0
        %1837 = vmatprep.subr.mxu0 0.0
        %1838 = vmatpush1.msra.mxu0 0.0
        %1839 = vmatprep.subr.mxu0 0.0
        %1840 = vmatpush1.msra.mxu0 0.0
        %1841 = vmatprep.subr.mxu0 0.0
        %1842 = vmatpush1.msra.mxu0 0.0
        %1843 = vmatprep.mubr.f32.mxu0 0.0
        %1844 = vmatmul.mubr.f32.gmra.mrb[0].mxu0 %v1771
        %v1845 = vpop.f32.mrb[0].mxu0
        %v1846 = vadd.f32 0.0, %v1845
        %v1847 = vpop.f32.mrb[0].mxu0
        %v1848 = vadd.f32 0.0, %v1847
        %1849 = vdwg.mxu0
        %v1850 = vadd.f32 %v1766, %v1846
        %v1851 = vadd.f32 %v1767, %v1848
        %s1852 = scalar_lea.vmem %s3, 32
        %v1853 = vld [vmem:[%s1852] sm:$0xf]
        %v1855 = vsel %vm318, %v1853, 0
        %v1858 = vsel %vm322, %v1682, 0
        %v1861 = vsel %vm322, %v1683, 0
        %1863 = vmatprep.subr.mxu0 %v1861
        %1864 = vmatpush1.msra.mxu0 %v1858
        %1865 = vmatprep.subr.mxu0 0.0
        %1866 = vmatpush1.msra.mxu0 0.0
        %1867 = vmatprep.subr.mxu0 0.0
        %1868 = vmatpush1.msra.mxu0 0.0
        %1869 = vmatprep.subr.mxu0 0.0
        %1870 = vmatpush1.msra.mxu0 0.0
        %1871 = vmatprep.subr.mxu0 0.0
        %1872 = vmatpush1.msra.mxu0 0.0
        %1873 = vmatprep.subr.mxu0 0.0
        %1874 = vmatpush1.msra.mxu0 0.0
        %1875 = vmatprep.subr.mxu0 0.0
        %1876 = vmatpush1.msra.mxu0 0.0
        %1877 = vmatprep.subr.mxu0 0.0
        %1878 = vmatpush1.msra.mxu0 0.0
        %1879 = vmatprep.subr.mxu0 0.0
        %1880 = vmatpush1.msra.mxu0 0.0
        %1881 = vmatprep.subr.mxu0 0.0
        %1882 = vmatpush1.msra.mxu0 0.0
        %1883 = vmatprep.subr.mxu0 0.0
        %1884 = vmatpush1.msra.mxu0 0.0
        %1885 = vmatprep.subr.mxu0 0.0
        %1886 = vmatpush1.msra.mxu0 0.0
        %1887 = vmatprep.subr.mxu0 0.0
        %1888 = vmatpush1.msra.mxu0 0.0
        %1889 = vmatprep.subr.mxu0 0.0
        %1890 = vmatpush1.msra.mxu0 0.0
        %1891 = vmatprep.subr.mxu0 0.0
        %1892 = vmatpush1.msra.mxu0 0.0
        %1893 = vmatprep.subr.mxu0 0.0
        %1894 = vmatpush1.msra.mxu0 0.0
        %1895 = vmatprep.subr.mxu0 0.0
        %1896 = vmatpush1.msra.mxu0 0.0
        %1897 = vmatprep.subr.mxu0 0.0
        %1898 = vmatpush1.msra.mxu0 0.0
        %1899 = vmatprep.subr.mxu0 0.0
        %1900 = vmatpush1.msra.mxu0 0.0
        %1901 = vmatprep.subr.mxu0 0.0
        %1902 = vmatpush1.msra.mxu0 0.0
        %1903 = vmatprep.subr.mxu0 0.0
        %1904 = vmatpush1.msra.mxu0 0.0
        %1905 = vmatprep.subr.mxu0 0.0
        %1906 = vmatpush1.msra.mxu0 0.0
        %1907 = vmatprep.subr.mxu0 0.0
        %1908 = vmatpush1.msra.mxu0 0.0
        %1909 = vmatprep.subr.mxu0 0.0
        %1910 = vmatpush1.msra.mxu0 0.0
        %1911 = vmatprep.subr.mxu0 0.0
        %1912 = vmatpush1.msra.mxu0 0.0
        %1913 = vmatprep.subr.mxu0 0.0
        %1914 = vmatpush1.msra.mxu0 0.0
        %1915 = vmatprep.subr.mxu0 0.0
        %1916 = vmatpush1.msra.mxu0 0.0
        %1917 = vmatprep.subr.mxu0 0.0
        %1918 = vmatpush1.msra.mxu0 0.0
        %1919 = vmatprep.subr.mxu0 0.0
        %1920 = vmatpush1.msra.mxu0 0.0
        %1921 = vmatprep.subr.mxu0 0.0
        %1922 = vmatpush1.msra.mxu0 0.0
        %1923 = vmatprep.subr.mxu0 0.0
        %1924 = vmatpush1.msra.mxu0 0.0
        %1925 = vmatprep.subr.mxu0 0.0
        %1926 = vmatpush1.msra.mxu0 0.0
        %1927 = vmatprep.mubr.f32.mxu0 0.0
        %1928 = vmatmul.mubr.f32.gmra.mrb[0].mxu0 %v1855
        %v1929 = vpop.f32.mrb[0].mxu0
        %v1930 = vadd.f32 0.0, %v1929
        %v1931 = vpop.f32.mrb[0].mxu0
        %v1932 = vadd.f32 0.0, %v1931
        %1933 = vdwg.mxu0
        %v1934 = vadd.f32 %v1850, %v1930
        %v1935 = vadd.f32 %v1851, %v1932
        %v1936 = vsel %vm322, %v1934, 0.0
        %v1937 = vsel %vm322, %v1935, 0.0
        %v1938 = vadd.f32 %v1936, %v1937
        %1939 = vadd.xlane.f32.xlu0 %v1938
        %v1940 = vpop.xlane.xlu0 %1939
        %v1941 = vmul.f32 %v1940, %v1103
        %v1942 = vsub.f32 %v1934, %v1941
        %v1943 = vsub.f32 %v1935, %v1941
        %v1944 = vmul.f32 %v1942, %v1942
        %v1945 = vmul.f32 %v1943, %v1943
        %v1946 = vsel %vm322, %v1944, 0.0
        %v1947 = vsel %vm322, %v1945, 0.0
        %v1948 = vadd.f32 %v1946, %v1947
        %1949 = vadd.xlane.f32.xlu0 %v1948
        %v1950 = vpop.xlane.xlu0 %1949
        %v1951 = vmul.f32 %v1950, %v1103
        %v1952 = vadd.f32 %v1951, 1e-05
        %v1953 = vrsqrt.pop %v1952
        %v1954 = vmul.f32 %v1942, %v1953
        %v1955 = vmul.f32 %v1943, %v1953
        %v1958 = vcombine.low %v1954, %v1955
        %v1960 = vadd.f32 %v196, %v1958
        %1961 = vst [vmem:[%s190] sm:$0xff] %v1960
        %s1962 = sand.u32 %s115, 1
        %s1963 = scalar_lea.sflag [#allocation3], %s1962
        %s1964 = sand.u32 %s115, 1
        %s1965 = smul.addr %s1964, 8
        %s1966 = scalar_lea.vmem [#allocation2], %s1965
        // Predicated region
        $region37: #{tpu_custom_call.1} parent=35 // pred_check
          %p1967 = pneg %p125
        $region38: #{tpu_custom_call.1} parent=35 // pred_check_branch
          %1969 = sbr.rel (%p1967) target = $region40
        $region39: #{tpu_custom_call.1} parent=35 // pred_region
          %s1971 = ssub.s32 128, 128
          %1972 = vsyncadd %s1963, %s1971
          %s1973 = smul.addr %s18, 2
          %s1974 = smul.addr %s1973, 64
          %s1975 = scalar_lea.hbm %s4, %s1974
          %s1977 = sshll.u32 %s1966, 4
          %s1978 = int_to_ptr.vmem [resolvable:$true] %s1977
          %1980 = dma.vmem_to_hbm [thread:$0]  %s1978, 128, %s1975, %s1963
        $region40: #{tpu_custom_call.1} parent=35 // pred_fallthru
          _
      $region36: #{tpu_custom_call.1} parent=5 // pred_fallthru
        _
      %p1981 = scmp.le.s32.totalorder 2, %s13
      // Predicated region
      $region41: #{tpu_custom_call.1} parent=5 // pred_check
        %p1982 = pneg %p1981
      $region42: #{tpu_custom_call.1} parent=5 // pred_check_branch
        %1984 = sbr.rel (%p1982) target = $region44
      $region43: #{tpu_custom_call.1} parent=5 // pred_region
        %s1985 = ssub.s32 %s13, 2
        // Predicated region
        $region45: #{tpu_custom_call.1} parent=43 // pred_check
          %p1986 = pneg %p131
        $region46: #{tpu_custom_call.1} parent=43 // pred_check_branch
          %1988 = sbr.rel (%p1986) target = $region48
        $region47: #{tpu_custom_call.1} parent=43 // pred_region
          %s1989 = sand.u32 %s116, 1
          %s1990 = scalar_lea.sflag [#allocation3], %s1989
          %s1991 = sand.u32 %s116, 1
          %s1992 = smul.addr %s1991, 8
          %s1993 = scalar_lea.vmem [#allocation2], %s1992
          %1994 = dma.done %s1990, 128
        $region48: #{tpu_custom_call.1} parent=43 // pred_fallthru
          _
      $region44: #{tpu_custom_call.1} parent=5 // pred_fallthru
        _
    $region6: #{tpu_custom_call.1} parent=1 // loop_footer
      %s17 = sadd.s32 1, %s13
    $region7: #{tpu_custom_call.1} parent=1 // loop_footer_branch
      %12 = sbr.rel target = $region3
    $region8: #{tpu_custom_call.1} parent=1 // loop_exit
      _
    %1995 = vsyncpa [#allocation3], 1
    %s1996 = scalar_lea.sflag [#allocation3], 1
    %1997 = vsyncpa %s1996, 1

// kernel: tpu_custom_call.1
$region0: #{tpu_custom_call.1}
  #allocation0 [shape = 'u32[]', space=smem, size = 0x4, offset = 0x4, fixed_abs, tag = 'smem constant byte address 0x4 - core index']
  #allocation1 [shape = 'u32[144,128]{1,0:T(1,128)}', space=vmem, size = 0x12000, scoped, tag = 'internal scratch']
  %s0 = inlined_call_operand.vmem [shape: s32[2,256], index: 0, kind: input, shape index: {}]
  %s1 = inlined_call_operand.vmem [shape: f32[2,4,256], index: 1, kind: input, shape index: {}]
  %s2 = inlined_call_operand.vmem [shape: f32[9,4,4], index: 2, kind: input, shape index: {}]
  %s3 = inlined_call_operand.vmem [shape: f32[9,4,4], index: 3, kind: input, shape index: {}]
  %s4 = inlined_call_operand.hbm [shape: f32[2,4,256], index: 4, kind: output, shape index: {}]
  %s5 = sld [smem:[#allocation0]]
  $region49: #{tpu_custom_call.1} parent=0
    _
  %s7 = ssub.s32 1, %s5
  %s8 = scalar_select 0, %s7, %s5
  $region1: #{tpu_custom_call.1} parent=0
    #allocation2 [shape = 'u8[8192]{0}', space=vmem, size = 0x2000, scoped, tag = 'output window, operand 0']
    #allocation3 [shape = 's32[2]{0}', space=sflag, size = 0x8, scoped, tag = 'scoped memory for tpu_custom_call.1']
    %9 = vsyncpa [#allocation3], 0
    %s10 = scalar_lea.sflag [#allocation3], 1
    %11 = vsyncpa %s10, 0
    loop: start=0, step=1, limit=4
    $region2: #{tpu_custom_call.1} parent=1 // loop_pre_header
      _
    $region3: #{tpu_custom_call.1} parent=1 // loop_header
      %s13 = sphi 0, %s17
      %p14 = scmp.ge.s32.totalorder %s13, 4
      %s21 = sphi 0, %s21
      %s23 = sphi 0, %s21
      %s24 = sphi 0, %s23
      %s38 = sphi 0, %s24
      %s44 = sphi 0, %s46
      %s47 = sphi 0, %s44
      %s48 = sphi 0, %s47
      %s64 = sphi 0, %s48
      %s68 = sphi 0, %s68
      %s70 = sphi 0, %s68
      %s71 = sphi 0, %s70
      %s85 = sphi 0, %s71
      %s89 = sphi 0, %s89
      %s91 = sphi 0, %s89
      %s92 = sphi 0, %s91
      %s106 = sphi 0, %s92
      %s112 = sphi 0, %s114
      %s115 = sphi 0, %s112
      %s116 = sphi 0, %s115
      %s132 = sphi 0, %s116
    $region4: #{tpu_custom_call.1} parent=1 // loop_header_branch
      %16 = sbr.rel (%p14) target = $region8
    $region5: #{tpu_custom_call.1} parent=1 // loop_body
      %s18 = ssub.s32 %s13, 1
      %s19 = ssub.s32 %s13, 2
      %s20 = sadd.s32 %s13, 1
      %s22 = sadd.s32 %s21, 1
      %p25 = scmp.eq.s32.totalorder %s13, 1
      %p26 = scmp.ne.s32.totalorder %s21, %s23
      %p27 = scmp.eq.s32.totalorder %s13, 0
      %p28 = por %p26, %p27
      %p29 = scmp.ne.s32.totalorder %s21, %s23
      %p30 = scmp.eq.s32.totalorder %s18, 1
      %p31 = por %p29, %p30
      %p32 = scmp.ne.s32.totalorder %s23, %s24
      %p33 = scmp.eq.s32.totalorder %s18, 0
      %p34 = por %p32, %p33
      %p35 = scmp.ne.s32.totalorder %s23, %s24
      %p36 = scmp.eq.s32.totalorder %s19, 1
      %p37 = por %p35, %p36
      %p39 = scmp.ne.s32.totalorder %s24, %s38
      %p40 = scmp.eq.s32.totalorder %s19, 0
      %p41 = por %p39, %p40
      %s42 = ssub.s32 %s13, %s20
      %p43 = scmp.eq.s32.totalorder %s42, 0
      %s45 = sadd.s32 %s44, 1
      %s46 = scalar_select %p43, %s44, %s45
      %p49 = pneg %p43
      %p50 = scmp.eq.s32.totalorder %s13, 1
      %p51 = por %p49, %p50
      %p52 = scmp.ne.s32.totalorder %s44, %s47
      %p53 = scmp.eq.s32.totalorder %s13, 0
      %p54 = por %p52, %p53
      %p55 = scmp.ne.s32.totalorder %s44, %s47
      %p56 = scmp.eq.s32.totalorder %s18, 1
      %p57 = por %p55, %p56
      %p58 = scmp.ne.s32.totalorder %s47, %s48
      %p59 = scmp.eq.s32.totalorder %s18, 0
      %p60 = por %p58, %p59
      %p61 = scmp.ne.s32.totalorder %s47, %s48
      %p62 = scmp.eq.s32.totalorder %s19, 1
      %p63 = por %p61, %p62
      %p65 = scmp.ne.s32.totalorder %s48, %s64
      %p66 = scmp.eq.s32.totalorder %s19, 0
      %p67 = por %p65, %p66
      %s69 = sadd.s32 %s68, 1
      %p72 = scmp.eq.s32.totalorder %s13, 1
      %p73 = scmp.ne.s32.totalorder %s68, %s70
      %p74 = scmp.eq.s32.totalorder %s13, 0
      %p75 = por %p73, %p74
      %p76 = scmp.ne.s32.totalorder %s68, %s70
      %p77 = scmp.eq.s32.totalorder %s18, 1
      %p78 = por %p76, %p77
      %p79 = scmp.ne.s32.totalorder %s70, %s71
      %p80 = scmp.eq.s32.totalorder %s18, 0
      %p81 = por %p79, %p80
      %p82 = scmp.ne.s32.totalorder %s70, %s71
      %p83 = scmp.eq.s32.totalorder %s19, 1
      %p84 = por %p82, %p83
      %p86 = scmp.ne.s32.totalorder %s71, %s85
      %p87 = scmp.eq.s32.totalorder %s19, 0
      %p88 = por %p86, %p87
      %s90 = sadd.s32 %s89, 1
      %p93 = scmp.eq.s32.totalorder %s13, 1
      %p94 = scmp.ne.s32.totalorder %s89, %s91
      %p95 = scmp.eq.s32.totalorder %s13, 0
      %p96 = por %p94, %p95
      %p97 = scmp.ne.s32.totalorder %s89, %s91
      %p98 = scmp.eq.s32.totalorder %s18, 1
      %p99 = por %p97, %p98
      %p100 = scmp.ne.s32.totalorder %s91, %s92
      %p101 = scmp.eq.s32.totalorder %s18, 0
      %p102 = por %p100, %p101
      %p103 = scmp.ne.s32.totalorder %s91, %s92
      %p104 = scmp.eq.s32.totalorder %s19, 1
      %p105 = por %p103, %p104
      %p107 = scmp.ne.s32.totalorder %s92, %s106
      %p108 = scmp.eq.s32.totalorder %s19, 0
      %p109 = por %p107, %p108
      %s110 = ssub.s32 %s13, %s20
      %p111 = scmp.eq.s32.totalorder %s110, 0
      %s113 = sadd.s32 %s112, 1
      %s114 = scalar_select %p111, %s112, %s113
      %p117 = pneg %p111
      %p118 = scmp.eq.s32.totalorder %s13, 1
      %p119 = por %p117, %p118
      %p120 = scmp.ne.s32.totalorder %s112, %s115
      %p121 = scmp.eq.s32.totalorder %s13, 0
      %p122 = por %p120, %p121
      %p123 = scmp.ne.s32.totalorder %s112, %s115
      %p124 = scmp.eq.s32.totalorder %s18, 1
      %p125 = por %p123, %p124
      %p126 = scmp.ne.s32.totalorder %s115, %s116
      %p127 = scmp.eq.s32.totalorder %s18, 0
      %p128 = por %p126, %p127
      %p129 = scmp.ne.s32.totalorder %s115, %s116
      %p130 = scmp.eq.s32.totalorder %s19, 1
      %p131 = por %p129, %p130
      %p133 = scmp.ne.s32.totalorder %s116, %s132
      %p134 = scmp.eq.s32.totalorder %s19, 0
      %p135 = por %p133, %p134
      %p136 = scmp.le.s32.totalorder 1, %s13
      %p137 = scmp.lt.s32.totalorder %s13, 3
      %p138 = pnand %p136, %p137
      %p139 = pneg %p138
      // Predicated region
      $region9: #{tpu_custom_call.1} parent=5 // pred_check
        _
      $region10: #{tpu_custom_call.1} parent=5 // pred_check_branch
        %141 = sbr.rel (%p138) target = $region12
      $region11: #{tpu_custom_call.1} parent=5 // pred_region
        %s142 = ssub.s32 %s13, 1
        // Predicated region
        $region13: #{tpu_custom_call.1} parent=11 // pred_check
          %p143 = pneg %p34
        $region14: #{tpu_custom_call.1} parent=11 // pred_check_branch
          %145 = sbr.rel (%p143) target = $region16
        $region15: #{tpu_custom_call.1} parent=11 // pred_region
          _
        $region16: #{tpu_custom_call.1} parent=11 // pred_fallthru
          _
        // Predicated region
        $region17: #{tpu_custom_call.1} parent=11 // pred_check
          %p146 = pneg %p81
        $region18: #{tpu_custom_call.1} parent=11 // pred_check_branch
          %148 = sbr.rel (%p146) target = $region20
        $region19: #{tpu_custom_call.1} parent=11 // pred_region
          _
        $region20: #{tpu_custom_call.1} parent=11 // pred_fallthru
          _
        // Predicated region
        $region21: #{tpu_custom_call.1} parent=11 // pred_check
          %p149 = pneg %p102
        $region22: #{tpu_custom_call.1} parent=11 // pred_check_branch
          %151 = sbr.rel (%p149) target = $region24
        $region23: #{tpu_custom_call.1} parent=11 // pred_region
          _
        $region24: #{tpu_custom_call.1} parent=11 // pred_fallthru
          _
      $region12: #{tpu_custom_call.1} parent=5 // pred_fallthru
        _
      %p152 = scmp.lt.s32.totalorder %s13, 2
      // Predicated region
      $region25: #{tpu_custom_call.1} parent=5 // pred_check
        %p153 = pneg %p152
      $region26: #{tpu_custom_call.1} parent=5 // pred_check_branch
        %155 = sbr.rel (%p153) target = $region28
      $region27: #{tpu_custom_call.1} parent=5 // pred_region
        // Predicated region
        $region29: #{tpu_custom_call.1} parent=27 // pred_check
          %p156 = pneg %p54
        $region30: #{tpu_custom_call.1} parent=27 // pred_check_branch
          %158 = sbr.rel (%p156) target = $region32
        $region31: #{tpu_custom_call.1} parent=27 // pred_region
          %p159 = scmp.lt.s32.totalorder %s13, 1
          %s160 = scalar_select %p159, %s13, 1
          %s161 = smul.addr %s160, 2
          %s162 = smul.addr %s161, 4
          %s163 = scalar_lea.vmem %s1, %s162
        $region32: #{tpu_custom_call.1} parent=27 // pred_fallthru
          _
      $region28: #{tpu_custom_call.1} parent=5 // pred_fallthru
        _
      %p164 = scmp.le.s32.totalorder 1, %s13
      %p165 = scmp.lt.s32.totalorder %s13, 3
      %p166 = pnand %p164, %p165
      %p167 = pneg %p166
      // Predicated region
      $region33: #{tpu_custom_call.1} parent=5 // pred_check
        _
      $region34: #{tpu_custom_call.1} parent=5 // pred_check_branch
        %169 = sbr.rel (%p166) target = $region36
      $region35: #{tpu_custom_call.1} parent=5 // pred_region
        %s170 = ssub.s32 %s13, 1
        %p171 = pneg %p34
        %p172 = pneg %p31
        %p173 = scmp.lt.s32.totalorder %s18, 1
        %s174 = scalar_select %p173, %s18, 1
        %s175 = smul.addr %s174, 2
        %s176 = smul.addr %s175, 4
        %s177 = scalar_lea.vmem %s1, %s176
        %p178 = pneg %p60
        %p179 = pneg %p57
        %p180 = pneg %p81
        %p181 = pneg %p78
        %p182 = pneg %p102
        %p183 = pneg %p99
        %p184 = pneg %p128
        %p185 = pneg %p125
        %s186 = sand.u32 %s115, 1
        %s187 = scalar_lea.sflag [#allocation3], %s186
        %s188 = sand.u32 %s115, 1
        %s189 = smul.addr %s188, 8
        %s190 = scalar_lea.vmem [#allocation2], %s189
        %p191 = scmp.lt.s32.totalorder %s18, 1
        %s192 = scalar_select %p191, %s18, 1
        %s193 = smul.addr %s192, 2
        %s194 = smul.addr %s193, 4
        %s195 = scalar_lea.vmem %s1, %s194
        %v196 = vld [vmem:[%s195] sm:$0xff]
        %v197 = vld [vmem:[%s0] sm:$0xf]
        %vm198 = vcmp.eq.s32.totalorder %v197, 0
        %vm199 = vcmp.eq.s32.totalorder %v197, 15
        %v201 = vcombine.high %v196, %v196
        %203 = vrot.lane.b32.xlu0 %v196, 16
        %v204 = vpop.permute.xlu0 %203
        %205 = vrot.lane.b32.xlu0 %v201, 16
        %v206 = vpop.permute.xlu0 %205
        %v207 = vlaneseq
        %v208 = vand.u32 %v207, 127
        %vm209 = vcmp.lt.s32.totalorder %v208, 16
        %v210 = vsel %vm209, %v204, %v206
        %v211 = vsel %vm209, %v206, %v204
        %212 = vrot.lane.b32.xlu0 %v196, 112
        %v213 = vpop.permute.xlu0 %212
        %214 = vrot.lane.b32.xlu0 %v201, 112
        %v215 = vpop.permute.xlu0 %214
        %vm216 = vcmp.lt.s32.totalorder %v208, 112
        %v217 = vsel %vm216, %v213, %v215
        %v218 = vsel %vm216, %v215, %v213
        %v219 = vsel %vm198, 1, 0
        %v220 = vlaneseq
        %v221 = vshrl.u32 %v220, 7
        %v222 = vsub.s32 0, %v221
        %v223 = vrot.slane %v219, %v222
        %v224 = vlaneseq
        %v225 = vshrl.u32 %v224, 7
        %v226 = vsub.s32 2, %v225
        %v227 = vrot.slane %v219, %v226
        %v228 = vlaneseq
        %v229 = vshrl.u32 %v228, 7
        %v230 = vsub.s32 0, %v229
        %v231 = vrot.slane %v223, %v230
        %v232 = vlaneseq
        %v233 = vshrl.u32 %v232, 7
        %v234 = vsub.s32 0, %v233
        %v235 = vrot.slane %v227, %v234
        %vm236 = vcmp.eq.s32.totalorder %v231, 1
        %vm237 = vcmp.eq.s32.totalorder %v235, 1
        %v238 = vsel %vm236, %v217, %v211
        %v239 = vsel %vm237, %v218, %v210
        %v240 = vsel %vm199, 1, 0
        %v241 = vlaneseq
        %v242 = vshrl.u32 %v241, 7
        %v243 = vsub.s32 0, %v242
        %v244 = vrot.slane %v240, %v243
        %v245 = vlaneseq
        %v246 = vshrl.u32 %v245, 7
        %v247 = vsub.s32 2, %v246
        %v248 = vrot.slane %v240, %v247
        %v249 = vlaneseq
        %v250 = vshrl.u32 %v249, 7
        %v251 = vsub.s32 0, %v250
        %v252 = vrot.slane %v244, %v251
        %v253 = vlaneseq
        %v254 = vshrl.u32 %v253, 7
        %v255 = vsub.s32 0, %v254
        %v256 = vrot.slane %v248, %v255
        %vm257 = vcmp.eq.s32.totalorder %v252, 1
        %vm258 = vcmp.eq.s32.totalorder %v256, 1
        %v259 = vsel %vm257, %v211, %v217
        %v260 = vsel %vm258, %v210, %v218
        %261 = vrot.lane.b32.xlu0 %v238, 1
        %v262 = vpop.permute.xlu0 %261
        %263 = vrot.lane.b32.xlu0 %v239, 1
        %v264 = vpop.permute.xlu0 %263
        %vm265 = vcmp.lt.s32.totalorder %v208, 1
        %v266 = vsel %vm265, %v262, %v264
        %v267 = vsel %vm265, %v264, %v262
        %268 = vrot.lane.b32.xlu0 %v238, 127
        %v269 = vpop.permute.xlu0 %268
        %270 = vrot.lane.b32.xlu0 %v239, 127
        %v271 = vpop.permute.xlu0 %270
        %vm272 = vcmp.lt.s32.totalorder %v208, 127
        %v273 = vsel %vm272, %v269, %v271
        %v274 = vsel %vm272, %v271, %v269
        %v275 = vlaneseq
        %v276 = vshrl.u32 %v275, 7
        %v277 = vsub.s32 1, %v276
        %v278 = vrot.slane %v219, %v277
        %v279 = vlaneseq
        %v280 = vshrl.u32 %v279, 7
        %v281 = vsub.s32 3, %v280
        %v282 = vrot.slane %v219, %v281
        %v283 = vlaneseq
        %v284 = vshrl.u32 %v283, 7
        %v285 = vsub.s32 1, %v284
        %v286 = vrot.slane %v278, %v285
        %v287 = vlaneseq
        %v288 = vshrl.u32 %v287, 7
        %v289 = vsub.s32 1, %v288
        %v290 = vrot.slane %v282, %v289
        %vm291 = vcmp.eq.s32.totalorder %v286, 1
        %vm292 = vcmp.eq.s32.totalorder %v290, 1
        %v293 = vsel %vm291, %v273, %v267
        %v294 = vsel %vm292, %v274, %v266
        %v295 = vlaneseq
        %v296 = vshrl.u32 %v295, 7
        %v297 = vsub.s32 1, %v296
        %v298 = vrot.slane %v240, %v297
        %v299 = vlaneseq
        %v300 = vshrl.u32 %v299, 7
        %v301 = vsub.s32 3, %v300
        %v302 = vrot.slane %v240, %v301
        %v303 = vlaneseq
        %v304 = vshrl.u32 %v303, 7
        %v305 = vsub.s32 1, %v304
        %v306 = vrot.slane %v298, %v305
        %v307 = vlaneseq
        %v308 = vshrl.u32 %v307, 7
        %v309 = vsub.s32 1, %v308
        %v310 = vrot.slane %v302, %v309
        %vm311 = vcmp.eq.s32.totalorder %v306, 1
        %vm312 = vcmp.eq.s32.totalorder %v310, 1
        %v313 = vsel %vm311, %v267, %v273
        %v314 = vsel %vm312, %v266, %v274
        %v315 = vld [vmem:[%s2] sm:$0xf]
        %s316 = scalar_lea.vmem %s2, 4
        %v317 = vld [vmem:[%s316] sm:$0xf]
        %vm318 = vcmask 31744
        %v320 = vsel %vm318, %v317, 0
        %vm322 = vcmask 1043456
        %v324 = vsel %vm322, %v238, 0
        %v327 = vsel %vm322, %v239, 0
        %329 = vmatprep.subr.mxu0 %v327
        %330 = vmatpush1.msra.mxu0 %v324
        %331 = vmatprep.subr.mxu0 0.0
        %332 = vmatpush1.msra.mxu0 0.0
        %333 = vmatprep.subr.mxu0 0.0
        %334 = vmatpush1.msra.mxu0 0.0
        %335 = vmatprep.subr.mxu0 0.0
        %336 = vmatpush1.msra.mxu0 0.0
        %337 = vmatprep.subr.mxu0 0.0
        %338 = vmatpush1.msra.mxu0 0.0
        %339 = vmatprep.subr.mxu0 0.0
        %340 = vmatpush1.msra.mxu0 0.0
        %341 = vmatprep.subr.mxu0 0.0
        %342 = vmatpush1.msra.mxu0 0.0
        %343 = vmatprep.subr.mxu0 0.0
        %344 = vmatpush1.msra.mxu0 0.0
        %345 = vmatprep.subr.mxu0 0.0
        %346 = vmatpush1.msra.mxu0 0.0
        %347 = vmatprep.subr.mxu0 0.0
        %348 = vmatpush1.msra.mxu0 0.0
        %349 = vmatprep.subr.mxu0 0.0
        %350 = vmatpush1.msra.mxu0 0.0
        %351 = vmatprep.subr.mxu0 0.0
        %352 = vmatpush1.msra.mxu0 0.0
        %353 = vmatprep.subr.mxu0 0.0
        %354 = vmatpush1.msra.mxu0 0.0
        %355 = vmatprep.subr.mxu0 0.0
        %356 = vmatpush1.msra.mxu0 0.0
        %357 = vmatprep.subr.mxu0 0.0
        %358 = vmatpush1.msra.mxu0 0.0
        %359 = vmatprep.subr.mxu0 0.0
        %360 = vmatpush1.msra.mxu0 0.0
        %361 = vmatprep.subr.mxu0 0.0
        %362 = vmatpush1.msra.mxu0 0.0
        %363 = vmatprep.subr.mxu0 0.0
        %364 = vmatpush1.msra.mxu0 0.0
        %365 = vmatprep.subr.mxu0 0.0
        %366 = vmatpush1.msra.mxu0 0.0
        %367 = vmatprep.subr.mxu0 0.0
        %368 = vmatpush1.msra.mxu0 0.0
        %369 = vmatprep.subr.mxu0 0.0
        %370 = vmatpush1.msra.mxu0 0.0
        %371 = vmatprep.subr.mxu0 0.0
        %372 = vmatpush1.msra.mxu0 0.0
        %373 = vmatprep.subr.mxu0 0.0
        %374 = vmatpush1.msra.mxu0 0.0
        %375 = vmatprep.subr.mxu0 0.0
        %376 = vmatpush1.msra.mxu0 0.0
        %377 = vmatprep.subr.mxu0 0.0
        %378 = vmatpush1.msra.mxu0 0.0
        %379 = vmatprep.subr.mxu0 0.0
        %380 = vmatpush1.msra.mxu0 0.0
        %381 = vmatprep.subr.mxu0 0.0
        %382 = vmatpush1.msra.mxu0 0.0
        %383 = vmatprep.subr.mxu0 0.0
        %384 = vmatpush1.msra.mxu0 0.0
        %385 = vmatprep.subr.mxu0 0.0
        %386 = vmatpush1.msra.mxu0 0.0
        %387 = vmatprep.subr.mxu0 0.0
        %388 = vmatpush1.msra.mxu0 0.0
        %389 = vmatprep.subr.mxu0 0.0
        %390 = vmatpush1.msra.mxu0 0.0
        %391 = vmatprep.subr.mxu0 0.0
        %392 = vmatpush1.msra.mxu0 0.0
        %393 = vmatprep.mubr.f32.mxu0 0.0
        %394 = vmatmul.mubr.f32.gmra.mrb[0].mxu0 %v320
        %v395 = vpop.f32.mrb[0].mxu0
        %v396 = vadd.f32 0.0, %v395
        %v397 = vpop.f32.mrb[0].mxu0
        %v398 = vadd.f32 0.0, %v397
        %399 = vdwg.mxu0
        %v401 = vsel %vm318, %v315, 0
        %v404 = vsel %vm322, %v293, 0
        %v407 = vsel %vm322, %v294, 0
        %409 = vmatprep.subr.mxu0 %v407
        %410 = vmatpush1.msra.mxu0 %v404
        %411 = vmatprep.subr.mxu0 0.0
        %412 = vmatpush1.msra.mxu0 0.0
        %413 = vmatprep.subr.mxu0 0.0
        %414 = vmatpush1.msra.mxu0 0.0
        %415 = vmatprep.subr.mxu0 0.0
        %416 = vmatpush1.msra.mxu0 0.0
        %417 = vmatprep.subr.mxu0 0.0
        %418 = vmatpush1.msra.mxu0 0.0
        %419 = vmatprep.subr.mxu0 0.0
        %420 = vmatpush1.msra.mxu0 0.0
        %421 = vmatprep.subr.mxu0 0.0
        %422 = vmatpush1.msra.mxu0 0.0
        %423 = vmatprep.subr.mxu0 0.0
        %424 = vmatpush1.msra.mxu0 0.0
        %425 = vmatprep.subr.mxu0 0.0
        %426 = vmatpush1.msra.mxu0 0.0
        %427 = vmatprep.subr.mxu0 0.0
        %428 = vmatpush1.msra.mxu0 0.0
        %429 = vmatprep.subr.mxu0 0.0
        %430 = vmatpush1.msra.mxu0 0.0
        %431 = vmatprep.subr.mxu0 0.0
        %432 = vmatpush1.msra.mxu0 0.0
        %433 = vmatprep.subr.mxu0 0.0
        %434 = vmatpush1.msra.mxu0 0.0
        %435 = vmatprep.subr.mxu0 0.0
        %436 = vmatpush1.msra.mxu0 0.0
        %437 = vmatprep.subr.mxu0 0.0
        %438 = vmatpush1.msra.mxu0 0.0
        %439 = vmatprep.subr.mxu0 0.0
        %440 = vmatpush1.msra.mxu0 0.0
        %441 = vmatprep.subr.mxu0 0.0
        %442 = vmatpush1.msra.mxu0 0.0
        %443 = vmatprep.subr.mxu0 0.0
        %444 = vmatpush1.msra.mxu0 0.0
        %445 = vmatprep.subr.mxu0 0.0
        %446 = vmatpush1.msra.mxu0 0.0
        %447 = vmatprep.subr.mxu0 0.0
        %448 = vmatpush1.msra.mxu0 0.0
        %449 = vmatprep.subr.mxu0 0.0
        %450 = vmatpush1.msra.mxu0 0.0
        %451 = vmatprep.subr.mxu0 0.0
        %452 = vmatpush1.msra.mxu0 0.0
        %453 = vmatprep.subr.mxu0 0.0
        %454 = vmatpush1.msra.mxu0 0.0
        %455 = vmatprep.subr.mxu0 0.0
        %456 = vmatpush1.msra.mxu0 0.0
        %457 = vmatprep.subr.mxu0 0.0
        %458 = vmatpush1.msra.mxu0 0.0
        %459 = vmatprep.subr.mxu0 0.0
        %460 = vmatpush1.msra.mxu0 0.0
        %461 = vmatprep.subr.mxu0 0.0
        %462 = vmatpush1.msra.mxu0 0.0
        %463 = vmatprep.subr.mxu0 0.0
        %464 = vmatpush1.msra.mxu0 0.0
        %465 = vmatprep.subr.mxu0 0.0
        %466 = vmatpush1.msra.mxu0 0.0
        %467 = vmatprep.subr.mxu0 0.0
        %468 = vmatpush1.msra.mxu0 0.0
        %469 = vmatprep.subr.mxu0 0.0
        %470 = vmatpush1.msra.mxu0 0.0
        %471 = vmatprep.subr.mxu0 0.0
        %472 = vmatpush1.msra.mxu0 0.0
        %473 = vmatprep.mubr.f32.mxu0 0.0
        %474 = vmatmul.mubr.f32.gmra.mrb[0].mxu0 %v401
        %v475 = vpop.f32.mrb[0].mxu0
        %v476 = vadd.f32 %v396, %v475
        %v477 = vpop.f32.mrb[0].mxu0
        %v478 = vadd.f32 %v398, %v477
        %479 = vdwg.mxu0
        %s480 = scalar_lea.vmem %s2, 8
        %v481 = vld [vmem:[%s480] sm:$0xf]
        %v483 = vsel %vm318, %v481, 0
        %v486 = vsel %vm322, %v313, 0
        %v489 = vsel %vm322, %v314, 0
        %491 = vmatprep.subr.mxu0 %v489
        %492 = vmatpush1.msra.mxu0 %v486
        %493 = vmatprep.subr.mxu0 0.0
        %494 = vmatpush1.msra.mxu0 0.0
        %495 = vmatprep.subr.mxu0 0.0
        %496 = vmatpush1.msra.mxu0 0.0
        %497 = vmatprep.subr.mxu0 0.0
        %498 = vmatpush1.msra.mxu0 0.0
        %499 = vmatprep.subr.mxu0 0.0
        %500 = vmatpush1.msra.mxu0 0.0
        %501 = vmatprep.subr.mxu0 0.0
        %502 = vmatpush1.msra.mxu0 0.0
        %503 = vmatprep.subr.mxu0 0.0
        %504 = vmatpush1.msra.mxu0 0.0
        %505 = vmatprep.subr.mxu0 0.0
        %506 = vmatpush1.msra.mxu0 0.0
        %507 = vmatprep.subr.mxu0 0.0
        %508 = vmatpush1.msra.mxu0 0.0
        %509 = vmatprep.subr.mxu0 0.0
        %510 = vmatpush1.msra.mxu0 0.0
        %511 = vmatprep.subr.mxu0 0.0
        %512 = vmatpush1.msra.mxu0 0.0
        %513 = vmatprep.subr.mxu0 0.0
        %514 = vmatpush1.msra.mxu0 0.0
        %515 = vmatprep.subr.mxu0 0.0
        %516 = vmatpush1.msra.mxu0 0.0
        %517 = vmatprep.subr.mxu0 0.0
        %518 = vmatpush1.msra.mxu0 0.0
        %519 = vmatprep.subr.mxu0 0.0
        %520 = vmatpush1.msra.mxu0 0.0
        %521 = vmatprep.subr.mxu0 0.0
        %522 = vmatpush1.msra.mxu0 0.0
        %523 = vmatprep.subr.mxu0 0.0
        %524 = vmatpush1.msra.mxu0 0.0
        %525 = vmatprep.subr.mxu0 0.0
        %526 = vmatpush1.msra.mxu0 0.0
        %527 = vmatprep.subr.mxu0 0.0
        %528 = vmatpush1.msra.mxu0 0.0
        %529 = vmatprep.subr.mxu0 0.0
        %530 = vmatpush1.msra.mxu0 0.0
        %531 = vmatprep.subr.mxu0 0.0
        %532 = vmatpush1.msra.mxu0 0.0
        %533 = vmatprep.subr.mxu0 0.0
        %534 = vmatpush1.msra.mxu0 0.0
        %535 = vmatprep.subr.mxu0 0.0
        %536 = vmatpush1.msra.mxu0 0.0
        %537 = vmatprep.subr.mxu0 0.0
        %538 = vmatpush1.msra.mxu0 0.0
        %539 = vmatprep.subr.mxu0 0.0
        %540 = vmatpush1.msra.mxu0 0.0
        %541 = vmatprep.subr.mxu0 0.0
        %542 = vmatpush1.msra.mxu0 0.0
        %543 = vmatprep.subr.mxu0 0.0
        %544 = vmatpush1.msra.mxu0 0.0
        %545 = vmatprep.subr.mxu0 0.0
        %546 = vmatpush1.msra.mxu0 0.0
        %547 = vmatprep.subr.mxu0 0.0
        %548 = vmatpush1.msra.mxu0 0.0
        %549 = vmatprep.subr.mxu0 0.0
        %550 = vmatpush1.msra.mxu0 0.0
        %551 = vmatprep.subr.mxu0 0.0
        %552 = vmatpush1.msra.mxu0 0.0
        %553 = vmatprep.subr.mxu0 0.0
        %554 = vmatpush1.msra.mxu0 0.0
        %555 = vmatprep.mubr.f32.mxu0 0.0
        %556 = vmatmul.mubr.f32.gmra.mrb[0].mxu0 %v483
        %v557 = vpop.f32.mrb[0].mxu0
        %v558 = vadd.f32 0.0, %v557
        %v559 = vpop.f32.mrb[0].mxu0
        %v560 = vadd.f32 0.0, %v559
        %561 = vdwg.mxu0
        %v562 = vadd.f32 %v476, %v558
        %v563 = vadd.f32 %v478, %v560
        %564 = vrot.lane.b32.xlu0 %v196, 1
        %v565 = vpop.permute.xlu0 %564
        %566 = vrot.lane.b32.xlu0 %v201, 1
        %v567 = vpop.permute.xlu0 %566
        %v568 = vsel %vm265, %v565, %v567
        %v569 = vsel %vm265, %v567, %v565
        %570 = vrot.lane.b32.xlu0 %v196, 127
        %v571 = vpop.permute.xlu0 %570
        %572 = vrot.lane.b32.xlu0 %v201, 127
        %v573 = vpop.permute.xlu0 %572
        %v574 = vsel %vm272, %v571, %v573
        %v575 = vsel %vm272, %v573, %v571
        %v576 = vsel %vm291, %v574, %v569
        %v577 = vsel %vm292, %v575, %v568
        %v578 = vsel %vm311, %v569, %v574
        %v579 = vsel %vm312, %v568, %v575
        %s580 = scalar_lea.vmem %s2, 12
        %v581 = vld [vmem:[%s580] sm:$0xf]
        %v583 = vsel %vm318, %v581, 0
        %v586 = vsel %vm322, %v576, 0
        %v589 = vsel %vm322, %v577, 0
        %591 = vmatprep.subr.mxu0 %v589
        %592 = vmatpush1.msra.mxu0 %v586
        %593 = vmatprep.subr.mxu0 0.0
        %594 = vmatpush1.msra.mxu0 0.0
        %595 = vmatprep.subr.mxu0 0.0
        %596 = vmatpush1.msra.mxu0 0.0
        %597 = vmatprep.subr.mxu0 0.0
        %598 = vmatpush1.msra.mxu0 0.0
        %599 = vmatprep.subr.mxu0 0.0
        %600 = vmatpush1.msra.mxu0 0.0
        %601 = vmatprep.subr.mxu0 0.0
        %602 = vmatpush1.msra.mxu0 0.0
        %603 = vmatprep.subr.mxu0 0.0
        %604 = vmatpush1.msra.mxu0 0.0
        %605 = vmatprep.subr.mxu0 0.0
        %606 = vmatpush1.msra.mxu0 0.0
        %607 = vmatprep.subr.mxu0 0.0
        %608 = vmatpush1.msra.mxu0 0.0
        %609 = vmatprep.subr.mxu0 0.0
        %610 = vmatpush1.msra.mxu0 0.0
        %611 = vmatprep.subr.mxu0 0.0
        %612 = vmatpush1.msra.mxu0 0.0
        %613 = vmatprep.subr.mxu0 0.0
        %614 = vmatpush1.msra.mxu0 0.0
        %615 = vmatprep.subr.mxu0 0.0
        %616 = vmatpush1.msra.mxu0 0.0
        %617 = vmatprep.subr.mxu0 0.0
        %618 = vmatpush1.msra.mxu0 0.0
        %619 = vmatprep.subr.mxu0 0.0
        %620 = vmatpush1.msra.mxu0 0.0
        %621 = vmatprep.subr.mxu0 0.0
        %622 = vmatpush1.msra.mxu0 0.0
        %623 = vmatprep.subr.mxu0 0.0
        %624 = vmatpush1.msra.mxu0 0.0
        %625 = vmatprep.subr.mxu0 0.0
        %626 = vmatpush1.msra.mxu0 0.0
        %627 = vmatprep.subr.mxu0 0.0
        %628 = vmatpush1.msra.mxu0 0.0
        %629 = vmatprep.subr.mxu0 0.0
        %630 = vmatpush1.msra.mxu0 0.0
        %631 = vmatprep.subr.mxu0 0.0
        %632 = vmatpush1.msra.mxu0 0.0
        %633 = vmatprep.subr.mxu0 0.0
        %634 = vmatpush1.msra.mxu0 0.0
        %635 = vmatprep.subr.mxu0 0.0
        %636 = vmatpush1.msra.mxu0 0.0
        %637 = vmatprep.subr.mxu0 0.0
        %638 = vmatpush1.msra.mxu0 0.0
        %639 = vmatprep.subr.mxu0 0.0
        %640 = vmatpush1.msra.mxu0 0.0
        %641 = vmatprep.subr.mxu0 0.0
        %642 = vmatpush1.msra.mxu0 0.0
        %643 = vmatprep.subr.mxu0 0.0
        %644 = vmatpush1.msra.mxu0 0.0
        %645 = vmatprep.subr.mxu0 0.0
        %646 = vmatpush1.msra.mxu0 0.0
        %647 = vmatprep.subr.mxu0 0.0
        %648 = vmatpush1.msra.mxu0 0.0
        %649 = vmatprep.subr.mxu0 0.0
        %650 = vmatpush1.msra.mxu0 0.0
        %651 = vmatprep.subr.mxu0 0.0
        %652 = vmatpush1.msra.mxu0 0.0
        %653 = vmatprep.subr.mxu0 0.0
        %654 = vmatpush1.msra.mxu0 0.0
        %655 = vmatprep.mubr.f32.mxu0 0.0
        %656 = vmatmul.mubr.f32.gmra.mrb[0].mxu0 %v583
        %v657 = vpop.f32.mrb[0].mxu0
        %v658 = vadd.f32 0.0, %v657
        %v659 = vpop.f32.mrb[0].mxu0
        %v660 = vadd.f32 0.0, %v659
        %661 = vdwg.mxu0
        %v662 = vadd.f32 %v562, %v658
        %v663 = vadd.f32 %v563, %v660
        %s664 = scalar_lea.vmem %s2, 16
        %v665 = vld [vmem:[%s664] sm:$0xf]
        %v667 = vsel %vm318, %v665, 0
        %v669 = vsel %vm322, %v196, 0
        %v671 = vsel %vm322, %v201, 0
        %673 = vmatprep.subr.mxu0 %v671
        %674 = vmatpush1.msra.mxu0 %v669
        %675 = vmatprep.subr.mxu0 0.0
        %676 = vmatpush1.msra.mxu0 0.0
        %677 = vmatprep.subr.mxu0 0.0
        %678 = vmatpush1.msra.mxu0 0.0
        %679 = vmatprep.subr.mxu0 0.0
        %680 = vmatpush1.msra.mxu0 0.0
        %681 = vmatprep.subr.mxu0 0.0
        %682 = vmatpush1.msra.mxu0 0.0
        %683 = vmatprep.subr.mxu0 0.0
        %684 = vmatpush1.msra.mxu0 0.0
        %685 = vmatprep.subr.mxu0 0.0
        %686 = vmatpush1.msra.mxu0 0.0
        %687 = vmatprep.subr.mxu0 0.0
        %688 = vmatpush1.msra.mxu0 0.0
        %689 = vmatprep.subr.mxu0 0.0
        %690 = vmatpush1.msra.mxu0 0.0
        %691 = vmatprep.subr.mxu0 0.0
        %692 = vmatpush1.msra.mxu0 0.0
        %693 = vmatprep.subr.mxu0 0.0
        %694 = vmatpush1.msra.mxu0 0.0
        %695 = vmatprep.subr.mxu0 0.0
        %696 = vmatpush1.msra.mxu0 0.0
        %697 = vmatprep.subr.mxu0 0.0
        %698 = vmatpush1.msra.mxu0 0.0
        %699 = vmatprep.subr.mxu0 0.0
        %700 = vmatpush1.msra.mxu0 0.0
        %701 = vmatprep.subr.mxu0 0.0
        %702 = vmatpush1.msra.mxu0 0.0
        %703 = vmatprep.subr.mxu0 0.0
        %704 = vmatpush1.msra.mxu0 0.0
        %705 = vmatprep.subr.mxu0 0.0
        %706 = vmatpush1.msra.mxu0 0.0
        %707 = vmatprep.subr.mxu0 0.0
        %708 = vmatpush1.msra.mxu0 0.0
        %709 = vmatprep.subr.mxu0 0.0
        %710 = vmatpush1.msra.mxu0 0.0
        %711 = vmatprep.subr.mxu0 0.0
        %712 = vmatpush1.msra.mxu0 0.0
        %713 = vmatprep.subr.mxu0 0.0
        %714 = vmatpush1.msra.mxu0 0.0
        %715 = vmatprep.subr.mxu0 0.0
        %716 = vmatpush1.msra.mxu0 0.0
        %717 = vmatprep.subr.mxu0 0.0
        %718 = vmatpush1.msra.mxu0 0.0
        %719 = vmatprep.subr.mxu0 0.0
        %720 = vmatpush1.msra.mxu0 0.0
        %721 = vmatprep.subr.mxu0 0.0
        %722 = vmatpush1.msra.mxu0 0.0
        %723 = vmatprep.subr.mxu0 0.0
        %724 = vmatpush1.msra.mxu0 0.0
        %725 = vmatprep.subr.mxu0 0.0
        %726 = vmatpush1.msra.mxu0 0.0
        %727 = vmatprep.subr.mxu0 0.0
        %728 = vmatpush1.msra.mxu0 0.0
        %729 = vmatprep.subr.mxu0 0.0
        %730 = vmatpush1.msra.mxu0 0.0
        %731 = vmatprep.subr.mxu0 0.0
        %732 = vmatpush1.msra.mxu0 0.0
        %733 = vmatprep.subr.mxu0 0.0
        %734 = vmatpush1.msra.mxu0 0.0
        %735 = vmatprep.subr.mxu0 0.0
        %736 = vmatpush1.msra.mxu0 0.0
        %737 = vmatprep.mubr.f32.mxu0 0.0
        %738 = vmatmul.mubr.f32.gmra.mrb[0].mxu0 %v667
        %v739 = vpop.f32.mrb[0].mxu0
        %v740 = vadd.f32 0.0, %v739
        %v741 = vpop.f32.mrb[0].mxu0
        %v742 = vadd.f32 0.0, %v741
        %743 = vdwg.mxu0
        %v744 = vadd.f32 %v662, %v740
        %v745 = vadd.f32 %v663, %v742
        %s746 = scalar_lea.vmem %s2, 20
        %v747 = vld [vmem:[%s746] sm:$0xf]
        %v749 = vsel %vm318, %v747, 0
        %v752 = vsel %vm322, %v578, 0
        %v755 = vsel %vm322, %v579, 0
        %757 = vmatprep.subr.mxu0 %v755
        %758 = vmatpush1.msra.mxu0 %v752
        %759 = vmatprep.subr.mxu0 0.0
        %760 = vmatpush1.msra.mxu0 0.0
        %761 = vmatprep.subr.mxu0 0.0
        %762 = vmatpush1.msra.mxu0 0.0
        %763 = vmatprep.subr.mxu0 0.0
        %764 = vmatpush1.msra.mxu0 0.0
        %765 = vmatprep.subr.mxu0 0.0
        %766 = vmatpush1.msra.mxu0 0.0
        %767 = vmatprep.subr.mxu0 0.0
        %768 = vmatpush1.msra.mxu0 0.0
        %769 = vmatprep.subr.mxu0 0.0
        %770 = vmatpush1.msra.mxu0 0.0
        %771 = vmatprep.subr.mxu0 0.0
        %772 = vmatpush1.msra.mxu0 0.0
        %773 = vmatprep.subr.mxu0 0.0
        %774 = vmatpush1.msra.mxu0 0.0
        %775 = vmatprep.subr.mxu0 0.0
        %776 = vmatpush1.msra.mxu0 0.0
        %777 = vmatprep.subr.mxu0 0.0
        %778 = vmatpush1.msra.mxu0 0.0
        %779 = vmatprep.subr.mxu0 0.0
        %780 = vmatpush1.msra.mxu0 0.0
        %781 = vmatprep.subr.mxu0 0.0
        %782 = vmatpush1.msra.mxu0 0.0
        %783 = vmatprep.subr.mxu0 0.0
        %784 = vmatpush1.msra.mxu0 0.0
        %785 = vmatprep.subr.mxu0 0.0
        %786 = vmatpush1.msra.mxu0 0.0
        %787 = vmatprep.subr.mxu0 0.0
        %788 = vmatpush1.msra.mxu0 0.0
        %789 = vmatprep.subr.mxu0 0.0
        %790 = vmatpush1.msra.mxu0 0.0
        %791 = vmatprep.subr.mxu0 0.0
        %792 = vmatpush1.msra.mxu0 0.0
        %793 = vmatprep.subr.mxu0 0.0
        %794 = vmatpush1.msra.mxu0 0.0
        %795 = vmatprep.subr.mxu0 0.0
        %796 = vmatpush1.msra.mxu0 0.0
        %797 = vmatprep.subr.mxu0 0.0
        %798 = vmatpush1.msra.mxu0 0.0
        %799 = vmatprep.subr.mxu0 0.0
        %800 = vmatpush1.msra.mxu0 0.0
        %801 = vmatprep.subr.mxu0 0.0
        %802 = vmatpush1.msra.mxu0 0.0
        %803 = vmatprep.subr.mxu0 0.0
        %804 = vmatpush1.msra.mxu0 0.0
        %805 = vmatprep.subr.mxu0 0.0
        %806 = vmatpush1.msra.mxu0 0.0
        %807 = vmatprep.subr.mxu0 0.0
        %808 = vmatpush1.msra.mxu0 0.0
        %809 = vmatprep.subr.mxu0 0.0
        %810 = vmatpush1.msra.mxu0 0.0
        %811 = vmatprep.subr.mxu0 0.0
        %812 = vmatpush1.msra.mxu0 0.0
        %813 = vmatprep.subr.mxu0 0.0
        %814 = vmatpush1.msra.mxu0 0.0
        %815 = vmatprep.subr.mxu0 0.0
        %816 = vmatpush1.msra.mxu0 0.0
        %817 = vmatprep.subr.mxu0 0.0
        %818 = vmatpush1.msra.mxu0 0.0
        %819 = vmatprep.subr.mxu0 0.0
        %820 = vmatpush1.msra.mxu0 0.0
        %821 = vmatprep.mubr.f32.mxu0 0.0
        %822 = vmatmul.mubr.f32.gmra.mrb[0].mxu0 %v749
        %v823 = vpop.f32.mrb[0].mxu0
        %v824 = vadd.f32 0.0, %v823
        %v825 = vpop.f32.mrb[0].mxu0
        %v826 = vadd.f32 0.0, %v825
        %827 = vdwg.mxu0
        %v828 = vadd.f32 %v744, %v824
        %v829 = vadd.f32 %v745, %v826
        %830 = vrot.lane.b32.xlu0 %v259, 1
        %v831 = vpop.permute.xlu0 %830
        %832 = vrot.lane.b32.xlu0 %v260, 1
        %v833 = vpop.permute.xlu0 %832
        %v834 = vsel %vm265, %v831, %v833
        %v835 = vsel %vm265, %v833, %v831
        %836 = vrot.lane.b32.xlu0 %v259, 127
        %v837 = vpop.permute.xlu0 %836
        %838 = vrot.lane.b32.xlu0 %v260, 127
        %v839 = vpop.permute.xlu0 %838
        %v840 = vsel %vm272, %v837, %v839
        %v841 = vsel %vm272, %v839, %v837
        %v842 = vsel %vm291, %v840, %v835
        %v843 = vsel %vm292, %v841, %v834
        %v844 = vsel %vm311, %v835, %v840
        %v845 = vsel %vm312, %v834, %v841
        %s846 = scalar_lea.vmem %s2, 24
        %v847 = vld [vmem:[%s846] sm:$0xf]
        %v849 = vsel %vm318, %v847, 0
        %v852 = vsel %vm322, %v842, 0
        %v855 = vsel %vm322, %v843, 0
        %857 = vmatprep.subr.mxu0 %v855
        %858 = vmatpush1.msra.mxu0 %v852
        %859 = vmatprep.subr.mxu0 0.0
        %860 = vmatpush1.msra.mxu0 0.0
        %861 = vmatprep.subr.mxu0 0.0
        %862 = vmatpush1.msra.mxu0 0.0
        %863 = vmatprep.subr.mxu0 0.0
        %864 = vmatpush1.msra.mxu0 0.0
        %865 = vmatprep.subr.mxu0 0.0
        %866 = vmatpush1.msra.mxu0 0.0
        %867 = vmatprep.subr.mxu0 0.0
        %868 = vmatpush1.msra.mxu0 0.0
        %869 = vmatprep.subr.mxu0 0.0
        %870 = vmatpush1.msra.mxu0 0.0
        %871 = vmatprep.subr.mxu0 0.0
        %872 = vmatpush1.msra.mxu0 0.0
        %873 = vmatprep.subr.mxu0 0.0
        %874 = vmatpush1.msra.mxu0 0.0
        %875 = vmatprep.subr.mxu0 0.0
        %876 = vmatpush1.msra.mxu0 0.0
        %877 = vmatprep.subr.mxu0 0.0
        %878 = vmatpush1.msra.mxu0 0.0
        %879 = vmatprep.subr.mxu0 0.0
        %880 = vmatpush1.msra.mxu0 0.0
        %881 = vmatprep.subr.mxu0 0.0
        %882 = vmatpush1.msra.mxu0 0.0
        %883 = vmatprep.subr.mxu0 0.0
        %884 = vmatpush1.msra.mxu0 0.0
        %885 = vmatprep.subr.mxu0 0.0
        %886 = vmatpush1.msra.mxu0 0.0
        %887 = vmatprep.subr.mxu0 0.0
        %888 = vmatpush1.msra.mxu0 0.0
        %889 = vmatprep.subr.mxu0 0.0
        %890 = vmatpush1.msra.mxu0 0.0
        %891 = vmatprep.subr.mxu0 0.0
        %892 = vmatpush1.msra.mxu0 0.0
        %893 = vmatprep.subr.mxu0 0.0
        %894 = vmatpush1.msra.mxu0 0.0
        %895 = vmatprep.subr.mxu0 0.0
        %896 = vmatpush1.msra.mxu0 0.0
        %897 = vmatprep.subr.mxu0 0.0
        %898 = vmatpush1.msra.mxu0 0.0
        %899 = vmatprep.subr.mxu0 0.0
        %900 = vmatpush1.msra.mxu0 0.0
        %901 = vmatprep.subr.mxu0 0.0
        %902 = vmatpush1.msra.mxu0 0.0
        %903 = vmatprep.subr.mxu0 0.0
        %904 = vmatpush1.msra.mxu0 0.0
        %905 = vmatprep.subr.mxu0 0.0
        %906 = vmatpush1.msra.mxu0 0.0
        %907 = vmatprep.subr.mxu0 0.0
        %908 = vmatpush1.msra.mxu0 0.0
        %909 = vmatprep.subr.mxu0 0.0
        %910 = vmatpush1.msra.mxu0 0.0
        %911 = vmatprep.subr.mxu0 0.0
        %912 = vmatpush1.msra.mxu0 0.0
        %913 = vmatprep.subr.mxu0 0.0
        %914 = vmatpush1.msra.mxu0 0.0
        %915 = vmatprep.subr.mxu0 0.0
        %916 = vmatpush1.msra.mxu0 0.0
        %917 = vmatprep.subr.mxu0 0.0
        %918 = vmatpush1.msra.mxu0 0.0
        %919 = vmatprep.subr.mxu0 0.0
        %920 = vmatpush1.msra.mxu0 0.0
        %921 = vmatprep.mubr.f32.mxu0 0.0
        %922 = vmatmul.mubr.f32.gmra.mrb[0].mxu0 %v849
        %v923 = vpop.f32.mrb[0].mxu0
        %v924 = vadd.f32 0.0, %v923
        %v925 = vpop.f32.mrb[0].mxu0
        %v926 = vadd.f32 0.0, %v925
        %927 = vdwg.mxu0
        %v928 = vadd.f32 %v828, %v924
        %v929 = vadd.f32 %v829, %v926
        %s930 = scalar_lea.vmem %s2, 28
        %v931 = vld [vmem:[%s930] sm:$0xf]
        %v933 = vsel %vm318, %v931, 0
        %v936 = vsel %vm322, %v259, 0
        %v939 = vsel %vm322, %v260, 0
        %941 = vmatprep.subr.mxu0 %v939
        %942 = vmatpush1.msra.mxu0 %v936
        %943 = vmatprep.subr.mxu0 0.0
        %944 = vmatpush1.msra.mxu0 0.0
        %945 = vmatprep.subr.mxu0 0.0
        %946 = vmatpush1.msra.mxu0 0.0
        %947 = vmatprep.subr.mxu0 0.0
        %948 = vmatpush1.msra.mxu0 0.0
        %949 = vmatprep.subr.mxu0 0.0
        %950 = vmatpush1.msra.mxu0 0.0
        %951 = vmatprep.subr.mxu0 0.0
        %952 = vmatpush1.msra.mxu0 0.0
        %953 = vmatprep.subr.mxu0 0.0
        %954 = vmatpush1.msra.mxu0 0.0
        %955 = vmatprep.subr.mxu0 0.0
        %956 = vmatpush1.msra.mxu0 0.0
        %957 = vmatprep.subr.mxu0 0.0
        %958 = vmatpush1.msra.mxu0 0.0
        %959 = vmatprep.subr.mxu0 0.0
        %960 = vmatpush1.msra.mxu0 0.0
        %961 = vmatprep.subr.mxu0 0.0
        %962 = vmatpush1.msra.mxu0 0.0
        %963 = vmatprep.subr.mxu0 0.0
        %964 = vmatpush1.msra.mxu0 0.0
        %965 = vmatprep.subr.mxu0 0.0
        %966 = vmatpush1.msra.mxu0 0.0
        %967 = vmatprep.subr.mxu0 0.0
        %968 = vmatpush1.msra.mxu0 0.0
        %969 = vmatprep.subr.mxu0 0.0
        %970 = vmatpush1.msra.mxu0 0.0
        %971 = vmatprep.subr.mxu0 0.0
        %972 = vmatpush1.msra.mxu0 0.0
        %973 = vmatprep.subr.mxu0 0.0
        %974 = vmatpush1.msra.mxu0 0.0
        %975 = vmatprep.subr.mxu0 0.0
        %976 = vmatpush1.msra.mxu0 0.0
        %977 = vmatprep.subr.mxu0 0.0
        %978 = vmatpush1.msra.mxu0 0.0
        %979 = vmatprep.subr.mxu0 0.0
        %980 = vmatpush1.msra.mxu0 0.0
        %981 = vmatprep.subr.mxu0 0.0
        %982 = vmatpush1.msra.mxu0 0.0
        %983 = vmatprep.subr.mxu0 0.0
        %984 = vmatpush1.msra.mxu0 0.0
        %985 = vmatprep.subr.mxu0 0.0
        %986 = vmatpush1.msra.mxu0 0.0
        %987 = vmatprep.subr.mxu0 0.0
        %988 = vmatpush1.msra.mxu0 0.0
        %989 = vmatprep.subr.mxu0 0.0
        %990 = vmatpush1.msra.mxu0 0.0
        %991 = vmatprep.subr.mxu0 0.0
        %992 = vmatpush1.msra.mxu0 0.0
        %993 = vmatprep.subr.mxu0 0.0
        %994 = vmatpush1.msra.mxu0 0.0
        %995 = vmatprep.subr.mxu0 0.0
        %996 = vmatpush1.msra.mxu0 0.0
        %997 = vmatprep.subr.mxu0 0.0
        %998 = vmatpush1.msra.mxu0 0.0
        %999 = vmatprep.subr.mxu0 0.0
        %1000 = vmatpush1.msra.mxu0 0.0
        %1001 = vmatprep.subr.mxu0 0.0
        %1002 = vmatpush1.msra.mxu0 0.0
        %1003 = vmatprep.subr.mxu0 0.0
        %1004 = vmatpush1.msra.mxu0 0.0
        %1005 = vmatprep.mubr.f32.mxu0 0.0
        %1006 = vmatmul.mubr.f32.gmra.mrb[0].mxu0 %v933
        %v1007 = vpop.f32.mrb[0].mxu0
        %v1008 = vadd.f32 0.0, %v1007
        %v1009 = vpop.f32.mrb[0].mxu0
        %v1010 = vadd.f32 0.0, %v1009
        %1011 = vdwg.mxu0
        %v1012 = vadd.f32 %v928, %v1008
        %v1013 = vadd.f32 %v929, %v1010
        %s1014 = scalar_lea.vmem %s2, 32
        %v1015 = vld [vmem:[%s1014] sm:$0xf]
        %v1017 = vsel %vm318, %v1015, 0
        %v1020 = vsel %vm322, %v844, 0
        %v1023 = vsel %vm322, %v845, 0
        %1025 = vmatprep.subr.mxu0 %v1023
        %1026 = vmatpush1.msra.mxu0 %v1020
        %1027 = vmatprep.subr.mxu0 0.0
        %1028 = vmatpush1.msra.mxu0 0.0
        %1029 = vmatprep.subr.mxu0 0.0
        %1030 = vmatpush1.msra.mxu0 0.0
        %1031 = vmatprep.subr.mxu0 0.0
        %1032 = vmatpush1.msra.mxu0 0.0
        %1033 = vmatprep.subr.mxu0 0.0
        %1034 = vmatpush1.msra.mxu0 0.0
        %1035 = vmatprep.subr.mxu0 0.0
        %1036 = vmatpush1.msra.mxu0 0.0
        %1037 = vmatprep.subr.mxu0 0.0
        %1038 = vmatpush1.msra.mxu0 0.0
        %1039 = vmatprep.subr.mxu0 0.0
        %1040 = vmatpush1.msra.mxu0 0.0
        %1041 = vmatprep.subr.mxu0 0.0
        %1042 = vmatpush1.msra.mxu0 0.0
        %1043 = vmatprep.subr.mxu0 0.0
        %1044 = vmatpush1.msra.mxu0 0.0
        %1045 = vmatprep.subr.mxu0 0.0
        %1046 = vmatpush1.msra.mxu0 0.0
        %1047 = vmatprep.subr.mxu0 0.0
        %1048 = vmatpush1.msra.mxu0 0.0
        %1049 = vmatprep.subr.mxu0 0.0
        %1050 = vmatpush1.msra.mxu0 0.0
        %1051 = vmatprep.subr.mxu0 0.0
        %1052 = vmatpush1.msra.mxu0 0.0
        %1053 = vmatprep.subr.mxu0 0.0
        %1054 = vmatpush1.msra.mxu0 0.0
        %1055 = vmatprep.subr.mxu0 0.0
        %1056 = vmatpush1.msra.mxu0 0.0
        %1057 = vmatprep.subr.mxu0 0.0
        %1058 = vmatpush1.msra.mxu0 0.0
        %1059 = vmatprep.subr.mxu0 0.0
        %1060 = vmatpush1.msra.mxu0 0.0
        %1061 = vmatprep.subr.mxu0 0.0
        %1062 = vmatpush1.msra.mxu0 0.0
        %1063 = vmatprep.subr.mxu0 0.0
        %1064 = vmatpush1.msra.mxu0 0.0
        %1065 = vmatprep.subr.mxu0 0.0
        %1066 = vmatpush1.msra.mxu0 0.0
        %1067 = vmatprep.subr.mxu0 0.0
        %1068 = vmatpush1.msra.mxu0 0.0
        %1069 = vmatprep.subr.mxu0 0.0
        %1070 = vmatpush1.msra.mxu0 0.0
        %1071 = vmatprep.subr.mxu0 0.0
        %1072 = vmatpush1.msra.mxu0 0.0
        %1073 = vmatprep.subr.mxu0 0.0
        %1074 = vmatpush1.msra.mxu0 0.0
        %1075 = vmatprep.subr.mxu0 0.0
        %1076 = vmatpush1.msra.mxu0 0.0
        %1077 = vmatprep.subr.mxu0 0.0
        %1078 = vmatpush1.msra.mxu0 0.0
        %1079 = vmatprep.subr.mxu0 0.0
        %1080 = vmatpush1.msra.mxu0 0.0
        %1081 = vmatprep.subr.mxu0 0.0
        %1082 = vmatpush1.msra.mxu0 0.0
        %1083 = vmatprep.subr.mxu0 0.0
        %1084 = vmatpush1.msra.mxu0 0.0
        %1085 = vmatprep.subr.mxu0 0.0
        %1086 = vmatpush1.msra.mxu0 0.0
        %1087 = vmatprep.subr.mxu0 0.0
        %1088 = vmatpush1.msra.mxu0 0.0
        %1089 = vmatprep.mubr.f32.mxu0 0.0
        %1090 = vmatmul.mubr.f32.gmra.mrb[0].mxu0 %v1017
        %v1091 = vpop.f32.mrb[0].mxu0
        %v1092 = vadd.f32 0.0, %v1091
        %v1093 = vpop.f32.mrb[0].mxu0
        %v1094 = vadd.f32 0.0, %v1093
        %1095 = vdwg.mxu0
        %v1096 = vadd.f32 %v1012, %v1092
        %v1097 = vadd.f32 %v1013, %v1094
        %v1098 = vsel %vm322, %v1096, 0.0
        %v1099 = vsel %vm322, %v1097, 0.0
        %v1100 = vadd.f32 %v1098, %v1099
        %1101 = vadd.xlane.f32.xlu0 %v1100
        %v1102 = vpop.xlane.xlu0 %1101
        %v1103 = vrcp.pop 256.0
        %v1104 = vmul.f32 %v1102, %v1103
        %v1105 = vsub.f32 %v1096, %v1104
        %v1106 = vsub.f32 %v1097, %v1104
        %v1107 = vmul.f32 %v1105, %v1105
        %v1108 = vmul.f32 %v1106, %v1106
        %v1109 = vsel %vm322, %v1107, 0.0
        %v1110 = vsel %vm322, %v1108, 0.0
        %v1111 = vadd.f32 %v1109, %v1110
        %1112 = vadd.xlane.f32.xlu0 %v1111
        %v1113 = vpop.xlane.xlu0 %1112
        %v1114 = vmul.f32 %v1113, %v1103
        %v1115 = vadd.f32 %v1114, 1e-05
        %v1116 = vrsqrt.pop %v1115
        %v1117 = vmul.f32 %v1105, %v1116
        %v1118 = vmul.f32 %v1106, %v1116
        %v1119 = vmax.f32 %v1117, 0.0
        %v1120 = vmax.f32 %v1118, 0.0
        %1121 = vrot.lane.b32.xlu0 %v1119, 16
        %v1122 = vpop.permute.xlu0 %1121
        %1123 = vrot.lane.b32.xlu0 %v1120, 16
        %v1124 = vpop.permute.xlu0 %1123
        %v1125 = vsel %vm209, %v1122, %v1124
        %v1126 = vsel %vm209, %v1124, %v1122
        %1127 = vrot.lane.b32.xlu0 %v1119, 112
        %v1128 = vpop.permute.xlu0 %1127
        %1129 = vrot.lane.b32.xlu0 %v1120, 112
        %v1130 = vpop.permute.xlu0 %1129
        %v1131 = vsel %vm216, %v1128, %v1130
        %v1132 = vsel %vm216, %v1130, %v1128
        %v1133 = vsel %vm236, %v1131, %v1126
        %v1134 = vsel %vm237, %v1132, %v1125
        %v1135 = vsel %vm257, %v1126, %v1131
        %v1136 = vsel %vm258, %v1125, %v1132
        %1137 = vrot.lane.b32.xlu0 %v1133, 1
        %v1138 = vpop.permute.xlu0 %1137
        %1139 = vrot.lane.b32.xlu0 %v1134, 1
        %v1140 = vpop.permute.xlu0 %1139
        %v1141 = vsel %vm265, %v1138, %v1140
        %v1142 = vsel %vm265, %v1140, %v1138
        %1143 = vrot.lane.b32.xlu0 %v1133, 127
        %v1144 = vpop.permute.xlu0 %1143
        %1145 = vrot.lane.b32.xlu0 %v1134, 127
        %v1146 = vpop.permute.xlu0 %1145
        %v1147 = vsel %vm272, %v1144, %v1146
        %v1148 = vsel %vm272, %v1146, %v1144
        %v1149 = vsel %vm291, %v1147, %v1142
        %v1150 = vsel %vm292, %v1148, %v1141
        %v1151 = vsel %vm311, %v1142, %v1147
        %v1152 = vsel %vm312, %v1141, %v1148
        %v1153 = vld [vmem:[%s3] sm:$0xf]
        %s1154 = scalar_lea.vmem %s3, 4
        %v1155 = vld [vmem:[%s1154] sm:$0xf]
        %v1157 = vsel %vm318, %v1155, 0
        %v1160 = vsel %vm322, %v1133, 0
        %v1163 = vsel %vm322, %v1134, 0
        %1165 = vmatprep.subr.mxu0 %v1163
        %1166 = vmatpush1.msra.mxu0 %v1160
        %1167 = vmatprep.subr.mxu0 0.0
        %1168 = vmatpush1.msra.mxu0 0.0
        %1169 = vmatprep.subr.mxu0 0.0
        %1170 = vmatpush1.msra.mxu0 0.0
        %1171 = vmatprep.subr.mxu0 0.0
        %1172 = vmatpush1.msra.mxu0 0.0
        %1173 = vmatprep.subr.mxu0 0.0
        %1174 = vmatpush1.msra.mxu0 0.0
        %1175 = vmatprep.subr.mxu0 0.0
        %1176 = vmatpush1.msra.mxu0 0.0
        %1177 = vmatprep.subr.mxu0 0.0
        %1178 = vmatpush1.msra.mxu0 0.0
        %1179 = vmatprep.subr.mxu0 0.0
        %1180 = vmatpush1.msra.mxu0 0.0
        %1181 = vmatprep.subr.mxu0 0.0
        %1182 = vmatpush1.msra.mxu0 0.0
        %1183 = vmatprep.subr.mxu0 0.0
        %1184 = vmatpush1.msra.mxu0 0.0
        %1185 = vmatprep.subr.mxu0 0.0
        %1186 = vmatpush1.msra.mxu0 0.0
        %1187 = vmatprep.subr.mxu0 0.0
        %1188 = vmatpush1.msra.mxu0 0.0
        %1189 = vmatprep.subr.mxu0 0.0
        %1190 = vmatpush1.msra.mxu0 0.0
        %1191 = vmatprep.subr.mxu0 0.0
        %1192 = vmatpush1.msra.mxu0 0.0
        %1193 = vmatprep.subr.mxu0 0.0
        %1194 = vmatpush1.msra.mxu0 0.0
        %1195 = vmatprep.subr.mxu0 0.0
        %1196 = vmatpush1.msra.mxu0 0.0
        %1197 = vmatprep.subr.mxu0 0.0
        %1198 = vmatpush1.msra.mxu0 0.0
        %1199 = vmatprep.subr.mxu0 0.0
        %1200 = vmatpush1.msra.mxu0 0.0
        %1201 = vmatprep.subr.mxu0 0.0
        %1202 = vmatpush1.msra.mxu0 0.0
        %1203 = vmatprep.subr.mxu0 0.0
        %1204 = vmatpush1.msra.mxu0 0.0
        %1205 = vmatprep.subr.mxu0 0.0
        %1206 = vmatpush1.msra.mxu0 0.0
        %1207 = vmatprep.subr.mxu0 0.0
        %1208 = vmatpush1.msra.mxu0 0.0
        %1209 = vmatprep.subr.mxu0 0.0
        %1210 = vmatpush1.msra.mxu0 0.0
        %1211 = vmatprep.subr.mxu0 0.0
        %1212 = vmatpush1.msra.mxu0 0.0
        %1213 = vmatprep.subr.mxu0 0.0
        %1214 = vmatpush1.msra.mxu0 0.0
        %1215 = vmatprep.subr.mxu0 0.0
        %1216 = vmatpush1.msra.mxu0 0.0
        %1217 = vmatprep.subr.mxu0 0.0
        %1218 = vmatpush1.msra.mxu0 0.0
        %1219 = vmatprep.subr.mxu0 0.0
        %1220 = vmatpush1.msra.mxu0 0.0
        %1221 = vmatprep.subr.mxu0 0.0
        %1222 = vmatpush1.msra.mxu0 0.0
        %1223 = vmatprep.subr.mxu0 0.0
        %1224 = vmatpush1.msra.mxu0 0.0
        %1225 = vmatprep.subr.mxu0 0.0
        %1226 = vmatpush1.msra.mxu0 0.0
        %1227 = vmatprep.subr.mxu0 0.0
        %1228 = vmatpush1.msra.mxu0 0.0
        %1229 = vmatprep.mubr.f32.mxu0 0.0
        %1230 = vmatmul.mubr.f32.gmra.mrb[0].mxu0 %v1157
        %v1231 = vpop.f32.mrb[0].mxu0
        %v1232 = vadd.f32 0.0, %v1231
        %v1233 = vpop.f32.mrb[0].mxu0
        %v1234 = vadd.f32 0.0, %v1233
        %1235 = vdwg.mxu0
        %v1237 = vsel %vm318, %v1153, 0
        %v1240 = vsel %vm322, %v1149, 0
        %v1243 = vsel %vm322, %v1150, 0
        %1245 = vmatprep.subr.mxu0 %v1243
        %1246 = vmatpush1.msra.mxu0 %v1240
        %1247 = vmatprep.subr.mxu0 0.0
        %1248 = vmatpush1.msra.mxu0 0.0
        %1249 = vmatprep.subr.mxu0 0.0
        %1250 = vmatpush1.msra.mxu0 0.0
        %1251 = vmatprep.subr.mxu0 0.0
        %1252 = vmatpush1.msra.mxu0 0.0
        %1253 = vmatprep.subr.mxu0 0.0
        %1254 = vmatpush1.msra.mxu0 0.0
        %1255 = vmatprep.subr.mxu0 0.0
        %1256 = vmatpush1.msra.mxu0 0.0
        %1257 = vmatprep.subr.mxu0 0.0
        %1258 = vmatpush1.msra.mxu0 0.0
        %1259 = vmatprep.subr.mxu0 0.0
        %1260 = vmatpush1.msra.mxu0 0.0
        %1261 = vmatprep.subr.mxu0 0.0
        %1262 = vmatpush1.msra.mxu0 0.0
        %1263 = vmatprep.subr.mxu0 0.0
        %1264 = vmatpush1.msra.mxu0 0.0
        %1265 = vmatprep.subr.mxu0 0.0
        %1266 = vmatpush1.msra.mxu0 0.0
        %1267 = vmatprep.subr.mxu0 0.0
        %1268 = vmatpush1.msra.mxu0 0.0
        %1269 = vmatprep.subr.mxu0 0.0
        %1270 = vmatpush1.msra.mxu0 0.0
        %1271 = vmatprep.subr.mxu0 0.0
        %1272 = vmatpush1.msra.mxu0 0.0
        %1273 = vmatprep.subr.mxu0 0.0
        %1274 = vmatpush1.msra.mxu0 0.0
        %1275 = vmatprep.subr.mxu0 0.0
        %1276 = vmatpush1.msra.mxu0 0.0
        %1277 = vmatprep.subr.mxu0 0.0
        %1278 = vmatpush1.msra.mxu0 0.0
        %1279 = vmatprep.subr.mxu0 0.0
        %1280 = vmatpush1.msra.mxu0 0.0
        %1281 = vmatprep.subr.mxu0 0.0
        %1282 = vmatpush1.msra.mxu0 0.0
        %1283 = vmatprep.subr.mxu0 0.0
        %1284 = vmatpush1.msra.mxu0 0.0
        %1285 = vmatprep.subr.mxu0 0.0
        %1286 = vmatpush1.msra.mxu0 0.0
        %1287 = vmatprep.subr.mxu0 0.0
        %1288 = vmatpush1.msra.mxu0 0.0
        %1289 = vmatprep.subr.mxu0 0.0
        %1290 = vmatpush1.msra.mxu0 0.0
        %1291 = vmatprep.subr.mxu0 0.0
        %1292 = vmatpush1.msra.mxu0 0.0
        %1293 = vmatprep.subr.mxu0 0.0
        %1294 = vmatpush1.msra.mxu0 0.0
        %1295 = vmatprep.subr.mxu0 0.0
        %1296 = vmatpush1.msra.mxu0 0.0
        %1297 = vmatprep.subr.mxu0 0.0
        %1298 = vmatpush1.msra.mxu0 0.0
        %1299 = vmatprep.subr.mxu0 0.0
        %1300 = vmatpush1.msra.mxu0 0.0
        %1301 = vmatprep.subr.mxu0 0.0
        %1302 = vmatpush1.msra.mxu0 0.0
        %1303 = vmatprep.subr.mxu0 0.0
        %1304 = vmatpush1.msra.mxu0 0.0
        %1305 = vmatprep.subr.mxu0 0.0
        %1306 = vmatpush1.msra.mxu0 0.0
        %1307 = vmatprep.subr.mxu0 0.0
        %1308 = vmatpush1.msra.mxu0 0.0
        %1309 = vmatprep.mubr.f32.mxu0 0.0
        %1310 = vmatmul.mubr.f32.gmra.mrb[0].mxu0 %v1237
        %v1311 = vpop.f32.mrb[0].mxu0
        %v1312 = vadd.f32 %v1232, %v1311
        %v1313 = vpop.f32.mrb[0].mxu0
        %v1314 = vadd.f32 %v1234, %v1313
        %1315 = vdwg.mxu0
        %s1316 = scalar_lea.vmem %s3, 8
        %v1317 = vld [vmem:[%s1316] sm:$0xf]
        %v1319 = vsel %vm318, %v1317, 0
        %v1322 = vsel %vm322, %v1151, 0
        %v1325 = vsel %vm322, %v1152, 0
        %1327 = vmatprep.subr.mxu0 %v1325
        %1328 = vmatpush1.msra.mxu0 %v1322
        %1329 = vmatprep.subr.mxu0 0.0
        %1330 = vmatpush1.msra.mxu0 0.0
        %1331 = vmatprep.subr.mxu0 0.0
        %1332 = vmatpush1.msra.mxu0 0.0
        %1333 = vmatprep.subr.mxu0 0.0
        %1334 = vmatpush1.msra.mxu0 0.0
        %1335 = vmatprep.subr.mxu0 0.0
        %1336 = vmatpush1.msra.mxu0 0.0
        %1337 = vmatprep.subr.mxu0 0.0
        %1338 = vmatpush1.msra.mxu0 0.0
        %1339 = vmatprep.subr.mxu0 0.0
        %1340 = vmatpush1.msra.mxu0 0.0
        %1341 = vmatprep.subr.mxu0 0.0
        %1342 = vmatpush1.msra.mxu0 0.0
        %1343 = vmatprep.subr.mxu0 0.0
        %1344 = vmatpush1.msra.mxu0 0.0
        %1345 = vmatprep.subr.mxu0 0.0
        %1346 = vmatpush1.msra.mxu0 0.0
        %1347 = vmatprep.subr.mxu0 0.0
        %1348 = vmatpush1.msra.mxu0 0.0
        %1349 = vmatprep.subr.mxu0 0.0
        %1350 = vmatpush1.msra.mxu0 0.0
        %1351 = vmatprep.subr.mxu0 0.0
        %1352 = vmatpush1.msra.mxu0 0.0
        %1353 = vmatprep.subr.mxu0 0.0
        %1354 = vmatpush1.msra.mxu0 0.0
        %1355 = vmatprep.subr.mxu0 0.0
        %1356 = vmatpush1.msra.mxu0 0.0
        %1357 = vmatprep.subr.mxu0 0.0
        %1358 = vmatpush1.msra.mxu0 0.0
        %1359 = vmatprep.subr.mxu0 0.0
        %1360 = vmatpush1.msra.mxu0 0.0
        %1361 = vmatprep.subr.mxu0 0.0
        %1362 = vmatpush1.msra.mxu0 0.0
        %1363 = vmatprep.subr.mxu0 0.0
        %1364 = vmatpush1.msra.mxu0 0.0
        %1365 = vmatprep.subr.mxu0 0.0
        %1366 = vmatpush1.msra.mxu0 0.0
        %1367 = vmatprep.subr.mxu0 0.0
        %1368 = vmatpush1.msra.mxu0 0.0
        %1369 = vmatprep.subr.mxu0 0.0
        %1370 = vmatpush1.msra.mxu0 0.0
        %1371 = vmatprep.subr.mxu0 0.0
        %1372 = vmatpush1.msra.mxu0 0.0
        %1373 = vmatprep.subr.mxu0 0.0
        %1374 = vmatpush1.msra.mxu0 0.0
        %1375 = vmatprep.subr.mxu0 0.0
        %1376 = vmatpush1.msra.mxu0 0.0
        %1377 = vmatprep.subr.mxu0 0.0
        %1378 = vmatpush1.msra.mxu0 0.0
        %1379 = vmatprep.subr.mxu0 0.0
        %1380 = vmatpush1.msra.mxu0 0.0
        %1381 = vmatprep.subr.mxu0 0.0
        %1382 = vmatpush1.msra.mxu0 0.0
        %1383 = vmatprep.subr.mxu0 0.0
        %1384 = vmatpush1.msra.mxu0 0.0
        %1385 = vmatprep.subr.mxu0 0.0
        %1386 = vmatpush1.msra.mxu0 0.0
        %1387 = vmatprep.subr.mxu0 0.0
        %1388 = vmatpush1.msra.mxu0 0.0
        %1389 = vmatprep.subr.mxu0 0.0
        %1390 = vmatpush1.msra.mxu0 0.0
        %1391 = vmatprep.mubr.f32.mxu0 0.0
        %1392 = vmatmul.mubr.f32.gmra.mrb[0].mxu0 %v1319
        %v1393 = vpop.f32.mrb[0].mxu0
        %v1394 = vadd.f32 0.0, %v1393
        %v1395 = vpop.f32.mrb[0].mxu0
        %v1396 = vadd.f32 0.0, %v1395
        %1397 = vdwg.mxu0
        %v1398 = vadd.f32 %v1312, %v1394
        %v1399 = vadd.f32 %v1314, %v1396
        %1400 = vrot.lane.b32.xlu0 %v1119, 1
        %v1401 = vpop.permute.xlu0 %1400
        %1402 = vrot.lane.b32.xlu0 %v1120, 1
        %v1403 = vpop.permute.xlu0 %1402
        %v1404 = vsel %vm265, %v1401, %v1403
        %v1405 = vsel %vm265, %v1403, %v1401
        %1406 = vrot.lane.b32.xlu0 %v1119, 127
        %v1407 = vpop.permute.xlu0 %1406
        %1408 = vrot.lane.b32.xlu0 %v1120, 127
        %v1409 = vpop.permute.xlu0 %1408
        %v1410 = vsel %vm272, %v1407, %v1409
        %v1411 = vsel %vm272, %v1409, %v1407
        %v1412 = vsel %vm291, %v1410, %v1405
        %v1413 = vsel %vm292, %v1411, %v1404
        %v1414 = vsel %vm311, %v1405, %v1410
        %v1415 = vsel %vm312, %v1404, %v1411
        %s1416 = scalar_lea.vmem %s3, 12
        %v1417 = vld [vmem:[%s1416] sm:$0xf]
        %v1419 = vsel %vm318, %v1417, 0
        %v1422 = vsel %vm322, %v1412, 0
        %v1425 = vsel %vm322, %v1413, 0
        %1427 = vmatprep.subr.mxu0 %v1425
        %1428 = vmatpush1.msra.mxu0 %v1422
        %1429 = vmatprep.subr.mxu0 0.0
        %1430 = vmatpush1.msra.mxu0 0.0
        %1431 = vmatprep.subr.mxu0 0.0
        %1432 = vmatpush1.msra.mxu0 0.0
        %1433 = vmatprep.subr.mxu0 0.0
        %1434 = vmatpush1.msra.mxu0 0.0
        %1435 = vmatprep.subr.mxu0 0.0
        %1436 = vmatpush1.msra.mxu0 0.0
        %1437 = vmatprep.subr.mxu0 0.0
        %1438 = vmatpush1.msra.mxu0 0.0
        %1439 = vmatprep.subr.mxu0 0.0
        %1440 = vmatpush1.msra.mxu0 0.0
        %1441 = vmatprep.subr.mxu0 0.0
        %1442 = vmatpush1.msra.mxu0 0.0
        %1443 = vmatprep.subr.mxu0 0.0
        %1444 = vmatpush1.msra.mxu0 0.0
        %1445 = vmatprep.subr.mxu0 0.0
        %1446 = vmatpush1.msra.mxu0 0.0
        %1447 = vmatprep.subr.mxu0 0.0
        %1448 = vmatpush1.msra.mxu0 0.0
        %1449 = vmatprep.subr.mxu0 0.0
        %1450 = vmatpush1.msra.mxu0 0.0
        %1451 = vmatprep.subr.mxu0 0.0
        %1452 = vmatpush1.msra.mxu0 0.0
        %1453 = vmatprep.subr.mxu0 0.0
        %1454 = vmatpush1.msra.mxu0 0.0
        %1455 = vmatprep.subr.mxu0 0.0
        %1456 = vmatpush1.msra.mxu0 0.0
        %1457 = vmatprep.subr.mxu0 0.0
        %1458 = vmatpush1.msra.mxu0 0.0
        %1459 = vmatprep.subr.mxu0 0.0
        %1460 = vmatpush1.msra.mxu0 0.0
        %1461 = vmatprep.subr.mxu0 0.0
        %1462 = vmatpush1.msra.mxu0 0.0
        %1463 = vmatprep.subr.mxu0 0.0
        %1464 = vmatpush1.msra.mxu0 0.0
        %1465 = vmatprep.subr.mxu0 0.0
        %1466 = vmatpush1.msra.mxu0 0.0
        %1467 = vmatprep.subr.mxu0 0.0
        %1468 = vmatpush1.msra.mxu0 0.0
        %1469 = vmatprep.subr.mxu0 0.0
        %1470 = vmatpush1.msra.mxu0 0.0
        %1471 = vmatprep.subr.mxu0 0.0
        %1472 = vmatpush1.msra.mxu0 0.0
        %1473 = vmatprep.subr.mxu0 0.0
        %1474 = vmatpush1.msra.mxu0 0.0
        %1475 = vmatprep.subr.mxu0 0.0
        %1476 = vmatpush1.msra.mxu0 0.0
        %1477 = vmatprep.subr.mxu0 0.0
        %1478 = vmatpush1.msra.mxu0 0.0
        %1479 = vmatprep.subr.mxu0 0.0
        %1480 = vmatpush1.msra.mxu0 0.0
        %1481 = vmatprep.subr.mxu0 0.0
        %1482 = vmatpush1.msra.mxu0 0.0
        %1483 = vmatprep.subr.mxu0 0.0
        %1484 = vmatpush1.msra.mxu0 0.0
        %1485 = vmatprep.subr.mxu0 0.0
        %1486 = vmatpush1.msra.mxu0 0.0
        %1487 = vmatprep.subr.mxu0 0.0
        %1488 = vmatpush1.msra.mxu0 0.0
        %1489 = vmatprep.subr.mxu0 0.0
        %1490 = vmatpush1.msra.mxu0 0.0
        %1491 = vmatprep.mubr.f32.mxu0 0.0
        %1492 = vmatmul.mubr.f32.gmra.mrb[0].mxu0 %v1419
        %v1493 = vpop.f32.mrb[0].mxu0
        %v1494 = vadd.f32 0.0, %v1493
        %v1495 = vpop.f32.mrb[0].mxu0
        %v1496 = vadd.f32 0.0, %v1495
        %1497 = vdwg.mxu0
        %v1498 = vadd.f32 %v1398, %v1494
        %v1499 = vadd.f32 %v1399, %v1496
        %s1500 = scalar_lea.vmem %s3, 16
        %v1501 = vld [vmem:[%s1500] sm:$0xf]
        %v1503 = vsel %vm318, %v1501, 0
        %v1506 = vsel %vm322, %v1119, 0
        %v1509 = vsel %vm322, %v1120, 0
        %1511 = vmatprep.subr.mxu0 %v1509
        %1512 = vmatpush1.msra.mxu0 %v1506
        %1513 = vmatprep.subr.mxu0 0.0
        %1514 = vmatpush1.msra.mxu0 0.0
        %1515 = vmatprep.subr.mxu0 0.0
        %1516 = vmatpush1.msra.mxu0 0.0
        %1517 = vmatprep.subr.mxu0 0.0
        %1518 = vmatpush1.msra.mxu0 0.0
        %1519 = vmatprep.subr.mxu0 0.0
        %1520 = vmatpush1.msra.mxu0 0.0
        %1521 = vmatprep.subr.mxu0 0.0
        %1522 = vmatpush1.msra.mxu0 0.0
        %1523 = vmatprep.subr.mxu0 0.0
        %1524 = vmatpush1.msra.mxu0 0.0
        %1525 = vmatprep.subr.mxu0 0.0
        %1526 = vmatpush1.msra.mxu0 0.0
        %1527 = vmatprep.subr.mxu0 0.0
        %1528 = vmatpush1.msra.mxu0 0.0
        %1529 = vmatprep.subr.mxu0 0.0
        %1530 = vmatpush1.msra.mxu0 0.0
        %1531 = vmatprep.subr.mxu0 0.0
        %1532 = vmatpush1.msra.mxu0 0.0
        %1533 = vmatprep.subr.mxu0 0.0
        %1534 = vmatpush1.msra.mxu0 0.0
        %1535 = vmatprep.subr.mxu0 0.0
        %1536 = vmatpush1.msra.mxu0 0.0
        %1537 = vmatprep.subr.mxu0 0.0
        %1538 = vmatpush1.msra.mxu0 0.0
        %1539 = vmatprep.subr.mxu0 0.0
        %1540 = vmatpush1.msra.mxu0 0.0
        %1541 = vmatprep.subr.mxu0 0.0
        %1542 = vmatpush1.msra.mxu0 0.0
        %1543 = vmatprep.subr.mxu0 0.0
        %1544 = vmatpush1.msra.mxu0 0.0
        %1545 = vmatprep.subr.mxu0 0.0
        %1546 = vmatpush1.msra.mxu0 0.0
        %1547 = vmatprep.subr.mxu0 0.0
        %1548 = vmatpush1.msra.mxu0 0.0
        %1549 = vmatprep.subr.mxu0 0.0
        %1550 = vmatpush1.msra.mxu0 0.0
        %1551 = vmatprep.subr.mxu0 0.0
        %1552 = vmatpush1.msra.mxu0 0.0
        %1553 = vmatprep.subr.mxu0 0.0
        %1554 = vmatpush1.msra.mxu0 0.0
        %1555 = vmatprep.subr.mxu0 0.0
        %1556 = vmatpush1.msra.mxu0 0.0
        %1557 = vmatprep.subr.mxu0 0.0
        %1558 = vmatpush1.msra.mxu0 0.0
        %1559 = vmatprep.subr.mxu0 0.0
        %1560 = vmatpush1.msra.mxu0 0.0
        %1561 = vmatprep.subr.mxu0 0.0
        %1562 = vmatpush1.msra.mxu0 0.0
        %1563 = vmatprep.subr.mxu0 0.0
        %1564 = vmatpush1.msra.mxu0 0.0
        %1565 = vmatprep.subr.mxu0 0.0
        %1566 = vmatpush1.msra.mxu0 0.0
        %1567 = vmatprep.subr.mxu0 0.0
        %1568 = vmatpush1.msra.mxu0 0.0
        %1569 = vmatprep.subr.mxu0 0.0
        %1570 = vmatpush1.msra.mxu0 0.0
        %1571 = vmatprep.subr.mxu0 0.0
        %1572 = vmatpush1.msra.mxu0 0.0
        %1573 = vmatprep.subr.mxu0 0.0
        %1574 = vmatpush1.msra.mxu0 0.0
        %1575 = vmatprep.mubr.f32.mxu0 0.0
        %1576 = vmatmul.mubr.f32.gmra.mrb[0].mxu0 %v1503
        %v1577 = vpop.f32.mrb[0].mxu0
        %v1578 = vadd.f32 0.0, %v1577
        %v1579 = vpop.f32.mrb[0].mxu0
        %v1580 = vadd.f32 0.0, %v1579
        %1581 = vdwg.mxu0
        %v1582 = vadd.f32 %v1498, %v1578
        %v1583 = vadd.f32 %v1499, %v1580
        %s1584 = scalar_lea.vmem %s3, 20
        %v1585 = vld [vmem:[%s1584] sm:$0xf]
        %v1587 = vsel %vm318, %v1585, 0
        %v1590 = vsel %vm322, %v1414, 0
        %v1593 = vsel %vm322, %v1415, 0
        %1595 = vmatprep.subr.mxu0 %v1593
        %1596 = vmatpush1.msra.mxu0 %v1590
        %1597 = vmatprep.subr.mxu0 0.0
        %1598 = vmatpush1.msra.mxu0 0.0
        %1599 = vmatprep.subr.mxu0 0.0
        %1600 = vmatpush1.msra.mxu0 0.0
        %1601 = vmatprep.subr.mxu0 0.0
        %1602 = vmatpush1.msra.mxu0 0.0
        %1603 = vmatprep.subr.mxu0 0.0
        %1604 = vmatpush1.msra.mxu0 0.0
        %1605 = vmatprep.subr.mxu0 0.0
        %1606 = vmatpush1.msra.mxu0 0.0
        %1607 = vmatprep.subr.mxu0 0.0
        %1608 = vmatpush1.msra.mxu0 0.0
        %1609 = vmatprep.subr.mxu0 0.0
        %1610 = vmatpush1.msra.mxu0 0.0
        %1611 = vmatprep.subr.mxu0 0.0
        %1612 = vmatpush1.msra.mxu0 0.0
        %1613 = vmatprep.subr.mxu0 0.0
        %1614 = vmatpush1.msra.mxu0 0.0
        %1615 = vmatprep.subr.mxu0 0.0
        %1616 = vmatpush1.msra.mxu0 0.0
        %1617 = vmatprep.subr.mxu0 0.0
        %1618 = vmatpush1.msra.mxu0 0.0
        %1619 = vmatprep.subr.mxu0 0.0
        %1620 = vmatpush1.msra.mxu0 0.0
        %1621 = vmatprep.subr.mxu0 0.0
        %1622 = vmatpush1.msra.mxu0 0.0
        %1623 = vmatprep.subr.mxu0 0.0
        %1624 = vmatpush1.msra.mxu0 0.0
        %1625 = vmatprep.subr.mxu0 0.0
        %1626 = vmatpush1.msra.mxu0 0.0
        %1627 = vmatprep.subr.mxu0 0.0
        %1628 = vmatpush1.msra.mxu0 0.0
        %1629 = vmatprep.subr.mxu0 0.0
        %1630 = vmatpush1.msra.mxu0 0.0
        %1631 = vmatprep.subr.mxu0 0.0
        %1632 = vmatpush1.msra.mxu0 0.0
        %1633 = vmatprep.subr.mxu0 0.0
        %1634 = vmatpush1.msra.mxu0 0.0
        %1635 = vmatprep.subr.mxu0 0.0
        %1636 = vmatpush1.msra.mxu0 0.0
        %1637 = vmatprep.subr.mxu0 0.0
        %1638 = vmatpush1.msra.mxu0 0.0
        %1639 = vmatprep.subr.mxu0 0.0
        %1640 = vmatpush1.msra.mxu0 0.0
        %1641 = vmatprep.subr.mxu0 0.0
        %1642 = vmatpush1.msra.mxu0 0.0
        %1643 = vmatprep.subr.mxu0 0.0
        %1644 = vmatpush1.msra.mxu0 0.0
        %1645 = vmatprep.subr.mxu0 0.0
        %1646 = vmatpush1.msra.mxu0 0.0
        %1647 = vmatprep.subr.mxu0 0.0
        %1648 = vmatpush1.msra.mxu0 0.0
        %1649 = vmatprep.subr.mxu0 0.0
        %1650 = vmatpush1.msra.mxu0 0.0
        %1651 = vmatprep.subr.mxu0 0.0
        %1652 = vmatpush1.msra.mxu0 0.0
        %1653 = vmatprep.subr.mxu0 0.0
        %1654 = vmatpush1.msra.mxu0 0.0
        %1655 = vmatprep.subr.mxu0 0.0
        %1656 = vmatpush1.msra.mxu0 0.0
        %1657 = vmatprep.subr.mxu0 0.0
        %1658 = vmatpush1.msra.mxu0 0.0
        %1659 = vmatprep.mubr.f32.mxu0 0.0
        %1660 = vmatmul.mubr.f32.gmra.mrb[0].mxu0 %v1587
        %v1661 = vpop.f32.mrb[0].mxu0
        %v1662 = vadd.f32 0.0, %v1661
        %v1663 = vpop.f32.mrb[0].mxu0
        %v1664 = vadd.f32 0.0, %v1663
        %1665 = vdwg.mxu0
        %v1666 = vadd.f32 %v1582, %v1662
        %v1667 = vadd.f32 %v1583, %v1664
        %1668 = vrot.lane.b32.xlu0 %v1135, 1
        %v1669 = vpop.permute.xlu0 %1668
        %1670 = vrot.lane.b32.xlu0 %v1136, 1
        %v1671 = vpop.permute.xlu0 %1670
        %v1672 = vsel %vm265, %v1669, %v1671
        %v1673 = vsel %vm265, %v1671, %v1669
        %1674 = vrot.lane.b32.xlu0 %v1135, 127
        %v1675 = vpop.permute.xlu0 %1674
        %1676 = vrot.lane.b32.xlu0 %v1136, 127
        %v1677 = vpop.permute.xlu0 %1676
        %v1678 = vsel %vm272, %v1675, %v1677
        %v1679 = vsel %vm272, %v1677, %v1675
        %v1680 = vsel %vm291, %v1678, %v1673
        %v1681 = vsel %vm292, %v1679, %v1672
        %v1682 = vsel %vm311, %v1673, %v1678
        %v1683 = vsel %vm312, %v1672, %v1679
        %s1684 = scalar_lea.vmem %s3, 24
        %v1685 = vld [vmem:[%s1684] sm:$0xf]
        %v1687 = vsel %vm318, %v1685, 0
        %v1690 = vsel %vm322, %v1680, 0
        %v1693 = vsel %vm322, %v1681, 0
        %1695 = vmatprep.subr.mxu0 %v1693
        %1696 = vmatpush1.msra.mxu0 %v1690
        %1697 = vmatprep.subr.mxu0 0.0
        %1698 = vmatpush1.msra.mxu0 0.0
        %1699 = vmatprep.subr.mxu0 0.0
        %1700 = vmatpush1.msra.mxu0 0.0
        %1701 = vmatprep.subr.mxu0 0.0
        %1702 = vmatpush1.msra.mxu0 0.0
        %1703 = vmatprep.subr.mxu0 0.0
        %1704 = vmatpush1.msra.mxu0 0.0
        %1705 = vmatprep.subr.mxu0 0.0
        %1706 = vmatpush1.msra.mxu0 0.0
        %1707 = vmatprep.subr.mxu0 0.0
        %1708 = vmatpush1.msra.mxu0 0.0
        %1709 = vmatprep.subr.mxu0 0.0
        %1710 = vmatpush1.msra.mxu0 0.0
        %1711 = vmatprep.subr.mxu0 0.0
        %1712 = vmatpush1.msra.mxu0 0.0
        %1713 = vmatprep.subr.mxu0 0.0
        %1714 = vmatpush1.msra.mxu0 0.0
        %1715 = vmatprep.subr.mxu0 0.0
        %1716 = vmatpush1.msra.mxu0 0.0
        %1717 = vmatprep.subr.mxu0 0.0
        %1718 = vmatpush1.msra.mxu0 0.0
        %1719 = vmatprep.subr.mxu0 0.0
        %1720 = vmatpush1.msra.mxu0 0.0
        %1721 = vmatprep.subr.mxu0 0.0
        %1722 = vmatpush1.msra.mxu0 0.0
        %1723 = vmatprep.subr.mxu0 0.0
        %1724 = vmatpush1.msra.mxu0 0.0
        %1725 = vmatprep.subr.mxu0 0.0
        %1726 = vmatpush1.msra.mxu0 0.0
        %1727 = vmatprep.subr.mxu0 0.0
        %1728 = vmatpush1.msra.mxu0 0.0
        %1729 = vmatprep.subr.mxu0 0.0
        %1730 = vmatpush1.msra.mxu0 0.0
        %1731 = vmatprep.subr.mxu0 0.0
        %1732 = vmatpush1.msra.mxu0 0.0
        %1733 = vmatprep.subr.mxu0 0.0
        %1734 = vmatpush1.msra.mxu0 0.0
        %1735 = vmatprep.subr.mxu0 0.0
        %1736 = vmatpush1.msra.mxu0 0.0
        %1737 = vmatprep.subr.mxu0 0.0
        %1738 = vmatpush1.msra.mxu0 0.0
        %1739 = vmatprep.subr.mxu0 0.0
        %1740 = vmatpush1.msra.mxu0 0.0
        %1741 = vmatprep.subr.mxu0 0.0
        %1742 = vmatpush1.msra.mxu0 0.0
        %1743 = vmatprep.subr.mxu0 0.0
        %1744 = vmatpush1.msra.mxu0 0.0
        %1745 = vmatprep.subr.mxu0 0.0
        %1746 = vmatpush1.msra.mxu0 0.0
        %1747 = vmatprep.subr.mxu0 0.0
        %1748 = vmatpush1.msra.mxu0 0.0
        %1749 = vmatprep.subr.mxu0 0.0
        %1750 = vmatpush1.msra.mxu0 0.0
        %1751 = vmatprep.subr.mxu0 0.0
        %1752 = vmatpush1.msra.mxu0 0.0
        %1753 = vmatprep.subr.mxu0 0.0
        %1754 = vmatpush1.msra.mxu0 0.0
        %1755 = vmatprep.subr.mxu0 0.0
        %1756 = vmatpush1.msra.mxu0 0.0
        %1757 = vmatprep.subr.mxu0 0.0
        %1758 = vmatpush1.msra.mxu0 0.0
        %1759 = vmatprep.mubr.f32.mxu0 0.0
        %1760 = vmatmul.mubr.f32.gmra.mrb[0].mxu0 %v1687
        %v1761 = vpop.f32.mrb[0].mxu0
        %v1762 = vadd.f32 0.0, %v1761
        %v1763 = vpop.f32.mrb[0].mxu0
        %v1764 = vadd.f32 0.0, %v1763
        %1765 = vdwg.mxu0
        %v1766 = vadd.f32 %v1666, %v1762
        %v1767 = vadd.f32 %v1667, %v1764
        %s1768 = scalar_lea.vmem %s3, 28
        %v1769 = vld [vmem:[%s1768] sm:$0xf]
        %v1771 = vsel %vm318, %v1769, 0
        %v1774 = vsel %vm322, %v1135, 0
        %v1777 = vsel %vm322, %v1136, 0
        %1779 = vmatprep.subr.mxu0 %v1777
        %1780 = vmatpush1.msra.mxu0 %v1774
        %1781 = vmatprep.subr.mxu0 0.0
        %1782 = vmatpush1.msra.mxu0 0.0
        %1783 = vmatprep.subr.mxu0 0.0
        %1784 = vmatpush1.msra.mxu0 0.0
        %1785 = vmatprep.subr.mxu0 0.0
        %1786 = vmatpush1.msra.mxu0 0.0
        %1787 = vmatprep.subr.mxu0 0.0
        %1788 = vmatpush1.msra.mxu0 0.0
        %1789 = vmatprep.subr.mxu0 0.0
        %1790 = vmatpush1.msra.mxu0 0.0
        %1791 = vmatprep.subr.mxu0 0.0
        %1792 = vmatpush1.msra.mxu0 0.0
        %1793 = vmatprep.subr.mxu0 0.0
        %1794 = vmatpush1.msra.mxu0 0.0
        %1795 = vmatprep.subr.mxu0 0.0
        %1796 = vmatpush1.msra.mxu0 0.0
        %1797 = vmatprep.subr.mxu0 0.0
        %1798 = vmatpush1.msra.mxu0 0.0
        %1799 = vmatprep.subr.mxu0 0.0
        %1800 = vmatpush1.msra.mxu0 0.0
        %1801 = vmatprep.subr.mxu0 0.0
        %1802 = vmatpush1.msra.mxu0 0.0
        %1803 = vmatprep.subr.mxu0 0.0
        %1804 = vmatpush1.msra.mxu0 0.0
        %1805 = vmatprep.subr.mxu0 0.0
        %1806 = vmatpush1.msra.mxu0 0.0
        %1807 = vmatprep.subr.mxu0 0.0
        %1808 = vmatpush1.msra.mxu0 0.0
        %1809 = vmatprep.subr.mxu0 0.0
        %1810 = vmatpush1.msra.mxu0 0.0
        %1811 = vmatprep.subr.mxu0 0.0
        %1812 = vmatpush1.msra.mxu0 0.0
        %1813 = vmatprep.subr.mxu0 0.0
        %1814 = vmatpush1.msra.mxu0 0.0
        %1815 = vmatprep.subr.mxu0 0.0
        %1816 = vmatpush1.msra.mxu0 0.0
        %1817 = vmatprep.subr.mxu0 0.0
        %1818 = vmatpush1.msra.mxu0 0.0
        %1819 = vmatprep.subr.mxu0 0.0
        %1820 = vmatpush1.msra.mxu0 0.0
        %1821 = vmatprep.subr.mxu0 0.0
        %1822 = vmatpush1.msra.mxu0 0.0
        %1823 = vmatprep.subr.mxu0 0.0
        %1824 = vmatpush1.msra.mxu0 0.0
        %1825 = vmatprep.subr.mxu0 0.0
        %1826 = vmatpush1.msra.mxu0 0.0
        %1827 = vmatprep.subr.mxu0 0.0
        %1828 = vmatpush1.msra.mxu0 0.0
        %1829 = vmatprep.subr.mxu0 0.0
        %1830 = vmatpush1.msra.mxu0 0.0
        %1831 = vmatprep.subr.mxu0 0.0
        %1832 = vmatpush1.msra.mxu0 0.0
        %1833 = vmatprep.subr.mxu0 0.0
        %1834 = vmatpush1.msra.mxu0 0.0
        %1835 = vmatprep.subr.mxu0 0.0
        %1836 = vmatpush1.msra.mxu0 0.0
        %1837 = vmatprep.subr.mxu0 0.0
        %1838 = vmatpush1.msra.mxu0 0.0
        %1839 = vmatprep.subr.mxu0 0.0
        %1840 = vmatpush1.msra.mxu0 0.0
        %1841 = vmatprep.subr.mxu0 0.0
        %1842 = vmatpush1.msra.mxu0 0.0
        %1843 = vmatprep.mubr.f32.mxu0 0.0
        %1844 = vmatmul.mubr.f32.gmra.mrb[0].mxu0 %v1771
        %v1845 = vpop.f32.mrb[0].mxu0
        %v1846 = vadd.f32 0.0, %v1845
        %v1847 = vpop.f32.mrb[0].mxu0
        %v1848 = vadd.f32 0.0, %v1847
        %1849 = vdwg.mxu0
        %v1850 = vadd.f32 %v1766, %v1846
        %v1851 = vadd.f32 %v1767, %v1848
        %s1852 = scalar_lea.vmem %s3, 32
        %v1853 = vld [vmem:[%s1852] sm:$0xf]
        %v1855 = vsel %vm318, %v1853, 0
        %v1858 = vsel %vm322, %v1682, 0
        %v1861 = vsel %vm322, %v1683, 0
        %1863 = vmatprep.subr.mxu0 %v1861
        %1864 = vmatpush1.msra.mxu0 %v1858
        %1865 = vmatprep.subr.mxu0 0.0
        %1866 = vmatpush1.msra.mxu0 0.0
        %1867 = vmatprep.subr.mxu0 0.0
        %1868 = vmatpush1.msra.mxu0 0.0
        %1869 = vmatprep.subr.mxu0 0.0
        %1870 = vmatpush1.msra.mxu0 0.0
        %1871 = vmatprep.subr.mxu0 0.0
        %1872 = vmatpush1.msra.mxu0 0.0
        %1873 = vmatprep.subr.mxu0 0.0
        %1874 = vmatpush1.msra.mxu0 0.0
        %1875 = vmatprep.subr.mxu0 0.0
        %1876 = vmatpush1.msra.mxu0 0.0
        %1877 = vmatprep.subr.mxu0 0.0
        %1878 = vmatpush1.msra.mxu0 0.0
        %1879 = vmatprep.subr.mxu0 0.0
        %1880 = vmatpush1.msra.mxu0 0.0
        %1881 = vmatprep.subr.mxu0 0.0
        %1882 = vmatpush1.msra.mxu0 0.0
        %1883 = vmatprep.subr.mxu0 0.0
        %1884 = vmatpush1.msra.mxu0 0.0
        %1885 = vmatprep.subr.mxu0 0.0
        %1886 = vmatpush1.msra.mxu0 0.0
        %1887 = vmatprep.subr.mxu0 0.0
        %1888 = vmatpush1.msra.mxu0 0.0
        %1889 = vmatprep.subr.mxu0 0.0
        %1890 = vmatpush1.msra.mxu0 0.0
        %1891 = vmatprep.subr.mxu0 0.0
        %1892 = vmatpush1.msra.mxu0 0.0
        %1893 = vmatprep.subr.mxu0 0.0
        %1894 = vmatpush1.msra.mxu0 0.0
        %1895 = vmatprep.subr.mxu0 0.0
        %1896 = vmatpush1.msra.mxu0 0.0
        %1897 = vmatprep.subr.mxu0 0.0
        %1898 = vmatpush1.msra.mxu0 0.0
        %1899 = vmatprep.subr.mxu0 0.0
        %1900 = vmatpush1.msra.mxu0 0.0
        %1901 = vmatprep.subr.mxu0 0.0
        %1902 = vmatpush1.msra.mxu0 0.0
        %1903 = vmatprep.subr.mxu0 0.0
        %1904 = vmatpush1.msra.mxu0 0.0
        %1905 = vmatprep.subr.mxu0 0.0
        %1906 = vmatpush1.msra.mxu0 0.0
        %1907 = vmatprep.subr.mxu0 0.0
        %1908 = vmatpush1.msra.mxu0 0.0
        %1909 = vmatprep.subr.mxu0 0.0
        %1910 = vmatpush1.msra.mxu0 0.0
        %1911 = vmatprep.subr.mxu0 0.0
        %1912 = vmatpush1.msra.mxu0 0.0
        %1913 = vmatprep.subr.mxu0 0.0
        %1914 = vmatpush1.msra.mxu0 0.0
        %1915 = vmatprep.subr.mxu0 0.0
        %1916 = vmatpush1.msra.mxu0 0.0
        %1917 = vmatprep.subr.mxu0 0.0
        %1918 = vmatpush1.msra.mxu0 0.0
        %1919 = vmatprep.subr.mxu0 0.0
        %1920 = vmatpush1.msra.mxu0 0.0
        %1921 = vmatprep.subr.mxu0 0.0
        %1922 = vmatpush1.msra.mxu0 0.0
        %1923 = vmatprep.subr.mxu0 0.0
        %1924 = vmatpush1.msra.mxu0 0.0
        %1925 = vmatprep.subr.mxu0 0.0
        %1926 = vmatpush1.msra.mxu0 0.0
        %1927 = vmatprep.mubr.f32.mxu0 0.0
        %1928 = vmatmul.mubr.f32.gmra.mrb[0].mxu0 %v1855
        %v1929 = vpop.f32.mrb[0].mxu0
        %v1930 = vadd.f32 0.0, %v1929
        %v1931 = vpop.f32.mrb[0].mxu0
        %v1932 = vadd.f32 0.0, %v1931
        %1933 = vdwg.mxu0
        %v1934 = vadd.f32 %v1850, %v1930
        %v1935 = vadd.f32 %v1851, %v1932
        %v1936 = vsel %vm322, %v1934, 0.0
        %v1937 = vsel %vm322, %v1935, 0.0
        %v1938 = vadd.f32 %v1936, %v1937
        %1939 = vadd.xlane.f32.xlu0 %v1938
        %v1940 = vpop.xlane.xlu0 %1939
        %v1941 = vmul.f32 %v1940, %v1103
        %v1942 = vsub.f32 %v1934, %v1941
        %v1943 = vsub.f32 %v1935, %v1941
        %v1944 = vmul.f32 %v1942, %v1942
        %v1945 = vmul.f32 %v1943, %v1943
        %v1946 = vsel %vm322, %v1944, 0.0
        %v1947 = vsel %vm322, %v1945, 0.0
        %v1948 = vadd.f32 %v1946, %v1947
        %1949 = vadd.xlane.f32.xlu0 %v1948
        %v1950 = vpop.xlane.xlu0 %1949
        %v1951 = vmul.f32 %v1950, %v1103
        %v1952 = vadd.f32 %v1951, 1e-05
        %v1953 = vrsqrt.pop %v1952
        %v1954 = vmul.f32 %v1942, %v1953
        %v1955 = vmul.f32 %v1943, %v1953
        %v1958 = vcombine.low %v1954, %v1955
        %v1960 = vadd.f32 %v196, %v1958
        %1961 = vst [vmem:[%s190] sm:$0xff] %v1960
        %s1962 = sand.u32 %s115, 1
        %s1963 = scalar_lea.sflag [#allocation3], %s1962
        %s1964 = sand.u32 %s115, 1
        %s1965 = smul.addr %s1964, 8
        %s1966 = scalar_lea.vmem [#allocation2], %s1965
        // Predicated region
        $region37: #{tpu_custom_call.1} parent=35 // pred_check
          %p1967 = pneg %p125
        $region38: #{tpu_custom_call.1} parent=35 // pred_check_branch
          %1969 = sbr.rel (%p1967) target = $region40
        $region39: #{tpu_custom_call.1} parent=35 // pred_region
          %s1971 = ssub.s32 128, 128
          %1972 = vsyncadd %s1963, %s1971
          %s1973 = smul.addr %s18, 2
          %s1974 = smul.addr %s1973, 64
          %s1975 = scalar_lea.hbm %s4, %s1974
          %s1977 = sshll.u32 %s1966, 4
          %s1978 = int_to_ptr.vmem [resolvable:$true] %s1977
          %1980 = dma.vmem_to_hbm [thread:$0]  %s1978, 128, %s1975, %s1963
        $region40: #{tpu_custom_call.1} parent=35 // pred_fallthru
          _
      $region36: #{tpu_custom_call.1} parent=5 // pred_fallthru
        _
      %p1981 = scmp.le.s32.totalorder 2, %s13
      // Predicated region
      $region41: #{tpu_custom_call.1} parent=5 // pred_check
        %p1982 = pneg %p1981
      $region42: #{tpu_custom_call.1} parent=5 // pred_check_branch
        %1984 = sbr.rel (%p1982) target = $region44
      $region43: #{tpu_custom_call.1} parent=5 // pred_region
        %s1985 = ssub.s32 %s13, 2
        // Predicated region
        $region45: #{tpu_custom_call.1} parent=43 // pred_check
          %p1986 = pneg %p131
        $region46: #{tpu_custom_call.1} parent=43 // pred_check_branch
          %1988 = sbr.rel (%p1986) target = $region48
        $region47: #{tpu_custom_call.1} parent=43 // pred_region
          %s1989 = sand.u32 %s116, 1
          %s1990 = scalar_lea.sflag [#allocation3], %s1989
          %s1991 = sand.u32 %s116, 1
          %s1992 = smul.addr %s1991, 8
          %s1993 = scalar_lea.vmem [#allocation2], %s1992
          %1994 = dma.done %s1990, 128
        $region48: #{tpu_custom_call.1} parent=43 // pred_fallthru
          _
      $region44: #{tpu_custom_call.1} parent=5 // pred_fallthru
        _
    $region6: #{tpu_custom_call.1} parent=1 // loop_footer
      %s17 = sadd.s32 1, %s13
    $region7: #{tpu_custom_call.1} parent=1 // loop_footer_branch
      %12 = sbr.rel target = $region3
    $region8: #{tpu_custom_call.1} parent=1 // loop_exit
      _
    %1995 = vsyncpa [#allocation3], 1
    %s1996 = scalar_lea.sflag [#allocation3], 1
    %1997 = vsyncpa %s1996, 1

</llo_original>
